<compile_context>
chip_gen: v6e
topology: v6e:2x2x1
jax: 0.10.0
libtpu: 0.0.40
codegen_flags: <defaults>
</compile_context>

<pallas_src>
import functools

import jax
import jax.numpy as jnp
from jax.experimental import pallas as pl
from jax.experimental.pallas import tpu as pltpu

EPS = 1e-5  # PyTorch nn.LayerNorm default


# ----------------------------- Pallas kernels ---------------------------------------

def _embed_merge_kernel(x_ref, wbd_ref, b_ref, g_ref, bt_ref, wr_ref, o_ref):
    # x: (tm, 4*C*p*p) bf16 pixels grouped per 2x2 super-patch (order x0,x1,x2,x3)
    # wbd: (4*C*p*p, 4E) bf16 block-diagonal conv weight; b: (1, 4E) f32 tiled conv bias
    # g, bt: LayerNorm(4E) params; wr: (4E, 2E) bf16 reduction weight
    y = jnp.dot(x_ref[...], wbd_ref[...],
                preferred_element_type=jnp.float32) + b_ref[...]
    mean = jnp.mean(y, axis=-1, keepdims=True)
    var = jnp.mean(y * y, axis=-1, keepdims=True) - mean * mean
    yn = (y - mean) * jax.lax.rsqrt(var + EPS)
    yn = yn * g_ref[...] + bt_ref[...]
    o_ref[...] = jnp.dot(yn.astype(jnp.bfloat16), wr_ref[...],
                         preferred_element_type=jnp.float32).astype(o_ref.dtype)


def _ln_matmul_kernel(x_ref, g_ref, b_ref, w_ref, o_ref):
    # LayerNorm (f32, single-pass variance) then Linear (bf16 MXU operands, f32 acc).
    x = x_ref[...].astype(jnp.float32)
    mean = jnp.mean(x, axis=-1, keepdims=True)
    var = jnp.mean(x * x, axis=-1, keepdims=True) - mean * mean
    xn = (x - mean) * jax.lax.rsqrt(var + EPS)
    y = (xn * g_ref[...] + b_ref[...]).astype(jnp.bfloat16)
    o_ref[...] = jnp.dot(y, w_ref[...],
                         preferred_element_type=jnp.float32).astype(o_ref.dtype)


def _expand_ln_kernel(x_ref, w_ref, g_ref, b_ref, o_ref, *, c):
    # x: (tm, C); w: (C, 4C); output (tm, 4C) with LayerNorm(c=C) applied to each of the
    # 4 c-sized groups (LN commutes with the downstream spatial rearrange).
    z = jnp.dot(x_ref[...].astype(jnp.bfloat16), w_ref[...],
                preferred_element_type=jnp.float32)
    g = g_ref[...]
    b = b_ref[...]
    for i in range(4):
        blk = z[:, i * c:(i + 1) * c]
        mean = jnp.mean(blk, axis=-1, keepdims=True)
        var = jnp.mean(blk * blk, axis=-1, keepdims=True) - mean * mean
        o_ref[:, i * c:(i + 1) * c] = (
            (blk - mean) * jax.lax.rsqrt(var + EPS) * g + b
        ).astype(o_ref.dtype)


# ----------------------------- kernel wrappers ---------------------------------------

def _row_block(m):
    for tm in (512, 256, 128, 64, 32, 16, 8):
        if m % tm == 0:
            return tm
    return m  # full extent (legal even if not a multiple of 8)


def _pcall(kernel, M, N, in_specs, out_dtype=jnp.float32):
    tm = _row_block(M)
    return pl.pallas_call(
        kernel,
        out_shape=jax.ShapeDtypeStruct((M, N), out_dtype),
        grid=(M // tm,),
        in_specs=in_specs(tm),
        out_specs=pl.BlockSpec((tm, N), lambda i: (i, 0)),
        compiler_params=pltpu.CompilerParams(dimension_semantics=("parallel",)),
    ), tm


def embed_merge(x_nchw, conv_w, conv_b, patch, gamma, beta, w_red):
    """Fused PatchEmbed (conv k=s=patch) + PatchMerging (LN(4E) + Linear(4E,2E))."""
    B, C, H, W = x_nchw.shape
    E = conv_w.shape[0]
    p = patch
    I, J = H // (2 * p), W // (2 * p)
    Cpp = C * p * p
    K4 = 4 * Cpp
    # im2col grouped per 2x2 super-patch; group order (s*2 + r) == [x0, x1, x2, x3]
    xq = x_nchw.reshape(B, C, I, 2, p, J, 2, p)          # (B, C, I, r, kh, J, s, kw)
    xq = xq.transpose(0, 2, 5, 6, 3, 1, 4, 7)            # (B, I, J, s, r, C, kh, kw)
    xq = xq.reshape(B * I * J, K4).astype(jnp.bfloat16)  # convert fuses into the copy
    w2d = conv_w.reshape(E, Cpp).T                       # (Cpp, E), (c, kh, kw) order
    wbd = jnp.kron(jnp.eye(4, dtype=w2d.dtype), w2d).astype(jnp.bfloat16)  # (4Cpp, 4E)
    b4 = jnp.tile(conv_b, 4).reshape(1, 4 * E)

    M, N = B * I * J, 2 * E
    call, tm = _pcall(
        _embed_merge_kernel, M, N,
        lambda tm: [pl.BlockSpec((tm, K4), lambda i: (i, 0)),
                    pl.BlockSpec((K4, 4 * E), lambda i: (0, 0)),
                    pl.BlockSpec((1, 4 * E), lambda i: (0, 0)),
                    pl.BlockSpec((1, 4 * E), lambda i: (0, 0)),
                    pl.BlockSpec((1, 4 * E), lambda i: (0, 0)),
                    pl.BlockSpec((4 * E, N), lambda i: (0, 0))])
    out = call(xq, wbd, b4, gamma.reshape(1, 4 * E), beta.reshape(1, 4 * E),
               w_red.astype(jnp.bfloat16))
    return out.reshape(B, I * J, N)


def ln_matmul(x, gamma, beta, w):
    M, K = x.shape
    _, N = w.shape
    call, tm = _pcall(
        _ln_matmul_kernel, M, N,
        lambda tm: [pl.BlockSpec((tm, K), lambda i: (i, 0)),
                    pl.BlockSpec((1, K), lambda i: (0, 0)),
                    pl.BlockSpec((1, K), lambda i: (0, 0)),
                    pl.BlockSpec((K, N), lambda i: (0, 0))])
    return call(x, gamma.reshape(1, K), beta.reshape(1, K), w.astype(jnp.bfloat16))


# ----------------------------- model blocks (glue + kernels) -------------------------

def patch_merging(x, H, W, gamma, beta, w_red):
    """x: (B, H*W, C) -> (B, H/2*W/2, 2C). Single-copy 2x2 regroup + fused LN+Linear."""
    B, L, C = x.shape
    xg = x.reshape(B, H // 2, 2, W // 2, 2, C)      # (B, I, r, J, s, C)
    xg = xg.transpose(0, 1, 3, 4, 2, 5)             # (B, I, J, s, r, C) -> [x0,x1,x2,x3]
    xg = xg.reshape(B * (H // 2) * (W // 2), 4 * C)
    out = ln_matmul(xg, gamma, beta, w_red)
    return out.reshape(B, (H // 2) * (W // 2), 2 * C)


def patch_expand(x, H, W, w_exp, gamma, beta):
    """x: (B, H*W, C) -> (B, 4*H*W, C). Fused Linear(C,4C) + per-group LayerNorm(C)."""
    B, L, C = x.shape
    M, N = B * L, 4 * C
    kernel = functools.partial(_expand_ln_kernel, c=C)
    call, tm = _pcall(
        kernel, M, N,
        lambda tm: [pl.BlockSpec((tm, C), lambda i: (i, 0)),
                    pl.BlockSpec((C, N), lambda i: (0, 0)),
                    pl.BlockSpec((1, C), lambda i: (0, 0)),
                    pl.BlockSpec((1, C), lambda i: (0, 0))])
    z = call(x.reshape(M, C), w_exp.astype(jnp.bfloat16),
             gamma.reshape(1, C), beta.reshape(1, C))
    # rearrange 'b h w (p1 p2 c) -> b (h p1) (w p2) c' -- pure data movement post-LN
    z = z.reshape(B, H, W, 2, 2, C).transpose(0, 1, 3, 2, 4, 5)
    return z.reshape(B, 4 * H * W, C)


def unet_forward(x_nchw, params, img_size, patch_size):
    s0 = img_size // patch_size
    g1, b1, w1 = params["down1"]
    x1 = embed_merge(x_nchw, params["conv_w"], params["conv_b"], patch_size,
                     g1, b1, w1)                                    # (B, (s0/2)^2, 2E)
    x2 = patch_merging(x1, s0 // 2, s0 // 2, *params["down2"])      # (B, (s0/4)^2, 4E)
    x3 = patch_merging(x2, s0 // 4, s0 // 4, *params["down3"])      # (B, (s0/8)^2, 8E)
    y1 = patch_expand(x3, s0 // 8, s0 // 8, *params["up1"])         # (B, (s0/4)^2, 8E)
    y2 = patch_expand(y1, s0 // 4, s0 // 4, *params["up2"])         # (B, (s0/2)^2, 8E)
    return y2


# ----------------------------- pure-JAX reference (mirrors bf16 MXU operands) --------

def _ln_ref(x, g, b):
    m = jnp.mean(x, -1, keepdims=True)
    v = jnp.mean((x - m) ** 2, -1, keepdims=True)
    return (x - m) * jax.lax.rsqrt(v + EPS) * g + b


def unet_ref(x_nchw, params, img_size, patch_size):
    bf = jnp.bfloat16
    B = x_nchw.shape[0]
    E = params["conv_w"].shape[0]
    y = jax.lax.conv_general_dilated(
        x_nchw.astype(bf), params["conv_w"].astype(bf),
        (patch_size, patch_size), "VALID",
        dimension_numbers=("NCHW", "OIHW", "NCHW"),
        preferred_element_type=jnp.float32)
    y = y + params["conv_b"][None, :, None, None]
    x = y.reshape(B, E, -1).transpose(0, 2, 1)
    s = img_size // patch_size

    def merge(x, H, W, gamma, beta, w):
        B, L, C = x.shape
        xg = x.reshape(B, H, W, C)
        xc = jnp.concatenate([xg[:, 0::2, 0::2], xg[:, 1::2, 0::2],
                              xg[:, 0::2, 1::2], xg[:, 1::2, 1::2]], -1)
        xc = xc.reshape(B, -1, 4 * C)
        xn = _ln_ref(xc, gamma, beta)
        return jnp.dot(xn.astype(bf), w.astype(bf), preferred_element_type=jnp.float32)

    def expand(x, H, W, w, gamma, beta):
        B, L, C = x.shape
        xe = jnp.dot(x.astype(bf), w.astype(bf), preferred_element_type=jnp.float32)
        xe = xe.reshape(B, H, W, 2, 2, C).transpose(0, 1, 3, 2, 4, 5)
        xe = xe.reshape(B, 4 * H * W, C)
        return _ln_ref(xe, gamma, beta)

    x1 = merge(x, s, s, *params["down1"])
    x2 = merge(x1, s // 2, s // 2, *params["down2"])
    x3 = merge(x2, s // 4, s // 4, *params["down3"])
    y1 = expand(x3, s // 8, s // 8, *params["up1"])
    y2 = expand(y1, s // 4, s // 4, *params["up2"])
    return y2


# ----------------------------- main ---------------------------------------------------

if __name__ == "__main__":
    # Small config consistent with the module structure (orig: img_size=160, embed_dim=96).
    B, IMG, PATCH, E = 2, 64, 4, 32

    key = jax.random.PRNGKey(0)
    ks = jax.random.split(key, 18)

    def _norm(k, shape, scale=0.02):
        return (scale * jax.random.normal(k, shape)).astype(jnp.float32)

    params = {
        "conv_w": _norm(ks[0], (E, 1, PATCH, PATCH)),
        "conv_b": _norm(ks[1], (E,)),
        # PatchMerging(dim): (gamma(4d), beta(4d), W(4d, 2d))
        "down1": (1.0 + _norm(ks[2], (4 * E,)), _norm(ks[3], (4 * E,)),
                  _norm(ks[4], (4 * E, 2 * E))),
        "down2": (1.0 + _norm(ks[5], (8 * E,)), _norm(ks[6], (8 * E,)),
                  _norm(ks[7], (8 * E, 4 * E))),
        "down3": (1.0 + _norm(ks[8], (16 * E,)), _norm(ks[9], (16 * E,)),
                  _norm(ks[10], (16 * E, 8 * E))),
        # PatchExpand(dim=8E): (W(8E, 32E), gamma(8E), beta(8E))
        "up1": (_norm(ks[11], (8 * E, 32 * E)),
                1.0 + _norm(ks[12], (8 * E,)), _norm(ks[13], (8 * E,))),
        "up2": (_norm(ks[14], (8 * E, 32 * E)),
                1.0 + _norm(ks[15], (8 * E,)), _norm(ks[16], (8 * E,))),
    }

    x = jax.random.normal(jax.random.PRNGKey(42), (B, 1, IMG, IMG), dtype=jnp.float32)

    fwd = jax.jit(functools.partial(unet_forward, img_size=IMG, patch_size=PATCH))
    out = jax.block_until_ready(fwd(x, params))

    expected_shape = (B, (IMG // (PATCH * 2)) ** 2, 8 * E)
    assert out.shape == expected_shape, (out.shape, expected_shape)

    ref = unet_ref(x, params, IMG, PATCH)
    max_err = float(jnp.max(jnp.abs(out - ref)))
    assert jnp.allclose(out, ref, atol=1e-2, rtol=1e-2), max_err

    print("KERNEL_OK")
</pallas_src>

<mosaic_0001>
module attributes {stable_mosaic.version = 11 : i64} {
  func.func @_embed_merge_kernel(%arg0: i32, %arg1: memref<128x64xbf16, #tpu.memory_space<vmem>>, %arg2: memref<64x128xbf16, #tpu.memory_space<vmem>>, %arg3: memref<1x128xf32, #tpu.memory_space<vmem>>, %arg4: memref<1x128xf32, #tpu.memory_space<vmem>>, %arg5: memref<1x128xf32, #tpu.memory_space<vmem>>, %arg6: memref<128x64xbf16, #tpu.memory_space<vmem>>, %arg7: memref<128x64xf32, #tpu.memory_space<vmem>>) attributes {dimension_semantics = [#tpu.dimension_semantics<parallel>], iteration_bounds = array<i64: 1>, scalar_prefetch = 0 : i64, scratch_operands = 0 : i64, tpu.core_type = #tpu.core_type<tc>, window_params = [{transform_indices = @transform_0, window_bounds = array<i64: 128, 64>}, {pipeline_mode = #tpu.pipeline_mode<synchronous>, transform_indices = @transform_1, window_bounds = array<i64: 64, 128>}, {pipeline_mode = #tpu.pipeline_mode<synchronous>, transform_indices = @transform_2, window_bounds = array<i64: 1, 128>}, {pipeline_mode = #tpu.pipeline_mode<synchronous>, transform_indices = @transform_3, window_bounds = array<i64: 1, 128>}, {pipeline_mode = #tpu.pipeline_mode<synchronous>, transform_indices = @transform_4, window_bounds = array<i64: 1, 128>}, {pipeline_mode = #tpu.pipeline_mode<synchronous>, transform_indices = @transform_5, window_bounds = array<i64: 128, 64>}, {transform_indices = @transform_6, window_bounds = array<i64: 128, 64>}]} {
    %c0 = arith.constant 0 : index
    %c0_0 = arith.constant 0 : index
    %0 = vector.load %arg1[%c0, %c0_0] : memref<128x64xbf16, #tpu.memory_space<vmem>>, vector<128x64xbf16>
    %c0_1 = arith.constant 0 : index
    %c0_2 = arith.constant 0 : index
    %1 = vector.load %arg2[%c0_1, %c0_2] : memref<64x128xbf16, #tpu.memory_space<vmem>>, vector<64x128xbf16>
    %cst = arith.constant dense<0.000000e+00> : vector<128x128xf32>
    %2 = tpu.matmul %0, %1, %cst {dimension_numbers = #tpu.dot_dimension_numbers<[1], [0], [0], [1], [0, 0, 1, 1], [], []>} : vector<128x64xbf16>, vector<64x128xbf16>, vector<128x128xf32> -> vector<128x128xf32>
    %c0_3 = arith.constant 0 : index
    %c0_4 = arith.constant 0 : index
    %3 = vector.load %arg3[%c0_3, %c0_4] : memref<1x128xf32, #tpu.memory_space<vmem>>, vector<1x128xf32>
    %4 = vector.broadcast %3 : vector<1x128xf32> to vector<128x128xf32>
    %5 = arith.addf %2, %4 : vector<128x128xf32>
    %cst_5 = arith.constant dense<0.000000e+00> : vector<128xf32>
    %6 = vector.multi_reduction <add>, %5, %cst_5 [1] : vector<128x128xf32> to vector<128xf32>
    %7 = vector.shape_cast %6 : vector<128xf32> to vector<128x1xf32>
    %cst_6 = arith.constant 1.280000e+02 : f32
    %8 = vector.broadcast %cst_6 : f32 to vector<128x1xf32>
    %9 = arith.divf %7, %8 : vector<128x1xf32>
    %10 = arith.mulf %5, %5 : vector<128x128xf32>
    %cst_7 = arith.constant dense<0.000000e+00> : vector<128xf32>
    %11 = vector.multi_reduction <add>, %10, %cst_7 [1] : vector<128x128xf32> to vector<128xf32>
    %12 = vector.shape_cast %11 : vector<128xf32> to vector<128x1xf32>
    %cst_8 = arith.constant 1.280000e+02 : f32
    %13 = vector.broadcast %cst_8 : f32 to vector<128x1xf32>
    %14 = arith.divf %12, %13 : vector<128x1xf32>
    %15 = arith.mulf %9, %9 : vector<128x1xf32>
    %16 = arith.subf %14, %15 : vector<128x1xf32>
    %17 = vector.broadcast %9 : vector<128x1xf32> to vector<128x128xf32>
    %18 = arith.subf %5, %17 : vector<128x128xf32>
    %cst_9 = arith.constant 9.99999974E-6 : f32
    %19 = vector.broadcast %cst_9 : f32 to vector<128x1xf32>
    %20 = arith.addf %16, %19 : vector<128x1xf32>
    %21 = math.rsqrt %20 : vector<128x1xf32>
    %22 = vector.broadcast %21 : vector<128x1xf32> to vector<128x128xf32>
    %23 = arith.mulf %18, %22 : vector<128x128xf32>
    %c0_10 = arith.constant 0 : index
    %c0_11 = arith.constant 0 : index
    %24 = vector.load %arg4[%c0_10, %c0_11] : memref<1x128xf32, #tpu.memory_space<vmem>>, vector<1x128xf32>
    %25 = vector.broadcast %24 : vector<1x128xf32> to vector<128x128xf32>
    %26 = arith.mulf %23, %25 : vector<128x128xf32>
    %c0_12 = arith.constant 0 : index
    %c0_13 = arith.constant 0 : index
    %27 = vector.load %arg5[%c0_12, %c0_13] : memref<1x128xf32, #tpu.memory_space<vmem>>, vector<1x128xf32>
    %28 = vector.broadcast %27 : vector<1x128xf32> to vector<128x128xf32>
    %29 = arith.addf %26, %28 : vector<128x128xf32>
    %30 = arith.truncf %29 : vector<128x128xf32> to vector<128x128xbf16>
    %c0_14 = arith.constant 0 : index
    %c0_15 = arith.constant 0 : index
    %31 = vector.load %arg6[%c0_14, %c0_15] : memref<128x64xbf16, #tpu.memory_space<vmem>>, vector<128x64xbf16>
    %cst_16 = arith.constant dense<0.000000e+00> : vector<128x64xf32>
    %32 = tpu.matmul %30, %31, %cst_16 {dimension_numbers = #tpu.dot_dimension_numbers<[1], [0], [0], [1], [0, 0, 1, 1], [], []>} : vector<128x128xbf16>, vector<128x64xbf16>, vector<128x64xf32> -> vector<128x64xf32>
    %c0_17 = arith.constant 0 : index
    %c0_18 = arith.constant 0 : index
    %33 = vector.load %arg7[%c0_17, %c0_18] : memref<128x64xf32, #tpu.memory_space<vmem>>, vector<128x64xf32>
    tpu.vector_store %arg7[%c0_17, %c0_18], %32 {strides = array<i32>} : memref<128x64xf32, #tpu.memory_space<vmem>>, vector<128x64xf32>,
    return
  }
  func.func @transform_0(%arg0: i32) -> (i32, i32) {
    %c0_i32 = arith.constant 0 : i32
    %c0_i32_0 = arith.constant 0 : i32
    return %arg0, %c0_i32 : i32, i32
  }
  func.func @transform_1(%arg0: i32) -> (i32, i32) {
    %c0_i32 = arith.constant 0 : i32
    %c0_i32_0 = arith.constant 0 : i32
    %c0_i32_1 = arith.constant 0 : i32
    return %c0_i32, %c0_i32_0 : i32, i32
  }
  func.func @transform_2(%arg0: i32) -> (i32, i32) {
    %c0_i32 = arith.constant 0 : i32
    %c0_i32_0 = arith.constant 0 : i32
    %c0_i32_1 = arith.constant 0 : i32
    return %c0_i32, %c0_i32_0 : i32, i32
  }
  func.func @transform_3(%arg0: i32) -> (i32, i32) {
    %c0_i32 = arith.constant 0 : i32
    %c0_i32_0 = arith.constant 0 : i32
    %c0_i32_1 = arith.constant 0 : i32
    return %c0_i32, %c0_i32_0 : i32, i32
  }
  func.func @transform_4(%arg0: i32) -> (i32, i32) {
    %c0_i32 = arith.constant 0 : i32
    %c0_i32_0 = arith.constant 0 : i32
    %c0_i32_1 = arith.constant 0 : i32
    return %c0_i32, %c0_i32_0 : i32, i32
  }
  func.func @transform_5(%arg0: i32) -> (i32, i32) {
    %c0_i32 = arith.constant 0 : i32
    %c0_i32_0 = arith.constant 0 : i32
    %c0_i32_1 = arith.constant 0 : i32
    return %c0_i32, %c0_i32_0 : i32, i32
  }
  func.func @transform_6(%arg0: i32) -> (i32, i32) {
    %c0_i32 = arith.constant 0 : i32
    %c0_i32_0 = arith.constant 0 : i32
    return %arg0, %c0_i32 : i32, i32
  }
}

module attributes {stable_mosaic.version = 11 : i64} {
  func.func @_ln_matmul_kernel(%arg0: i32, %arg1: memref<32x256xf32, #tpu.memory_space<vmem>>, %arg2: memref<1x256xf32, #tpu.memory_space<vmem>>, %arg3: memref<1x256xf32, #tpu.memory_space<vmem>>, %arg4: memref<256x128xbf16, #tpu.memory_space<vmem>>, %arg5: memref<32x128xf32, #tpu.memory_space<vmem>>) attributes {dimension_semantics = [#tpu.dimension_semantics<parallel>], iteration_bounds = array<i64: 1>, scalar_prefetch = 0 : i64, scratch_operands = 0 : i64, tpu.core_type = #tpu.core_type<tc>, window_params = [{transform_indices = @transform_0, window_bounds = array<i64: 32, 256>}, {pipeline_mode = #tpu.pipeline_mode<synchronous>, transform_indices = @transform_1, window_bounds = array<i64: 1, 256>}, {pipeline_mode = #tpu.pipeline_mode<synchronous>, transform_indices = @transform_2, window_bounds = array<i64: 1, 256>}, {pipeline_mode = #tpu.pipeline_mode<synchronous>, transform_indices = @transform_3, window_bounds = array<i64: 256, 128>}, {transform_indices = @transform_4, window_bounds = array<i64: 32, 128>}]} {
    %c0 = arith.constant 0 : index
    %c0_0 = arith.constant 0 : index
    %0 = vector.load %arg1[%c0, %c0_0] : memref<32x256xf32, #tpu.memory_space<vmem>>, vector<32x256xf32>
    %cst = arith.constant dense<0.000000e+00> : vector<32xf32>
    %1 = vector.multi_reduction <add>, %0, %cst [1] : vector<32x256xf32> to vector<32xf32>
    %2 = vector.shape_cast %1 : vector<32xf32> to vector<32x1xf32>
    %cst_1 = arith.constant 2.560000e+02 : f32
    %3 = vector.broadcast %cst_1 : f32 to vector<32x1xf32>
    %4 = arith.divf %2, %3 : vector<32x1xf32>
    %5 = arith.mulf %0, %0 : vector<32x256xf32>
    %cst_2 = arith.constant dense<0.000000e+00> : vector<32xf32>
    %6 = vector.multi_reduction <add>, %5, %cst_2 [1] : vector<32x256xf32> to vector<32xf32>
    %7 = vector.shape_cast %6 : vector<32xf32> to vector<32x1xf32>
    %cst_3 = arith.constant 2.560000e+02 : f32
    %8 = vector.broadcast %cst_3 : f32 to vector<32x1xf32>
    %9 = arith.divf %7, %8 : vector<32x1xf32>
    %10 = arith.mulf %4, %4 : vector<32x1xf32>
    %11 = arith.subf %9, %10 : vector<32x1xf32>
    %12 = vector.broadcast %4 : vector<32x1xf32> to vector<32x256xf32>
    %13 = arith.subf %0, %12 : vector<32x256xf32>
    %cst_4 = arith.constant 9.99999974E-6 : f32
    %14 = vector.broadcast %cst_4 : f32 to vector<32x1xf32>
    %15 = arith.addf %11, %14 : vector<32x1xf32>
    %16 = math.rsqrt %15 : vector<32x1xf32>
    %17 = vector.broadcast %16 : vector<32x1xf32> to vector<32x256xf32>
    %18 = arith.mulf %13, %17 : vector<32x256xf32>
    %c0_5 = arith.constant 0 : index
    %c0_6 = arith.constant 0 : index
    %19 = vector.load %arg2[%c0_5, %c0_6] : memref<1x256xf32, #tpu.memory_space<vmem>>, vector<1x256xf32>
    %20 = vector.broadcast %19 : vector<1x256xf32> to vector<32x256xf32>
    %21 = arith.mulf %18, %20 : vector<32x256xf32>
    %c0_7 = arith.constant 0 : index
    %c0_8 = arith.constant 0 : index
    %22 = vector.load %arg3[%c0_7, %c0_8] : memref<1x256xf32, #tpu.memory_space<vmem>>, vector<1x256xf32>
    %23 = vector.broadcast %22 : vector<1x256xf32> to vector<32x256xf32>
    %24 = arith.addf %21, %23 : vector<32x256xf32>
    %25 = arith.truncf %24 : vector<32x256xf32> to vector<32x256xbf16>
    %c0_9 = arith.constant 0 : index
    %c0_10 = arith.constant 0 : index
    %26 = vector.load %arg4[%c0_9, %c0_10] : memref<256x128xbf16, #tpu.memory_space<vmem>>, vector<256x128xbf16>
    %cst_11 = arith.constant dense<0.000000e+00> : vector<32x128xf32>
    %27 = tpu.matmul %25, %26, %cst_11 {dimension_numbers = #tpu.dot_dimension_numbers<[1], [0], [0], [1], [0, 0, 1, 1], [], []>} : vector<32x256xbf16>, vector<256x128xbf16>, vector<32x128xf32> -> vector<32x128xf32>
    %c0_12 = arith.constant 0 : index
    %c0_13 = arith.constant 0 : index
    %28 = vector.load %arg5[%c0_12, %c0_13] : memref<32x128xf32, #tpu.memory_space<vmem>>, vector<32x128xf32>
    tpu.vector_store %arg5[%c0_12, %c0_13], %27 {strides = array<i32>} : memref<32x128xf32, #tpu.memory_space<vmem>>, vector<32x128xf32>,
    return
  }
  func.func @transform_0(%arg0: i32) -> (i32, i32) {
    %c0_i32 = arith.constant 0 : i32
    %c0_i32_0 = arith.constant 0 : i32
    return %arg0, %c0_i32 : i32, i32
  }
  func.func @transform_1(%arg0: i32) -> (i32, i32) {
    %c0_i32 = arith.constant 0 : i32
    %c0_i32_0 = arith.constant 0 : i32
    %c0_i32_1 = arith.constant 0 : i32
    return %c0_i32, %c0_i32_0 : i32, i32
  }
  func.func @transform_2(%arg0: i32) -> (i32, i32) {
    %c0_i32 = arith.constant 0 : i32
    %c0_i32_0 = arith.constant 0 : i32
    %c0_i32_1 = arith.constant 0 : i32
    return %c0_i32, %c0_i32_0 : i32, i32
  }
  func.func @transform_3(%arg0: i32) -> (i32, i32) {
    %c0_i32 = arith.constant 0 : i32
    %c0_i32_0 = arith.constant 0 : i32
    %c0_i32_1 = arith.constant 0 : i32
    return %c0_i32, %c0_i32_0 : i32, i32
  }
  func.func @transform_4(%arg0: i32) -> (i32, i32) {
    %c0_i32 = arith.constant 0 : i32
    %c0_i32_0 = arith.constant 0 : i32
    return %arg0, %c0_i32 : i32, i32
  }
}

module attributes {stable_mosaic.version = 11 : i64} {
  func.func @_ln_matmul_kernel(%arg0: i32, %arg1: memref<8x512xf32, #tpu.memory_space<vmem>>, %arg2: memref<1x512xf32, #tpu.memory_space<vmem>>, %arg3: memref<1x512xf32, #tpu.memory_space<vmem>>, %arg4: memref<512x256xbf16, #tpu.memory_space<vmem>>, %arg5: memref<8x256xf32, #tpu.memory_space<vmem>>) attributes {dimension_semantics = [#tpu.dimension_semantics<parallel>], iteration_bounds = array<i64: 1>, scalar_prefetch = 0 : i64, scratch_operands = 0 : i64, tpu.core_type = #tpu.core_type<tc>, window_params = [{transform_indices = @transform_0, window_bounds = array<i64: 8, 512>}, {pipeline_mode = #tpu.pipeline_mode<synchronous>, transform_indices = @transform_1, window_bounds = array<i64: 1, 512>}, {pipeline_mode = #tpu.pipeline_mode<synchronous>, transform_indices = @transform_2, window_bounds = array<i64: 1, 512>}, {pipeline_mode = #tpu.pipeline_mode<synchronous>, transform_indices = @transform_3, window_bounds = array<i64: 512, 256>}, {transform_indices = @transform_4, window_bounds = array<i64: 8, 256>}]} {
    %c0 = arith.constant 0 : index
    %c0_0 = arith.constant 0 : index
    %0 = vector.load %arg1[%c0, %c0_0] : memref<8x512xf32, #tpu.memory_space<vmem>>, vector<8x512xf32>
    %cst = arith.constant dense<0.000000e+00> : vector<8xf32>
    %1 = vector.multi_reduction <add>, %0, %cst [1] : vector<8x512xf32> to vector<8xf32>
    %2 = vector.shape_cast %1 : vector<8xf32> to vector<8x1xf32>
    %cst_1 = arith.constant 5.120000e+02 : f32
    %3 = vector.broadcast %cst_1 : f32 to vector<8x1xf32>
    %4 = arith.divf %2, %3 : vector<8x1xf32>
    %5 = arith.mulf %0, %0 : vector<8x512xf32>
    %cst_2 = arith.constant dense<0.000000e+00> : vector<8xf32>
    %6 = vector.multi_reduction <add>, %5, %cst_2 [1] : vector<8x512xf32> to vector<8xf32>
    %7 = vector.shape_cast %6 : vector<8xf32> to vector<8x1xf32>
    %cst_3 = arith.constant 5.120000e+02 : f32
    %8 = vector.broadcast %cst_3 : f32 to vector<8x1xf32>
    %9 = arith.divf %7, %8 : vector<8x1xf32>
    %10 = arith.mulf %4, %4 : vector<8x1xf32>
    %11 = arith.subf %9, %10 : vector<8x1xf32>
    %12 = vector.broadcast %4 : vector<8x1xf32> to vector<8x512xf32>
    %13 = arith.subf %0, %12 : vector<8x512xf32>
    %cst_4 = arith.constant 9.99999974E-6 : f32
    %14 = vector.broadcast %cst_4 : f32 to vector<8x1xf32>
    %15 = arith.addf %11, %14 : vector<8x1xf32>
    %16 = math.rsqrt %15 : vector<8x1xf32>
    %17 = vector.broadcast %16 : vector<8x1xf32> to vector<8x512xf32>
    %18 = arith.mulf %13, %17 : vector<8x512xf32>
    %c0_5 = arith.constant 0 : index
    %c0_6 = arith.constant 0 : index
    %19 = vector.load %arg2[%c0_5, %c0_6] : memref<1x512xf32, #tpu.memory_space<vmem>>, vector<1x512xf32>
    %20 = vector.broadcast %19 : vector<1x512xf32> to vector<8x512xf32>
    %21 = arith.mulf %18, %20 : vector<8x512xf32>
    %c0_7 = arith.constant 0 : index
    %c0_8 = arith.constant 0 : index
    %22 = vector.load %arg3[%c0_7, %c0_8] : memref<1x512xf32, #tpu.memory_space<vmem>>, vector<1x512xf32>
    %23 = vector.broadcast %22 : vector<1x512xf32> to vector<8x512xf32>
    %24 = arith.addf %21, %23 : vector<8x512xf32>
    %25 = arith.truncf %24 : vector<8x512xf32> to vector<8x512xbf16>
    %c0_9 = arith.constant 0 : index
    %c0_10 = arith.constant 0 : index
    %26 = vector.load %arg4[%c0_9, %c0_10] : memref<512x256xbf16, #tpu.memory_space<vmem>>, vector<512x256xbf16>
    %cst_11 = arith.constant dense<0.000000e+00> : vector<8x256xf32>
    %27 = tpu.matmul %25, %26, %cst_11 {dimension_numbers = #tpu.dot_dimension_numbers<[1], [0], [0], [1], [0, 0, 1, 1], [], []>} : vector<8x512xbf16>, vector<512x256xbf16>, vector<8x256xf32> -> vector<8x256xf32>
    %c0_12 = arith.constant 0 : index
    %c0_13 = arith.constant 0 : index
    %28 = vector.load %arg5[%c0_12, %c0_13] : memref<8x256xf32, #tpu.memory_space<vmem>>, vector<8x256xf32>
    tpu.vector_store %arg5[%c0_12, %c0_13], %27 {strides = array<i32>} : memref<8x256xf32, #tpu.memory_space<vmem>>, vector<8x256xf32>,
    return
  }
  func.func @transform_0(%arg0: i32) -> (i32, i32) {
    %c0_i32 = arith.constant 0 : i32
    %c0_i32_0 = arith.constant 0 : i32
    return %arg0, %c0_i32 : i32, i32
  }
  func.func @transform_1(%arg0: i32) -> (i32, i32) {
    %c0_i32 = arith.constant 0 : i32
    %c0_i32_0 = arith.constant 0 : i32
    %c0_i32_1 = arith.constant 0 : i32
    return %c0_i32, %c0_i32_0 : i32, i32
  }
  func.func @transform_2(%arg0: i32) -> (i32, i32) {
    %c0_i32 = arith.constant 0 : i32
    %c0_i32_0 = arith.constant 0 : i32
    %c0_i32_1 = arith.constant 0 : i32
    return %c0_i32, %c0_i32_0 : i32, i32
  }
  func.func @transform_3(%arg0: i32) -> (i32, i32) {
    %c0_i32 = arith.constant 0 : i32
    %c0_i32_0 = arith.constant 0 : i32
    %c0_i32_1 = arith.constant 0 : i32
    return %c0_i32, %c0_i32_0 : i32, i32
  }
  func.func @transform_4(%arg0: i32) -> (i32, i32) {
    %c0_i32 = arith.constant 0 : i32
    %c0_i32_0 = arith.constant 0 : i32
    return %arg0, %c0_i32 : i32, i32
  }
}

module attributes {stable_mosaic.version = 11 : i64} {
  func.func @_expand_ln_kernel(%arg0: i32, %arg1: memref<8x256xf32, #tpu.memory_space<vmem>>, %arg2: memref<256x1024xbf16, #tpu.memory_space<vmem>>, %arg3: memref<1x256xf32, #tpu.memory_space<vmem>>, %arg4: memref<1x256xf32, #tpu.memory_space<vmem>>, %arg5: memref<8x1024xf32, #tpu.memory_space<vmem>>) attributes {dimension_semantics = [#tpu.dimension_semantics<parallel>], iteration_bounds = array<i64: 1>, scalar_prefetch = 0 : i64, scratch_operands = 0 : i64, tpu.core_type = #tpu.core_type<tc>, window_params = [{transform_indices = @transform_0, window_bounds = array<i64: 8, 256>}, {pipeline_mode = #tpu.pipeline_mode<synchronous>, transform_indices = @transform_1, window_bounds = array<i64: 256, 1024>}, {pipeline_mode = #tpu.pipeline_mode<synchronous>, transform_indices = @transform_2, window_bounds = array<i64: 1, 256>}, {pipeline_mode = #tpu.pipeline_mode<synchronous>, transform_indices = @transform_3, window_bounds = array<i64: 1, 256>}, {transform_indices = @transform_4, window_bounds = array<i64: 8, 1024>}]} {
    %c0 = arith.constant 0 : index
    %c0_0 = arith.constant 0 : index
    %0 = vector.load %arg1[%c0, %c0_0] : memref<8x256xf32, #tpu.memory_space<vmem>>, vector<8x256xf32>
    %1 = arith.truncf %0 : vector<8x256xf32> to vector<8x256xbf16>
    %c0_1 = arith.constant 0 : index
    %c0_2 = arith.constant 0 : index
    %2 = vector.load %arg2[%c0_1, %c0_2] : memref<256x1024xbf16, #tpu.memory_space<vmem>>, vector<256x1024xbf16>
    %cst = arith.constant dense<0.000000e+00> : vector<8x1024xf32>
    %3 = tpu.matmul %1, %2, %cst {dimension_numbers = #tpu.dot_dimension_numbers<[1], [0], [0], [1], [0, 0, 1, 1], [], []>} : vector<8x256xbf16>, vector<256x1024xbf16>, vector<8x1024xf32> -> vector<8x1024xf32>
    %c0_3 = arith.constant 0 : index
    %c0_4 = arith.constant 0 : index
    %4 = vector.load %arg3[%c0_3, %c0_4] : memref<1x256xf32, #tpu.memory_space<vmem>>, vector<1x256xf32>
    %c0_5 = arith.constant 0 : index
    %c0_6 = arith.constant 0 : index
    %5 = vector.load %arg4[%c0_5, %c0_6] : memref<1x256xf32, #tpu.memory_space<vmem>>, vector<1x256xf32>
    %6 = vector.extract_strided_slice %3 {offsets = [0, 0], sizes = [8, 256], strides = [1, 1]} : vector<8x1024xf32> to vector<8x256xf32>
    %cst_7 = arith.constant dense<0.000000e+00> : vector<8xf32>
    %7 = vector.multi_reduction <add>, %6, %cst_7 [1] : vector<8x256xf32> to vector<8xf32>
    %8 = vector.shape_cast %7 : vector<8xf32> to vector<8x1xf32>
    %cst_8 = arith.constant 2.560000e+02 : f32
    %9 = vector.broadcast %cst_8 : f32 to vector<8x1xf32>
    %10 = arith.divf %8, %9 : vector<8x1xf32>
    %11 = arith.mulf %6, %6 : vector<8x256xf32>
    %cst_9 = arith.constant dense<0.000000e+00> : vector<8xf32>
    %12 = vector.multi_reduction <add>, %11, %cst_9 [1] : vector<8x256xf32> to vector<8xf32>
    %13 = vector.shape_cast %12 : vector<8xf32> to vector<8x1xf32>
    %cst_10 = arith.constant 2.560000e+02 : f32
    %14 = vector.broadcast %cst_10 : f32 to vector<8x1xf32>
    %15 = arith.divf %13, %14 : vector<8x1xf32>
    %16 = arith.mulf %10, %10 : vector<8x1xf32>
    %17 = arith.subf %15, %16 : vector<8x1xf32>
    %18 = vector.broadcast %10 : vector<8x1xf32> to vector<8x256xf32>
    %19 = arith.subf %6, %18 : vector<8x256xf32>
    %cst_11 = arith.constant 9.99999974E-6 : f32
    %20 = vector.broadcast %cst_11 : f32 to vector<8x1xf32>
    %21 = arith.addf %17, %20 : vector<8x1xf32>
    %22 = math.rsqrt %21 : vector<8x1xf32>
    %23 = vector.broadcast %22 : vector<8x1xf32> to vector<8x256xf32>
    %24 = arith.mulf %19, %23 : vector<8x256xf32>
    %25 = vector.broadcast %4 : vector<1x256xf32> to vector<8x256xf32>
    %26 = arith.mulf %24, %25 : vector<8x256xf32>
    %27 = vector.broadcast %5 : vector<1x256xf32> to vector<8x256xf32>
    %28 = arith.addf %26, %27 : vector<8x256xf32>
    %c0_12 = arith.constant 0 : index
    %c0_13 = arith.constant 0 : index
    %29 = vector.load %arg5[%c0_12, %c0_13] : memref<8x1024xf32, #tpu.memory_space<vmem>>, vector<8x256xf32>
    tpu.vector_store %arg5[%c0_12, %c0_13], %28 {strides = array<i32>} : memref<8x1024xf32, #tpu.memory_space<vmem>>, vector<8x256xf32>,
    %30 = vector.extract_strided_slice %3 {offsets = [0, 256], sizes = [8, 256], strides = [1, 1]} : vector<8x1024xf32> to vector<8x256xf32>
    %cst_14 = arith.constant dense<0.000000e+00> : vector<8xf32>
    %31 = vector.multi_reduction <add>, %30, %cst_14 [1] : vector<8x256xf32> to vector<8xf32>
    %32 = vector.shape_cast %31 : vector<8xf32> to vector<8x1xf32>
    %cst_15 = arith.constant 2.560000e+02 : f32
    %33 = vector.broadcast %cst_15 : f32 to vector<8x1xf32>
    %34 = arith.divf %32, %33 : vector<8x1xf32>
    %35 = arith.mulf %30, %30 : vector<8x256xf32>
    %cst_16 = arith.constant dense<0.000000e+00> : vector<8xf32>
    %36 = vector.multi_reduction <add>, %35, %cst_16 [1] : vector<8x256xf32> to vector<8xf32>
    %37 = vector.shape_cast %36 : vector<8xf32> to vector<8x1xf32>
    %cst_17 = arith.constant 2.560000e+02 : f32
    %38 = vector.broadcast %cst_17 : f32 to vector<8x1xf32>
    %39 = arith.divf %37, %38 : vector<8x1xf32>
    %40 = arith.mulf %34, %34 : vector<8x1xf32>
    %41 = arith.subf %39, %40 : vector<8x1xf32>
    %42 = vector.broadcast %34 : vector<8x1xf32> to vector<8x256xf32>
    %43 = arith.subf %30, %42 : vector<8x256xf32>
    %cst_18 = arith.constant 9.99999974E-6 : f32
    %44 = vector.broadcast %cst_18 : f32 to vector<8x1xf32>
    %45 = arith.addf %41, %44 : vector<8x1xf32>
    %46 = math.rsqrt %45 : vector<8x1xf32>
    %47 = vector.broadcast %46 : vector<8x1xf32> to vector<8x256xf32>
    %48 = arith.mulf %43, %47 : vector<8x256xf32>
    %49 = vector.broadcast %4 : vector<1x256xf32> to vector<8x256xf32>
    %50 = arith.mulf %48, %49 : vector<8x256xf32>
    %51 = vector.broadcast %5 : vector<1x256xf32> to vector<8x256xf32>
    %52 = arith.addf %50, %51 : vector<8x256xf32>
    %c0_19 = arith.constant 0 : index
    %c256 = arith.constant 256 : index
    %53 = vector.load %arg5[%c0_19, %c256] : memref<8x1024xf32, #tpu.memory_space<vmem>>, vector<8x256xf32>
    tpu.vector_store %arg5[%c0_19, %c256], %52 {strides = array<i32>} : memref<8x1024xf32, #tpu.memory_space<vmem>>, vector<8x256xf32>,
    %54 = vector.extract_strided_slice %3 {offsets = [0, 512], sizes = [8, 256], strides = [1, 1]} : vector<8x1024xf32> to vector<8x256xf32>
    %cst_20 = arith.constant dense<0.000000e+00> : vector<8xf32>
    %55 = vector.multi_reduction <add>, %54, %cst_20 [1] : vector<8x256xf32> to vector<8xf32>
    %56 = vector.shape_cast %55 : vector<8xf32> to vector<8x1xf32>
    %cst_21 = arith.constant 2.560000e+02 : f32
    %57 = vector.broadcast %cst_21 : f32 to vector<8x1xf32>
    %58 = arith.divf %56, %57 : vector<8x1xf32>
    %59 = arith.mulf %54, %54 : vector<8x256xf32>
    %cst_22 = arith.constant dense<0.000000e+00> : vector<8xf32>
    %60 = vector.multi_reduction <add>, %59, %cst_22 [1] : vector<8x256xf32> to vector<8xf32>
    %61 = vector.shape_cast %60 : vector<8xf32> to vector<8x1xf32>
    %cst_23 = arith.constant 2.560000e+02 : f32
    %62 = vector.broadcast %cst_23 : f32 to vector<8x1xf32>
    %63 = arith.divf %61, %62 : vector<8x1xf32>
    %64 = arith.mulf %58, %58 : vector<8x1xf32>
    %65 = arith.subf %63, %64 : vector<8x1xf32>
    %66 = vector.broadcast %58 : vector<8x1xf32> to vector<8x256xf32>
    %67 = arith.subf %54, %66 : vector<8x256xf32>
    %cst_24 = arith.constant 9.99999974E-6 : f32
    %68 = vector.broadcast %cst_24 : f32 to vector<8x1xf32>
    %69 = arith.addf %65, %68 : vector<8x1xf32>
    %70 = math.rsqrt %69 : vector<8x1xf32>
    %71 = vector.broadcast %70 : vector<8x1xf32> to vector<8x256xf32>
    %72 = arith.mulf %67, %71 : vector<8x256xf32>
    %73 = vector.broadcast %4 : vector<1x256xf32> to vector<8x256xf32>
    %74 = arith.mulf %72, %73 : vector<8x256xf32>
    %75 = vector.broadcast %5 : vector<1x256xf32> to vector<8x256xf32>
    %76 = arith.addf %74, %75 : vector<8x256xf32>
    %c0_25 = arith.constant 0 : index
    %c512 = arith.constant 512 : index
    %77 = vector.load %arg5[%c0_25, %c512] : memref<8x1024xf32, #tpu.memory_space<vmem>>, vector<8x256xf32>
    tpu.vector_store %arg5[%c0_25, %c512], %76 {strides = array<i32>} : memref<8x1024xf32, #tpu.memory_space<vmem>>, vector<8x256xf32>,
    %78 = vector.extract_strided_slice %3 {offsets = [0, 768], sizes = [8, 256], strides = [1, 1]} : vector<8x1024xf32> to vector<8x256xf32>
    %cst_26 = arith.constant dense<0.000000e+00> : vector<8xf32>
    %79 = vector.multi_reduction <add>, %78, %cst_26 [1] : vector<8x256xf32> to vector<8xf32>
    %80 = vector.shape_cast %79 : vector<8xf32> to vector<8x1xf32>
    %cst_27 = arith.constant 2.560000e+02 : f32
    %81 = vector.broadcast %cst_27 : f32 to vector<8x1xf32>
    %82 = arith.divf %80, %81 : vector<8x1xf32>
    %83 = arith.mulf %78, %78 : vector<8x256xf32>
    %cst_28 = arith.constant dense<0.000000e+00> : vector<8xf32>
    %84 = vector.multi_reduction <add>, %83, %cst_28 [1] : vector<8x256xf32> to vector<8xf32>
    %85 = vector.shape_cast %84 : vector<8xf32> to vector<8x1xf32>
    %cst_29 = arith.constant 2.560000e+02 : f32
    %86 = vector.broadcast %cst_29 : f32 to vector<8x1xf32>
    %87 = arith.divf %85, %86 : vector<8x1xf32>
    %88 = arith.mulf %82, %82 : vector<8x1xf32>
    %89 = arith.subf %87, %88 : vector<8x1xf32>
    %90 = vector.broadcast %82 : vector<8x1xf32> to vector<8x256xf32>
    %91 = arith.subf %78, %90 : vector<8x256xf32>
    %cst_30 = arith.constant 9.99999974E-6 : f32
    %92 = vector.broadcast %cst_30 : f32 to vector<8x1xf32>
    %93 = arith.addf %89, %92 : vector<8x1xf32>
    %94 = math.rsqrt %93 : vector<8x1xf32>
    %95 = vector.broadcast %94 : vector<8x1xf32> to vector<8x256xf32>
    %96 = arith.mulf %91, %95 : vector<8x256xf32>
    %97 = vector.broadcast %4 : vector<1x256xf32> to vector<8x256xf32>
    %98 = arith.mulf %96, %97 : vector<8x256xf32>
    %99 = vector.broadcast %5 : vector<1x256xf32> to vector<8x256xf32>
    %100 = arith.addf %98, %99 : vector<8x256xf32>
    %c0_31 = arith.constant 0 : index
    %c768 = arith.constant 768 : index
    %101 = vector.load %arg5[%c0_31, %c768] : memref<8x1024xf32, #tpu.memory_space<vmem>>, vector<8x256xf32>
    tpu.vector_store %arg5[%c0_31, %c768], %100 {strides = array<i32>} : memref<8x1024xf32, #tpu.memory_space<vmem>>, vector<8x256xf32>,
    return
  }
  func.func @transform_0(%arg0: i32) -> (i32, i32) {
    %c0_i32 = arith.constant 0 : i32
    %c0_i32_0 = arith.constant 0 : i32
    return %arg0, %c0_i32 : i32, i32
  }
  func.func @transform_1(%arg0: i32) -> (i32, i32) {
    %c0_i32 = arith.constant 0 : i32
    %c0_i32_0 = arith.constant 0 : i32
    %c0_i32_1 = arith.constant 0 : i32
    return %c0_i32, %c0_i32_0 : i32, i32
  }
  func.func @transform_2(%arg0: i32) -> (i32, i32) {
    %c0_i32 = arith.constant 0 : i32
    %c0_i32_0 = arith.constant 0 : i32
    %c0_i32_1 = arith.constant 0 : i32
    return %c0_i32, %c0_i32_0 : i32, i32
  }
  func.func @transform_3(%arg0: i32) -> (i32, i32) {
    %c0_i32 = arith.constant 0 : i32
    %c0_i32_0 = arith.constant 0 : i32
    %c0_i32_1 = arith.constant 0 : i32
    return %c0_i32, %c0_i32_0 : i32, i32
  }
  func.func @transform_4(%arg0: i32) -> (i32, i32) {
    %c0_i32 = arith.constant 0 : i32
    %c0_i32_0 = arith.constant 0 : i32
    return %arg0, %c0_i32 : i32, i32
  }
}

module attributes {stable_mosaic.version = 11 : i64} {
  func.func @_expand_ln_kernel(%arg0: i32, %arg1: memref<32x256xf32, #tpu.memory_space<vmem>>, %arg2: memref<256x1024xbf16, #tpu.memory_space<vmem>>, %arg3: memref<1x256xf32, #tpu.memory_space<vmem>>, %arg4: memref<1x256xf32, #tpu.memory_space<vmem>>, %arg5: memref<32x1024xf32, #tpu.memory_space<vmem>>) attributes {dimension_semantics = [#tpu.dimension_semantics<parallel>], iteration_bounds = array<i64: 1>, scalar_prefetch = 0 : i64, scratch_operands = 0 : i64, tpu.core_type = #tpu.core_type<tc>, window_params = [{transform_indices = @transform_0, window_bounds = array<i64: 32, 256>}, {pipeline_mode = #tpu.pipeline_mode<synchronous>, transform_indices = @transform_1, window_bounds = array<i64: 256, 1024>}, {pipeline_mode = #tpu.pipeline_mode<synchronous>, transform_indices = @transform_2, window_bounds = array<i64: 1, 256>}, {pipeline_mode = #tpu.pipeline_mode<synchronous>, transform_indices = @transform_3, window_bounds = array<i64: 1, 256>}, {transform_indices = @transform_4, window_bounds = array<i64: 32, 1024>}]} {
    %c0 = arith.constant 0 : index
    %c0_0 = arith.constant 0 : index
    %0 = vector.load %arg1[%c0, %c0_0] : memref<32x256xf32, #tpu.memory_space<vmem>>, vector<32x256xf32>
    %1 = arith.truncf %0 : vector<32x256xf32> to vector<32x256xbf16>
    %c0_1 = arith.constant 0 : index
    %c0_2 = arith.constant 0 : index
    %2 = vector.load %arg2[%c0_1, %c0_2] : memref<256x1024xbf16, #tpu.memory_space<vmem>>, vector<256x1024xbf16>
    %cst = arith.constant dense<0.000000e+00> : vector<32x1024xf32>
    %3 = tpu.matmul %1, %2, %cst {dimension_numbers = #tpu.dot_dimension_numbers<[1], [0], [0], [1], [0, 0, 1, 1], [], []>} : vector<32x256xbf16>, vector<256x1024xbf16>, vector<32x1024xf32> -> vector<32x1024xf32>
    %c0_3 = arith.constant 0 : index
    %c0_4 = arith.constant 0 : index
    %4 = vector.load %arg3[%c0_3, %c0_4] : memref<1x256xf32, #tpu.memory_space<vmem>>, vector<1x256xf32>
    %c0_5 = arith.constant 0 : index
    %c0_6 = arith.constant 0 : index
    %5 = vector.load %arg4[%c0_5, %c0_6] : memref<1x256xf32, #tpu.memory_space<vmem>>, vector<1x256xf32>
    %6 = vector.extract_strided_slice %3 {offsets = [0, 0], sizes = [32, 256], strides = [1, 1]} : vector<32x1024xf32> to vector<32x256xf32>
    %cst_7 = arith.constant dense<0.000000e+00> : vector<32xf32>
    %7 = vector.multi_reduction <add>, %6, %cst_7 [1] : vector<32x256xf32> to vector<32xf32>
    %8 = vector.shape_cast %7 : vector<32xf32> to vector<32x1xf32>
    %cst_8 = arith.constant 2.560000e+02 : f32
    %9 = vector.broadcast %cst_8 : f32 to vector<32x1xf32>
    %10 = arith.divf %8, %9 : vector<32x1xf32>
    %11 = arith.mulf %6, %6 : vector<32x256xf32>
    %cst_9 = arith.constant dense<0.000000e+00> : vector<32xf32>
    %12 = vector.multi_reduction <add>, %11, %cst_9 [1] : vector<32x256xf32> to vector<32xf32>
    %13 = vector.shape_cast %12 : vector<32xf32> to vector<32x1xf32>
    %cst_10 = arith.constant 2.560000e+02 : f32
    %14 = vector.broadcast %cst_10 : f32 to vector<32x1xf32>
    %15 = arith.divf %13, %14 : vector<32x1xf32>
    %16 = arith.mulf %10, %10 : vector<32x1xf32>
    %17 = arith.subf %15, %16 : vector<32x1xf32>
    %18 = vector.broadcast %10 : vector<32x1xf32> to vector<32x256xf32>
    %19 = arith.subf %6, %18 : vector<32x256xf32>
    %cst_11 = arith.constant 9.99999974E-6 : f32
    %20 = vector.broadcast %cst_11 : f32 to vector<32x1xf32>
    %21 = arith.addf %17, %20 : vector<32x1xf32>
    %22 = math.rsqrt %21 : vector<32x1xf32>
    %23 = vector.broadcast %22 : vector<32x1xf32> to vector<32x256xf32>
    %24 = arith.mulf %19, %23 : vector<32x256xf32>
    %25 = vector.broadcast %4 : vector<1x256xf32> to vector<32x256xf32>
    %26 = arith.mulf %24, %25 : vector<32x256xf32>
    %27 = vector.broadcast %5 : vector<1x256xf32> to vector<32x256xf32>
    %28 = arith.addf %26, %27 : vector<32x256xf32>
    %c0_12 = arith.constant 0 : index
    %c0_13 = arith.constant 0 : index
    %29 = vector.load %arg5[%c0_12, %c0_13] : memref<32x1024xf32, #tpu.memory_space<vmem>>, vector<32x256xf32>
    tpu.vector_store %arg5[%c0_12, %c0_13], %28 {strides = array<i32>} : memref<32x1024xf32, #tpu.memory_space<vmem>>, vector<32x256xf32>,
    %30 = vector.extract_strided_slice %3 {offsets = [0, 256], sizes = [32, 256], strides = [1, 1]} : vector<32x1024xf32> to vector<32x256xf32>
    %cst_14 = arith.constant dense<0.000000e+00> : vector<32xf32>
    %31 = vector.multi_reduction <add>, %30, %cst_14 [1] : vector<32x256xf32> to vector<32xf32>
    %32 = vector.shape_cast %31 : vector<32xf32> to vector<32x1xf32>
    %cst_15 = arith.constant 2.560000e+02 : f32
    %33 = vector.broadcast %cst_15 : f32 to vector<32x1xf32>
    %34 = arith.divf %32, %33 : vector<32x1xf32>
    %35 = arith.mulf %30, %30 : vector<32x256xf32>
    %cst_16 = arith.constant dense<0.000000e+00> : vector<32xf32>
    %36 = vector.multi_reduction <add>, %35, %cst_16 [1] : vector<32x256xf32> to vector<32xf32>
    %37 = vector.shape_cast %36 : vector<32xf32> to vector<32x1xf32>
    %cst_17 = arith.constant 2.560000e+02 : f32
    %38 = vector.broadcast %cst_17 : f32 to vector<32x1xf32>
    %39 = arith.divf %37, %38 : vector<32x1xf32>
    %40 = arith.mulf %34, %34 : vector<32x1xf32>
    %41 = arith.subf %39, %40 : vector<32x1xf32>
    %42 = vector.broadcast %34 : vector<32x1xf32> to vector<32x256xf32>
    %43 = arith.subf %30, %42 : vector<32x256xf32>
    %cst_18 = arith.constant 9.99999974E-6 : f32
    %44 = vector.broadcast %cst_18 : f32 to vector<32x1xf32>
    %45 = arith.addf %41, %44 : vector<32x1xf32>
    %46 = math.rsqrt %45 : vector<32x1xf32>
    %47 = vector.broadcast %46 : vector<32x1xf32> to vector<32x256xf32>
    %48 = arith.mulf %43, %47 : vector<32x256xf32>
    %49 = vector.broadcast %4 : vector<1x256xf32> to vector<32x256xf32>
    %50 = arith.mulf %48, %49 : vector<32x256xf32>
    %51 = vector.broadcast %5 : vector<1x256xf32> to vector<32x256xf32>
    %52 = arith.addf %50, %51 : vector<32x256xf32>
    %c0_19 = arith.constant 0 : index
    %c256 = arith.constant 256 : index
    %53 = vector.load %arg5[%c0_19, %c256] : memref<32x1024xf32, #tpu.memory_space<vmem>>, vector<32x256xf32>
    tpu.vector_store %arg5[%c0_19, %c256], %52 {strides = array<i32>} : memref<32x1024xf32, #tpu.memory_space<vmem>>, vector<32x256xf32>,
    %54 = vector.extract_strided_slice %3 {offsets = [0, 512], sizes = [32, 256], strides = [1, 1]} : vector<32x1024xf32> to vector<32x256xf32>
    %cst_20 = arith.constant dense<0.000000e+00> : vector<32xf32>
    %55 = vector.multi_reduction <add>, %54, %cst_20 [1] : vector<32x256xf32> to vector<32xf32>
    %56 = vector.shape_cast %55 : vector<32xf32> to vector<32x1xf32>
    %cst_21 = arith.constant 2.560000e+02 : f32
    %57 = vector.broadcast %cst_21 : f32 to vector<32x1xf32>
    %58 = arith.divf %56, %57 : vector<32x1xf32>
    %59 = arith.mulf %54, %54 : vector<32x256xf32>
    %cst_22 = arith.constant dense<0.000000e+00> : vector<32xf32>
    %60 = vector.multi_reduction <add>, %59, %cst_22 [1] : vector<32x256xf32> to vector<32xf32>
    %61 = vector.shape_cast %60 : vector<32xf32> to vector<32x1xf32>
    %cst_23 = arith.constant 2.560000e+02 : f32
    %62 = vector.broadcast %cst_23 : f32 to vector<32x1xf32>
    %63 = arith.divf %61, %62 : vector<32x1xf32>
    %64 = arith.mulf %58, %58 : vector<32x1xf32>
    %65 = arith.subf %63, %64 : vector<32x1xf32>
    %66 = vector.broadcast %58 : vector<32x1xf32> to vector<32x256xf32>
    %67 = arith.subf %54, %66 : vector<32x256xf32>
    %cst_24 = arith.constant 9.99999974E-6 : f32
    %68 = vector.broadcast %cst_24 : f32 to vector<32x1xf32>
    %69 = arith.addf %65, %68 : vector<32x1xf32>
    %70 = math.rsqrt %69 : vector<32x1xf32>
    %71 = vector.broadcast %70 : vector<32x1xf32> to vector<32x256xf32>
    %72 = arith.mulf %67, %71 : vector<32x256xf32>
    %73 = vector.broadcast %4 : vector<1x256xf32> to vector<32x256xf32>
    %74 = arith.mulf %72, %73 : vector<32x256xf32>
    %75 = vector.broadcast %5 : vector<1x256xf32> to vector<32x256xf32>
    %76 = arith.addf %74, %75 : vector<32x256xf32>
    %c0_25 = arith.constant 0 : index
    %c512 = arith.constant 512 : index
    %77 = vector.load %arg5[%c0_25, %c512] : memref<32x1024xf32, #tpu.memory_space<vmem>>, vector<32x256xf32>
    tpu.vector_store %arg5[%c0_25, %c512], %76 {strides = array<i32>} : memref<32x1024xf32, #tpu.memory_space<vmem>>, vector<32x256xf32>,
    %78 = vector.extract_strided_slice %3 {offsets = [0, 768], sizes = [32, 256], strides = [1, 1]} : vector<32x1024xf32> to vector<32x256xf32>
    %cst_26 = arith.constant dense<0.000000e+00> : vector<32xf32>
    %79 = vector.multi_reduction <add>, %78, %cst_26 [1] : vector<32x256xf32> to vector<32xf32>
    %80 = vector.shape_cast %79 : vector<32xf32> to vector<32x1xf32>
    %cst_27 = arith.constant 2.560000e+02 : f32
    %81 = vector.broadcast %cst_27 : f32 to vector<32x1xf32>
    %82 = arith.divf %80, %81 : vector<32x1xf32>
    %83 = arith.mulf %78, %78 : vector<32x256xf32>
    %cst_28 = arith.constant dense<0.000000e+00> : vector<32xf32>
    %84 = vector.multi_reduction <add>, %83, %cst_28 [1] : vector<32x256xf32> to vector<32xf32>
    %85 = vector.shape_cast %84 : vector<32xf32> to vector<32x1xf32>
    %cst_29 = arith.constant 2.560000e+02 : f32
    %86 = vector.broadcast %cst_29 : f32 to vector<32x1xf32>
    %87 = arith.divf %85, %86 : vector<32x1xf32>
    %88 = arith.mulf %82, %82 : vector<32x1xf32>
    %89 = arith.subf %87, %88 : vector<32x1xf32>
    %90 = vector.broadcast %82 : vector<32x1xf32> to vector<32x256xf32>
    %91 = arith.subf %78, %90 : vector<32x256xf32>
    %cst_30 = arith.constant 9.99999974E-6 : f32
    %92 = vector.broadcast %cst_30 : f32 to vector<32x1xf32>
    %93 = arith.addf %89, %92 : vector<32x1xf32>
    %94 = math.rsqrt %93 : vector<32x1xf32>
    %95 = vector.broadcast %94 : vector<32x1xf32> to vector<32x256xf32>
    %96 = arith.mulf %91, %95 : vector<32x256xf32>
    %97 = vector.broadcast %4 : vector<1x256xf32> to vector<32x256xf32>
    %98 = arith.mulf %96, %97 : vector<32x256xf32>
    %99 = vector.broadcast %5 : vector<1x256xf32> to vector<32x256xf32>
    %100 = arith.addf %98, %99 : vector<32x256xf32>
    %c0_31 = arith.constant 0 : index
    %c768 = arith.constant 768 : index
    %101 = vector.load %arg5[%c0_31, %c768] : memref<32x1024xf32, #tpu.memory_space<vmem>>, vector<32x256xf32>
    tpu.vector_store %arg5[%c0_31, %c768], %100 {strides = array<i32>} : memref<32x1024xf32, #tpu.memory_space<vmem>>, vector<32x256xf32>,
    return
  }
  func.func @transform_0(%arg0: i32) -> (i32, i32) {
    %c0_i32 = arith.constant 0 : i32
    %c0_i32_0 = arith.constant 0 : i32
    return %arg0, %c0_i32 : i32, i32
  }
  func.func @transform_1(%arg0: i32) -> (i32, i32) {
    %c0_i32 = arith.constant 0 : i32
    %c0_i32_0 = arith.constant 0 : i32
    %c0_i32_1 = arith.constant 0 : i32
    return %c0_i32, %c0_i32_0 : i32, i32
  }
  func.func @transform_2(%arg0: i32) -> (i32, i32) {
    %c0_i32 = arith.constant 0 : i32
    %c0_i32_0 = arith.constant 0 : i32
    %c0_i32_1 = arith.constant 0 : i32
    return %c0_i32, %c0_i32_0 : i32, i32
  }
  func.func @transform_3(%arg0: i32) -> (i32, i32) {
    %c0_i32 = arith.constant 0 : i32
    %c0_i32_0 = arith.constant 0 : i32
    %c0_i32_1 = arith.constant 0 : i32
    return %c0_i32, %c0_i32_0 : i32, i32
  }
  func.func @transform_4(%arg0: i32) -> (i32, i32) {
    %c0_i32 = arith.constant 0 : i32
    %c0_i32_0 = arith.constant 0 : i32
    return %arg0, %c0_i32 : i32, i32
  }
}

</mosaic_0001>

<llo_original>
// kernel: tile.8
$region0: #{tile.8}
  #allocation0 [shape = 's32[1]{0}', space=sflag, size = 0x4, scoped, tag = 'scoped memory for tile.8']
  %s0 = inlined_call_operand.vmem [shape: f32[32], index: 0, kind: input, shape index: {}]
  %s1 = inlined_call_operand.vmem [shape: f32[4,32], index: 1, kind: output, shape index: {}]
  // Predicated region
  $region2: #{tile.8} parent=0 // pred_check
    _
  $region3: #{tile.8} parent=0 // pred_check_branch
    %3 = sbr.rel (0) target = $region5
  $region4: #{tile.8} parent=0 // pred_region
    _
  $region5: #{tile.8} parent=0 // pred_fallthru
    _
  %v4 = vld [vmem:[%s0] ss:$0 sm:$0xff]
  %5 = vst [vmem:[%s1] sm:$0xf] %v4

// kernel: tile.9
$region0: #{tile.9}
  %s0 = inlined_call_operand.vmem [shape: f32[4,32], index: 0, kind: input, shape index: {}]
  %s1 = inlined_call_operand.vmem [shape: f32[1,128], index: 1, kind: output, shape index: {}]
  $region1: #{tile.9} parent=0
    #allocation0 [shape = 'u8[4096]{0}', space=vmem, size = 0x1000, scoped, tag = 'scoped mem for output reshape']
    #allocation1 [shape = 'u8[4096]{0}', space=vmem, size = 0x1000, scoped, tag = 'scoped mem for input reshape']
    %s3 = sshll.u32 1, 4
    %s4 = ssub.s32 %s3, 1
    %v5 = vld [vmem:[%s0] sm:%s4]
    %6 = vst [vmem:[#allocation1] sm:%s4] %v5
    %v7 = vld [vmem:[#allocation1] sm:$0x1]
    %vm8 = vcmask 261120
    %9 = vst.msk [vmem:[#allocation0] sm:$0x1] %vm8, %v7
    %s10 = scalar_lea.vmem [#allocation1], 3
    %v11 = vld [vmem:[%s10] sm:$0x1]
    %12 = vrot.lane.b32.xlu0 %v11, 96
    %v13 = vpop.permute.xlu0 %12
    %vm14 = vcmask 1048320
    %15 = vst.msk [vmem:[#allocation0] sm:$0x1] %vm14, %v13
    %s16 = scalar_lea.vmem [#allocation1], 2
    %v17 = vld [vmem:[%s16] sm:$0x1]
    %18 = vrot.lane.b32.xlu0 %v17, 64
    %v19 = vpop.permute.xlu0 %18
    %vm20 = vcmask 785920
    %21 = vst.msk [vmem:[#allocation0] sm:$0x1] %vm20, %v19
    %s22 = scalar_lea.vmem [#allocation1], 1
    %v23 = vld [vmem:[%s22] sm:$0x1]
    %24 = vrot.lane.b32.xlu0 %v23, 32
    %v25 = vpop.permute.xlu0 %24
    %vm26 = vcmask 523520
    %27 = vst.msk [vmem:[#allocation0] sm:$0x1] %vm26, %v25
    %s29 = sshll.u32 1, 1
    %s30 = ssub.s32 %s29, 1
    %v32 = vld [vmem:[#allocation0] sm:%s30]
    %s33 = sshll.u32 1, 1
    %s34 = ssub.s32 %s33, 1
    %35 = vst [vmem:[%s1] sm:%s34] %v32

// kernel: unet_forward.5
$region0: #{unet_forward.5}
  #allocation0 [shape = 'u32[]', space=smem, size = 0x4, offset = 0x4, fixed_abs, tag = 'smem constant byte address 0x4 - core index']
  #allocation1 [shape = 'u32[144,128]{1,0:T(1,128)}', space=vmem, size = 0x12000, scoped, tag = 'internal scratch']
  %s0 = inlined_call_operand.vmem [shape: bf16[128,64], index: 0, kind: input, shape index: {}]
  %s1 = inlined_call_operand.vmem [shape: bf16[64,128], index: 1, kind: input, shape index: {}]
  %s2 = inlined_call_operand.vmem [shape: f32[1,128], index: 2, kind: input, shape index: {}]
  %s3 = inlined_call_operand.vmem [shape: f32[1,128], index: 3, kind: input, shape index: {}]
  %s4 = inlined_call_operand.vmem [shape: f32[1,128], index: 4, kind: input, shape index: {}]
  %s5 = inlined_call_operand.vmem [shape: bf16[128,64], index: 5, kind: input, shape index: {}]
  %s6 = inlined_call_operand.vmem [shape: f32[128,64], index: 6, kind: output, shape index: {}]
  %s7 = sld [smem:[#allocation0]]
  $region34: #{unet_forward.5} parent=0
    _
  %s9 = ssub.s32 1, %s7
  %s10 = scalar_select 0, %s9, %s7
  // Predicated region
  $region2: #{unet_forward.5} parent=0 // pred_check
    _
  $region3: #{unet_forward.5} parent=0 // pred_check_branch
    %12 = sbr.rel (0) target = $region5
  $region4: #{unet_forward.5} parent=0 // pred_region
    _
  $region5: #{unet_forward.5} parent=0 // pred_fallthru
    _
  // Predicated region
  $region6: #{unet_forward.5} parent=0 // pred_check
    _
  $region7: #{unet_forward.5} parent=0 // pred_check_branch
    %14 = sbr.rel (0) target = $region9
  $region8: #{unet_forward.5} parent=0 // pred_region
    _
  $region9: #{unet_forward.5} parent=0 // pred_fallthru
    _
  // Predicated region
  $region10: #{unet_forward.5} parent=0 // pred_check
    _
  $region11: #{unet_forward.5} parent=0 // pred_check_branch
    %16 = sbr.rel (0) target = $region13
  $region12: #{unet_forward.5} parent=0 // pred_region
    _
  $region13: #{unet_forward.5} parent=0 // pred_fallthru
    _
  // Predicated region
  $region14: #{unet_forward.5} parent=0 // pred_check
    _
  $region15: #{unet_forward.5} parent=0 // pred_check_branch
    %18 = sbr.rel (0) target = $region17
  $region16: #{unet_forward.5} parent=0 // pred_region
    _
  $region17: #{unet_forward.5} parent=0 // pred_fallthru
    _
  // Predicated region
  $region18: #{unet_forward.5} parent=0 // pred_check
    _
  $region19: #{unet_forward.5} parent=0 // pred_check_branch
    %20 = sbr.rel (0) target = $region21
  $region20: #{unet_forward.5} parent=0 // pred_region
    _
  $region21: #{unet_forward.5} parent=0 // pred_fallthru
    _
  // Predicated region
  $region22: #{unet_forward.5} parent=0 // pred_check
    _
  $region23: #{unet_forward.5} parent=0 // pred_check_branch
    %22 = sbr.rel (0) target = $region25
  $region24: #{unet_forward.5} parent=0 // pred_region
    _
  $region25: #{unet_forward.5} parent=0 // pred_fallthru
    _
  %v24 = vld [vmem:[%s0] sm:$0xf]
  %v25 = vld [vmem:[%s0 + $0x4] sm:$0xf]
  %v26 = vld [vmem:[%s0 + $0x8] sm:$0xf]
  %v27 = vld [vmem:[%s0 + $0xc] sm:$0xf]
  %v28 = vld [vmem:[%s0 + $0x10] sm:$0xf]
  %v29 = vld [vmem:[%s0 + $0x14] sm:$0xf]
  %v30 = vld [vmem:[%s0 + $0x18] sm:$0xf]
  %v31 = vld [vmem:[%s0 + $0x1c] sm:$0xf]
  %v32 = vld [vmem:[%s0 + $0x20] sm:$0xf]
  %v33 = vld [vmem:[%s0 + $0x24] sm:$0xf]
  %v34 = vld [vmem:[%s0 + $0x28] sm:$0xf]
  %v35 = vld [vmem:[%s0 + $0x2c] sm:$0xf]
  %v36 = vld [vmem:[%s0 + $0x30] sm:$0xf]
  %v37 = vld [vmem:[%s0 + $0x34] sm:$0xf]
  %v38 = vld [vmem:[%s0 + $0x38] sm:$0xf]
  %v39 = vld [vmem:[%s0 + $0x3c] sm:$0xf]
  %v40 = vld [vmem:[%s1] sm:$0xf]
  %v41 = vld [vmem:[%s1 + $0x4] sm:$0xf]
  %v42 = vld [vmem:[%s1 + $0x8] sm:$0xf]
  %v43 = vld [vmem:[%s1 + $0xc] sm:$0xf]
  %v44 = vld [vmem:[%s1 + $0x10] sm:$0xf]
  %v45 = vld [vmem:[%s1 + $0x14] sm:$0xf]
  %v46 = vld [vmem:[%s1 + $0x18] sm:$0xf]
  %v47 = vld [vmem:[%s1 + $0x1c] sm:$0xf]
  %v48 = vld [vmem:[%s2] sm:$0x1]
  %v50 = vlaneseq
  %v51 = vshrl.u32 %v50, 7
  %v52 = vsub.s32 0, %v51
  %v53 = vrot.slane %v48, %v52
  %v71 = vunpack.c.l.b16 %v24
  %v72 = vunpack.c.l.b16 %v25
  %v73 = vunpack.c.l.b16 %v26
  %v74 = vunpack.c.l.b16 %v27
  %v75 = vunpack.c.l.b16 %v28
  %v76 = vunpack.c.l.b16 %v29
  %v77 = vunpack.c.l.b16 %v30
  %v78 = vunpack.c.l.b16 %v31
  %v79 = vunpack.c.l.b16 %v32
  %v80 = vunpack.c.l.b16 %v33
  %v81 = vunpack.c.l.b16 %v34
  %v82 = vunpack.c.l.b16 %v35
  %v83 = vunpack.c.l.b16 %v36
  %v84 = vunpack.c.l.b16 %v37
  %v85 = vunpack.c.l.b16 %v38
  %v86 = vunpack.c.l.b16 %v39
  %v87 = vpack.c.b16 %v72, %v71
  %v88 = vpack.c.b16 %v74, %v73
  %v89 = vpack.c.b16 %v76, %v75
  %v90 = vpack.c.b16 %v78, %v77
  %v91 = vpack.c.b16 %v80, %v79
  %v92 = vpack.c.b16 %v82, %v81
  %v93 = vpack.c.b16 %v84, %v83
  %v94 = vpack.c.b16 %v86, %v85
  %v103 = vunpack.c.l.b16 %v40
  %v104 = vunpack.c.l.b16 %v41
  %v105 = vunpack.c.l.b16 %v42
  %v106 = vunpack.c.l.b16 %v43
  %v107 = vunpack.c.l.b16 %v44
  %v108 = vunpack.c.l.b16 %v45
  %v109 = vunpack.c.l.b16 %v46
  %v110 = vunpack.c.l.b16 %v47
  %v111 = vpack.c.b16 %v104, %v103
  %v112 = vpack.c.b16 %v106, %v105
  %v113 = vpack.c.b16 %v108, %v107
  %v114 = vpack.c.b16 %v110, %v109
  %vm119 = vcmask 523264
  %v121 = vsel %vm119, %v87, 0
  %v124 = vsel %vm119, %v88, 0
  %v127 = vsel %vm119, %v89, 0
  %v130 = vsel %vm119, %v90, 0
  %v133 = vsel %vm119, %v91, 0
  %v136 = vsel %vm119, %v92, 0
  %v139 = vsel %vm119, %v93, 0
  %v142 = vsel %vm119, %v94, 0
  %144 = vmatprep.subr.bf16.mxu0 0
  %145 = vmatpush1.bf16.msra.mxu0 0
  %146 = vmatprep.subr.bf16.mxu0 0
  %147 = vmatpush1.bf16.msra.mxu0 0
  %148 = vmatprep.subr.bf16.mxu0 0
  %149 = vmatpush1.bf16.msra.mxu0 0
  %150 = vmatprep.subr.bf16.mxu0 0
  %151 = vmatpush1.bf16.msra.mxu0 0
  %152 = vmatprep.subr.bf16.mxu0 0
  %153 = vmatpush1.bf16.msra.mxu0 %v114
  %154 = vmatprep.subr.bf16.mxu0 0
  %155 = vmatpush1.bf16.msra.mxu0 %v113
  %156 = vmatprep.subr.bf16.mxu0 0
  %157 = vmatpush1.bf16.msra.mxu0 %v112
  %158 = vmatprep.subr.bf16.mxu0 0
  %159 = vmatpush1.bf16.msra.mxu0 %v111
  %160 = vmatprep.subr.bf16.mxu0 0
  %161 = vmatpush2.bf16.msra.mxu0 0
  %162 = vmatprep.subr.bf16.mxu0 0
  %163 = vmatpush2.bf16.msra.mxu0 0
  %164 = vmatprep.subr.bf16.mxu0 0
  %165 = vmatpush2.bf16.msra.mxu0 0
  %166 = vmatprep.subr.bf16.mxu0 0
  %167 = vmatpush2.bf16.msra.mxu0 0
  %168 = vmatprep.subr.bf16.mxu0 0
  %169 = vmatpush2.bf16.msra.mxu0 0
  %170 = vmatprep.subr.bf16.mxu0 0
  %171 = vmatpush2.bf16.msra.mxu0 0
  %172 = vmatprep.subr.bf16.mxu0 0
  %173 = vmatpush2.bf16.msra.mxu0 0
  %174 = vmatprep.subr.bf16.mxu0 0
  %175 = vmatpush2.bf16.msra.mxu0 0
  %176 = vmatprep.mubr.bf16.mxu0 0
  %177 = vmatmul.mubr.bf16.gmra.mxu0 %v121
  %v178 = vpop.f32.mrf.mxu0
  %v179 = vadd.f32 %v53, %v178
  %v180 = vpop.f32.mrf.mxu0
  %v181 = vpop.f32.mrf.mxu0
  %v182 = vadd.f32 %v53, %v181
  %v183 = vpop.f32.mrf.mxu0
  %184 = vmatprep.mubr.bf16.mxu0 0
  %185 = vmatmul.mubr.bf16.gmra.mxu0 %v124
  %v186 = vpop.f32.mrf.mxu0
  %v187 = vadd.f32 %v53, %v186
  %v188 = vpop.f32.mrf.mxu0
  %v189 = vpop.f32.mrf.mxu0
  %v190 = vadd.f32 %v53, %v189
  %v191 = vpop.f32.mrf.mxu0
  %192 = vmatprep.mubr.bf16.mxu0 0
  %193 = vmatmul.mubr.bf16.gmra.mxu0 %v127
  %v194 = vpop.f32.mrf.mxu0
  %v195 = vadd.f32 %v53, %v194
  %v196 = vpop.f32.mrf.mxu0
  %v197 = vpop.f32.mrf.mxu0
  %v198 = vadd.f32 %v53, %v197
  %v199 = vpop.f32.mrf.mxu0
  %200 = vmatprep.mubr.bf16.mxu0 0
  %201 = vmatmul.mubr.bf16.gmra.mxu0 %v130
  %v202 = vpop.f32.mrf.mxu0
  %v203 = vadd.f32 %v53, %v202
  %v204 = vpop.f32.mrf.mxu0
  %v205 = vpop.f32.mrf.mxu0
  %v206 = vadd.f32 %v53, %v205
  %v207 = vpop.f32.mrf.mxu0
  %208 = vmatprep.mubr.bf16.mxu0 0
  %209 = vmatmul.mubr.bf16.gmra.mxu0 %v133
  %v210 = vpop.f32.mrf.mxu0
  %v211 = vadd.f32 %v53, %v210
  %v212 = vpop.f32.mrf.mxu0
  %v213 = vpop.f32.mrf.mxu0
  %v214 = vadd.f32 %v53, %v213
  %v215 = vpop.f32.mrf.mxu0
  %216 = vmatprep.mubr.bf16.mxu0 0
  %217 = vmatmul.mubr.bf16.gmra.mxu0 %v136
  %v218 = vpop.f32.mrf.mxu0
  %v219 = vadd.f32 %v53, %v218
  %v220 = vpop.f32.mrf.mxu0
  %v221 = vpop.f32.mrf.mxu0
  %v222 = vadd.f32 %v53, %v221
  %v223 = vpop.f32.mrf.mxu0
  %224 = vmatprep.mubr.bf16.mxu0 0
  %225 = vmatmul.mubr.bf16.gmra.mxu0 %v139
  %v226 = vpop.f32.mrf.mxu0
  %v227 = vadd.f32 %v53, %v226
  %v228 = vpop.f32.mrf.mxu0
  %v229 = vpop.f32.mrf.mxu0
  %v230 = vadd.f32 %v53, %v229
  %v231 = vpop.f32.mrf.mxu0
  %232 = vmatprep.mubr.bf16.mxu0 0
  %233 = vmatmul.mubr.bf16.gmra.mxu0 %v142
  %v234 = vpop.f32.mrf.mxu0
  %v235 = vadd.f32 %v53, %v234
  %v236 = vpop.f32.mrf.mxu0
  %v237 = vpop.f32.mrf.mxu0
  %v238 = vadd.f32 %v53, %v237
  %v239 = vpop.f32.mrf.mxu0
  %240 = vdwg.mxu0
  %241 = vadd.xlane.f32.xlu0 %v179
  %v242 = vpop.xlane.xlu0 %241
  %243 = vadd.xlane.f32.xlu0 %v182
  %v244 = vpop.xlane.xlu0 %243
  %245 = vadd.xlane.f32.xlu0 %v187
  %v246 = vpop.xlane.xlu0 %245
  %247 = vadd.xlane.f32.xlu0 %v190
  %v248 = vpop.xlane.xlu0 %247
  %249 = vadd.xlane.f32.xlu0 %v195
  %v250 = vpop.xlane.xlu0 %249
  %251 = vadd.xlane.f32.xlu0 %v198
  %v252 = vpop.xlane.xlu0 %251
  %253 = vadd.xlane.f32.xlu0 %v203
  %v254 = vpop.xlane.xlu0 %253
  %255 = vadd.xlane.f32.xlu0 %v206
  %v256 = vpop.xlane.xlu0 %255
  %257 = vadd.xlane.f32.xlu0 %v211
  %v258 = vpop.xlane.xlu0 %257
  %259 = vadd.xlane.f32.xlu0 %v214
  %v260 = vpop.xlane.xlu0 %259
  %261 = vadd.xlane.f32.xlu0 %v219
  %v262 = vpop.xlane.xlu0 %261
  %263 = vadd.xlane.f32.xlu0 %v222
  %v264 = vpop.xlane.xlu0 %263
  %265 = vadd.xlane.f32.xlu0 %v227
  %v266 = vpop.xlane.xlu0 %265
  %267 = vadd.xlane.f32.xlu0 %v230
  %v268 = vpop.xlane.xlu0 %267
  %269 = vadd.xlane.f32.xlu0 %v235
  %v270 = vpop.xlane.xlu0 %269
  %271 = vadd.xlane.f32.xlu0 %v238
  %v272 = vpop.xlane.xlu0 %271
  %v273 = vrcp.pop 128.0
  %v274 = vmul.f32 %v242, %v273
  %v275 = vmul.f32 %v244, %v273
  %v276 = vmul.f32 %v246, %v273
  %v277 = vmul.f32 %v248, %v273
  %v278 = vmul.f32 %v250, %v273
  %v279 = vmul.f32 %v252, %v273
  %v280 = vmul.f32 %v254, %v273
  %v281 = vmul.f32 %v256, %v273
  %v282 = vmul.f32 %v258, %v273
  %v283 = vmul.f32 %v260, %v273
  %v284 = vmul.f32 %v262, %v273
  %v285 = vmul.f32 %v264, %v273
  %v286 = vmul.f32 %v266, %v273
  %v287 = vmul.f32 %v268, %v273
  %v288 = vmul.f32 %v270, %v273
  %v289 = vmul.f32 %v272, %v273
  %v290 = vmul.f32 %v179, %v179
  %v291 = vmul.f32 %v182, %v182
  %v292 = vmul.f32 %v187, %v187
  %v293 = vmul.f32 %v190, %v190
  %v294 = vmul.f32 %v195, %v195
  %v295 = vmul.f32 %v198, %v198
  %v296 = vmul.f32 %v203, %v203
  %v297 = vmul.f32 %v206, %v206
  %v298 = vmul.f32 %v211, %v211
  %v299 = vmul.f32 %v214, %v214
  %v300 = vmul.f32 %v219, %v219
  %v301 = vmul.f32 %v222, %v222
  %v302 = vmul.f32 %v227, %v227
  %v303 = vmul.f32 %v230, %v230
  %v304 = vmul.f32 %v235, %v235
  %v305 = vmul.f32 %v238, %v238
  %306 = vadd.xlane.f32.xlu0 %v290
  %v307 = vpop.xlane.xlu0 %306
  %308 = vadd.xlane.f32.xlu0 %v291
  %v309 = vpop.xlane.xlu0 %308
  %310 = vadd.xlane.f32.xlu0 %v292
  %v311 = vpop.xlane.xlu0 %310
  %312 = vadd.xlane.f32.xlu0 %v293
  %v313 = vpop.xlane.xlu0 %312
  %314 = vadd.xlane.f32.xlu0 %v294
  %v315 = vpop.xlane.xlu0 %314
  %316 = vadd.xlane.f32.xlu0 %v295
  %v317 = vpop.xlane.xlu0 %316
  %318 = vadd.xlane.f32.xlu0 %v296
  %v319 = vpop.xlane.xlu0 %318
  %320 = vadd.xlane.f32.xlu0 %v297
  %v321 = vpop.xlane.xlu0 %320
  %322 = vadd.xlane.f32.xlu0 %v298
  %v323 = vpop.xlane.xlu0 %322
  %324 = vadd.xlane.f32.xlu0 %v299
  %v325 = vpop.xlane.xlu0 %324
  %326 = vadd.xlane.f32.xlu0 %v300
  %v327 = vpop.xlane.xlu0 %326
  %328 = vadd.xlane.f32.xlu0 %v301
  %v329 = vpop.xlane.xlu0 %328
  %330 = vadd.xlane.f32.xlu0 %v302
  %v331 = vpop.xlane.xlu0 %330
  %332 = vadd.xlane.f32.xlu0 %v303
  %v333 = vpop.xlane.xlu0 %332
  %334 = vadd.xlane.f32.xlu0 %v304
  %v335 = vpop.xlane.xlu0 %334
  %336 = vadd.xlane.f32.xlu0 %v305
  %v337 = vpop.xlane.xlu0 %336
  %v338 = vmul.f32 %v307, %v273
  %v339 = vmul.f32 %v309, %v273
  %v340 = vmul.f32 %v311, %v273
  %v341 = vmul.f32 %v313, %v273
  %v342 = vmul.f32 %v315, %v273
  %v343 = vmul.f32 %v317, %v273
  %v344 = vmul.f32 %v319, %v273
  %v345 = vmul.f32 %v321, %v273
  %v346 = vmul.f32 %v323, %v273
  %v347 = vmul.f32 %v325, %v273
  %v348 = vmul.f32 %v327, %v273
  %v349 = vmul.f32 %v329, %v273
  %v350 = vmul.f32 %v331, %v273
  %v351 = vmul.f32 %v333, %v273
  %v352 = vmul.f32 %v335, %v273
  %v353 = vmul.f32 %v337, %v273
  %v354 = vmul.f32 %v274, %v274
  %v355 = vmul.f32 %v275, %v275
  %v356 = vmul.f32 %v276, %v276
  %v357 = vmul.f32 %v277, %v277
  %v358 = vmul.f32 %v278, %v278
  %v359 = vmul.f32 %v279, %v279
  %v360 = vmul.f32 %v280, %v280
  %v361 = vmul.f32 %v281, %v281
  %v362 = vmul.f32 %v282, %v282
  %v363 = vmul.f32 %v283, %v283
  %v364 = vmul.f32 %v284, %v284
  %v365 = vmul.f32 %v285, %v285
  %v366 = vmul.f32 %v286, %v286
  %v367 = vmul.f32 %v287, %v287
  %v368 = vmul.f32 %v288, %v288
  %v369 = vmul.f32 %v289, %v289
  %v370 = vsub.f32 %v338, %v354
  %v371 = vsub.f32 %v339, %v355
  %v372 = vsub.f32 %v340, %v356
  %v373 = vsub.f32 %v341, %v357
  %v374 = vsub.f32 %v342, %v358
  %v375 = vsub.f32 %v343, %v359
  %v376 = vsub.f32 %v344, %v360
  %v377 = vsub.f32 %v345, %v361
  %v378 = vsub.f32 %v346, %v362
  %v379 = vsub.f32 %v347, %v363
  %v380 = vsub.f32 %v348, %v364
  %v381 = vsub.f32 %v349, %v365
  %v382 = vsub.f32 %v350, %v366
  %v383 = vsub.f32 %v351, %v367
  %v384 = vsub.f32 %v352, %v368
  %v385 = vsub.f32 %v353, %v369
  %v386 = vsub.f32 %v179, %v274
  %v387 = vsub.f32 %v182, %v275
  %v388 = vsub.f32 %v187, %v276
  %v389 = vsub.f32 %v190, %v277
  %v390 = vsub.f32 %v195, %v278
  %v391 = vsub.f32 %v198, %v279
  %v392 = vsub.f32 %v203, %v280
  %v393 = vsub.f32 %v206, %v281
  %v394 = vsub.f32 %v211, %v282
  %v395 = vsub.f32 %v214, %v283
  %v396 = vsub.f32 %v219, %v284
  %v397 = vsub.f32 %v222, %v285
  %v398 = vsub.f32 %v227, %v286
  %v399 = vsub.f32 %v230, %v287
  %v400 = vsub.f32 %v235, %v288
  %v401 = vsub.f32 %v238, %v289
  %v402 = vadd.f32 %v370, 1e-05
  %v403 = vadd.f32 %v371, 1e-05
  %v404 = vadd.f32 %v372, 1e-05
  %v405 = vadd.f32 %v373, 1e-05
  %v406 = vadd.f32 %v374, 1e-05
  %v407 = vadd.f32 %v375, 1e-05
  %v408 = vadd.f32 %v376, 1e-05
  %v409 = vadd.f32 %v377, 1e-05
  %v410 = vadd.f32 %v378, 1e-05
  %v411 = vadd.f32 %v379, 1e-05
  %v412 = vadd.f32 %v380, 1e-05
  %v413 = vadd.f32 %v381, 1e-05
  %v414 = vadd.f32 %v382, 1e-05
  %v415 = vadd.f32 %v383, 1e-05
  %v416 = vadd.f32 %v384, 1e-05
  %v417 = vadd.f32 %v385, 1e-05
  %v418 = vrsqrt.pop %v402
  %v419 = vrsqrt.pop %v403
  %v420 = vrsqrt.pop %v404
  %v421 = vrsqrt.pop %v405
  %v422 = vrsqrt.pop %v406
  %v423 = vrsqrt.pop %v407
  %v424 = vrsqrt.pop %v408
  %v425 = vrsqrt.pop %v409
  %v426 = vrsqrt.pop %v410
  %v427 = vrsqrt.pop %v411
  %v428 = vrsqrt.pop %v412
  %v429 = vrsqrt.pop %v413
  %v430 = vrsqrt.pop %v414
  %v431 = vrsqrt.pop %v415
  %v432 = vrsqrt.pop %v416
  %v433 = vrsqrt.pop %v417
  %v434 = vmul.f32 %v386, %v418
  %v435 = vmul.f32 %v387, %v419
  %v436 = vmul.f32 %v388, %v420
  %v437 = vmul.f32 %v389, %v421
  %v438 = vmul.f32 %v390, %v422
  %v439 = vmul.f32 %v391, %v423
  %v440 = vmul.f32 %v392, %v424
  %v441 = vmul.f32 %v393, %v425
  %v442 = vmul.f32 %v394, %v426
  %v443 = vmul.f32 %v395, %v427
  %v444 = vmul.f32 %v396, %v428
  %v445 = vmul.f32 %v397, %v429
  %v446 = vmul.f32 %v398, %v430
  %v447 = vmul.f32 %v399, %v431
  %v448 = vmul.f32 %v400, %v432
  %v449 = vmul.f32 %v401, %v433
  %v450 = vld [vmem:[%s3] sm:$0x1]
  %v452 = vlaneseq
  %v453 = vshrl.u32 %v452, 7
  %v454 = vsub.s32 0, %v453
  %v455 = vrot.slane %v450, %v454
  %v457 = vmul.f32 %v434, %v455
  %v458 = vmul.f32 %v435, %v455
  %v459 = vmul.f32 %v436, %v455
  %v460 = vmul.f32 %v437, %v455
  %v461 = vmul.f32 %v438, %v455
  %v462 = vmul.f32 %v439, %v455
  %v463 = vmul.f32 %v440, %v455
  %v464 = vmul.f32 %v441, %v455
  %v465 = vmul.f32 %v442, %v455
  %v466 = vmul.f32 %v443, %v455
  %v467 = vmul.f32 %v444, %v455
  %v468 = vmul.f32 %v445, %v455
  %v469 = vmul.f32 %v446, %v455
  %v470 = vmul.f32 %v447, %v455
  %v471 = vmul.f32 %v448, %v455
  %v472 = vmul.f32 %v449, %v455
  %v473 = vld [vmem:[%s4] sm:$0x1]
  %v475 = vlaneseq
  %v476 = vshrl.u32 %v475, 7
  %v477 = vsub.s32 0, %v476
  %v478 = vrot.slane %v473, %v477
  %v480 = vadd.f32 %v457, %v478
  %v481 = vadd.f32 %v458, %v478
  %v482 = vadd.f32 %v459, %v478
  %v483 = vadd.f32 %v460, %v478
  %v484 = vadd.f32 %v461, %v478
  %v485 = vadd.f32 %v462, %v478
  %v486 = vadd.f32 %v463, %v478
  %v487 = vadd.f32 %v464, %v478
  %v488 = vadd.f32 %v465, %v478
  %v489 = vadd.f32 %v466, %v478
  %v490 = vadd.f32 %v467, %v478
  %v491 = vadd.f32 %v468, %v478
  %v492 = vadd.f32 %v469, %v478
  %v493 = vadd.f32 %v470, %v478
  %v494 = vadd.f32 %v471, %v478
  %v495 = vadd.f32 %v472, %v478
  %v496 = vpack.c.bf16 %v481, %v480
  %v497 = vpack.c.bf16 %v483, %v482
  %v498 = vpack.c.bf16 %v485, %v484
  %v499 = vpack.c.bf16 %v487, %v486
  %v500 = vpack.c.bf16 %v489, %v488
  %v501 = vpack.c.bf16 %v491, %v490
  %v502 = vpack.c.bf16 %v493, %v492
  %v503 = vpack.c.bf16 %v495, %v494
  %v504 = vld [vmem:[%s5] sm:$0xf]
  %v505 = vld [vmem:[%s5 + $0x4] sm:$0xf]
  %v506 = vld [vmem:[%s5 + $0x8] sm:$0xf]
  %v507 = vld [vmem:[%s5 + $0xc] sm:$0xf]
  %v508 = vld [vmem:[%s5 + $0x10] sm:$0xf]
  %v509 = vld [vmem:[%s5 + $0x14] sm:$0xf]
  %v510 = vld [vmem:[%s5 + $0x18] sm:$0xf]
  %v511 = vld [vmem:[%s5 + $0x1c] sm:$0xf]
  %v512 = vld [vmem:[%s5 + $0x20] sm:$0xf]
  %v513 = vld [vmem:[%s5 + $0x24] sm:$0xf]
  %v514 = vld [vmem:[%s5 + $0x28] sm:$0xf]
  %v515 = vld [vmem:[%s5 + $0x2c] sm:$0xf]
  %v516 = vld [vmem:[%s5 + $0x30] sm:$0xf]
  %v517 = vld [vmem:[%s5 + $0x34] sm:$0xf]
  %v518 = vld [vmem:[%s5 + $0x38] sm:$0xf]
  %v519 = vld [vmem:[%s5 + $0x3c] sm:$0xf]
  %v536 = vunpack.c.l.b16 %v504
  %v537 = vunpack.c.l.b16 %v505
  %v538 = vunpack.c.l.b16 %v506
  %v539 = vunpack.c.l.b16 %v507
  %v540 = vunpack.c.l.b16 %v508
  %v541 = vunpack.c.l.b16 %v509
  %v542 = vunpack.c.l.b16 %v510
  %v543 = vunpack.c.l.b16 %v511
  %v544 = vunpack.c.l.b16 %v512
  %v545 = vunpack.c.l.b16 %v513
  %v546 = vunpack.c.l.b16 %v514
  %v547 = vunpack.c.l.b16 %v515
  %v548 = vunpack.c.l.b16 %v516
  %v549 = vunpack.c.l.b16 %v517
  %v550 = vunpack.c.l.b16 %v518
  %v551 = vunpack.c.l.b16 %v519
  %v552 = vpack.c.b16 %v537, %v536
  %v553 = vpack.c.b16 %v539, %v538
  %v554 = vpack.c.b16 %v541, %v540
  %v555 = vpack.c.b16 %v543, %v542
  %v556 = vpack.c.b16 %v545, %v544
  %v557 = vpack.c.b16 %v547, %v546
  %v558 = vpack.c.b16 %v549, %v548
  %v559 = vpack.c.b16 %v551, %v550
  %568 = vmatprep.subr.bf16.mxu0 0
  %569 = vmatpush1.bf16.msra.mxu0 %v559
  %570 = vmatprep.subr.bf16.mxu0 0
  %571 = vmatpush1.bf16.msra.mxu0 %v558
  %572 = vmatprep.subr.bf16.mxu0 0
  %573 = vmatpush1.bf16.msra.mxu0 %v557
  %574 = vmatprep.subr.bf16.mxu0 0
  %575 = vmatpush1.bf16.msra.mxu0 %v556
  %576 = vmatprep.subr.bf16.mxu0 0
  %577 = vmatpush1.bf16.msra.mxu0 %v555
  %578 = vmatprep.subr.bf16.mxu0 0
  %579 = vmatpush1.bf16.msra.mxu0 %v554
  %580 = vmatprep.subr.bf16.mxu0 0
  %581 = vmatpush1.bf16.msra.mxu0 %v553
  %582 = vmatprep.subr.bf16.mxu0 0
  %583 = vmatpush1.bf16.msra.mxu0 %v552
  %584 = vmatprep.subr.bf16.mxu0 0
  %585 = vmatpush2.bf16.msra.mxu0 0
  %586 = vmatprep.subr.bf16.mxu0 0
  %587 = vmatpush2.bf16.msra.mxu0 0
  %588 = vmatprep.subr.bf16.mxu0 0
  %589 = vmatpush2.bf16.msra.mxu0 0
  %590 = vmatprep.subr.bf16.mxu0 0
  %591 = vmatpush2.bf16.msra.mxu0 0
  %592 = vmatprep.subr.bf16.mxu0 0
  %593 = vmatpush2.bf16.msra.mxu0 0
  %594 = vmatprep.subr.bf16.mxu0 0
  %595 = vmatpush2.bf16.msra.mxu0 0
  %596 = vmatprep.subr.bf16.mxu0 0
  %597 = vmatpush2.bf16.msra.mxu0 0
  %598 = vmatprep.subr.bf16.mxu0 0
  %599 = vmatpush2.bf16.msra.mxu0 0
  %600 = vmatprep.mubr.bf16.mxu0 0
  %601 = vmatmul.mubr.bf16.gmra.mxu0 %v496
  %v602 = vpop.f32.mrf.mxu0
  %v603 = vadd.f32 0.0, %v602
  %v604 = vpop.f32.mrf.mxu0
  %v605 = vpop.f32.mrf.mxu0
  %v606 = vadd.f32 0.0, %v605
  %v607 = vpop.f32.mrf.mxu0
  %608 = vmatprep.mubr.bf16.mxu0 0
  %609 = vmatmul.mubr.bf16.gmra.mxu0 %v497
  %v610 = vpop.f32.mrf.mxu0
  %v611 = vadd.f32 0.0, %v610
  %v612 = vpop.f32.mrf.mxu0
  %v613 = vpop.f32.mrf.mxu0
  %v614 = vadd.f32 0.0, %v613
  %v615 = vpop.f32.mrf.mxu0
  %616 = vmatprep.mubr.bf16.mxu0 0
  %617 = vmatmul.mubr.bf16.gmra.mxu0 %v498
  %v618 = vpop.f32.mrf.mxu0
  %v619 = vadd.f32 0.0, %v618
  %v620 = vpop.f32.mrf.mxu0
  %v621 = vpop.f32.mrf.mxu0
  %v622 = vadd.f32 0.0, %v621
  %v623 = vpop.f32.mrf.mxu0
  %624 = vmatprep.mubr.bf16.mxu0 0
  %625 = vmatmul.mubr.bf16.gmra.mxu0 %v499
  %v626 = vpop.f32.mrf.mxu0
  %v627 = vadd.f32 0.0, %v626
  %v628 = vpop.f32.mrf.mxu0
  %v629 = vpop.f32.mrf.mxu0
  %v630 = vadd.f32 0.0, %v629
  %v631 = vpop.f32.mrf.mxu0
  %632 = vmatprep.mubr.bf16.mxu0 0
  %633 = vmatmul.mubr.bf16.gmra.mxu0 %v500
  %v634 = vpop.f32.mrf.mxu0
  %v635 = vadd.f32 0.0, %v634
  %v636 = vpop.f32.mrf.mxu0
  %v637 = vpop.f32.mrf.mxu0
  %v638 = vadd.f32 0.0, %v637
  %v639 = vpop.f32.mrf.mxu0
  %640 = vmatprep.mubr.bf16.mxu0 0
  %641 = vmatmul.mubr.bf16.gmra.mxu0 %v501
  %v642 = vpop.f32.mrf.mxu0
  %v643 = vadd.f32 0.0, %v642
  %v644 = vpop.f32.mrf.mxu0
  %v645 = vpop.f32.mrf.mxu0
  %v646 = vadd.f32 0.0, %v645
  %v647 = vpop.f32.mrf.mxu0
  %648 = vmatprep.mubr.bf16.mxu0 0
  %649 = vmatmul.mubr.bf16.gmra.mxu0 %v502
  %v650 = vpop.f32.mrf.mxu0
  %v651 = vadd.f32 0.0, %v650
  %v652 = vpop.f32.mrf.mxu0
  %v653 = vpop.f32.mrf.mxu0
  %v654 = vadd.f32 0.0, %v653
  %v655 = vpop.f32.mrf.mxu0
  %656 = vmatprep.mubr.bf16.mxu0 0
  %657 = vmatmul.mubr.bf16.gmra.mxu0 %v503
  %v658 = vpop.f32.mrf.mxu0
  %v659 = vadd.f32 0.0, %v658
  %v660 = vpop.f32.mrf.mxu0
  %v661 = vpop.f32.mrf.mxu0
  %v662 = vadd.f32 0.0, %v661
  %v663 = vpop.f32.mrf.mxu0
  %664 = vdwg.mxu0
  %665 = vst.msk [vmem:[%s6] sm:$0xff] %vm119, %v603
  %666 = vst.msk [vmem:[%s6 + $0x8] sm:$0xff] %vm119, %v606
  %667 = vst.msk [vmem:[%s6 + $0x10] sm:$0xff] %vm119, %v611
  %668 = vst.msk [vmem:[%s6 + $0x18] sm:$0xff] %vm119, %v614
  %669 = vst.msk [vmem:[%s6 + $0x20] sm:$0xff] %vm119, %v619
  %670 = vst.msk [vmem:[%s6 + $0x28] sm:$0xff] %vm119, %v622
  %671 = vst.msk [vmem:[%s6 + $0x30] sm:$0xff] %vm119, %v627
  %672 = vst.msk [vmem:[%s6 + $0x38] sm:$0xff] %vm119, %v630
  %673 = vst.msk [vmem:[%s6 + $0x40] sm:$0xff] %vm119, %v635
  %674 = vst.msk [vmem:[%s6 + $0x48] sm:$0xff] %vm119, %v638
  %675 = vst.msk [vmem:[%s6 + $0x50] sm:$0xff] %vm119, %v643
  %676 = vst.msk [vmem:[%s6 + $0x58] sm:$0xff] %vm119, %v646
  %677 = vst.msk [vmem:[%s6 + $0x60] sm:$0xff] %vm119, %v651
  %678 = vst.msk [vmem:[%s6 + $0x68] sm:$0xff] %vm119, %v654
  %679 = vst.msk [vmem:[%s6 + $0x70] sm:$0xff] %vm119, %v659
  %680 = vst.msk [vmem:[%s6 + $0x78] sm:$0xff] %vm119, %v662
  // Predicated region
  $region26: #{unet_forward.5} parent=0 // pred_check
    _
  $region27: #{unet_forward.5} parent=0 // pred_check_branch
    %682 = sbr.rel (0) target = $region29
  $region28: #{unet_forward.5} parent=0 // pred_region
    _
  $region29: #{unet_forward.5} parent=0 // pred_fallthru
    _
  // Predicated region
  $region30: #{unet_forward.5} parent=0 // pred_check
    _
  $region31: #{unet_forward.5} parent=0 // pred_check_branch
    %684 = sbr.rel (0) target = $region33
  $region32: #{unet_forward.5} parent=0 // pred_region
    _
  $region33: #{unet_forward.5} parent=0 // pred_fallthru
    _

// kernel: unet_forward.6
$region0: #{unet_forward.6}
  #allocation0 [shape = 'u32[]', space=smem, size = 0x4, offset = 0x4, fixed_abs, tag = 'smem constant byte address 0x4 - core index']
  #allocation1 [shape = 'u32[144,128]{1,0:T(1,128)}', space=vmem, size = 0x12000, scoped, tag = 'internal scratch']
  %s0 = inlined_call_operand.vmem [shape: f32[32,256], index: 0, kind: input, shape index: {}]
  %s1 = inlined_call_operand.vmem [shape: f32[1,256], index: 1, kind: input, shape index: {}]
  %s2 = inlined_call_operand.vmem [shape: f32[1,256], index: 2, kind: input, shape index: {}]
  %s3 = inlined_call_operand.vmem [shape: bf16[256,128], index: 3, kind: input, shape index: {}]
  %s4 = inlined_call_operand.vmem [shape: f32[32,128], index: 4, kind: output, shape index: {}]
  %s5 = sld [smem:[#allocation0]]
  $region26: #{unet_forward.6} parent=0
    _
  %s7 = ssub.s32 1, %s5
  %s8 = scalar_select 0, %s7, %s5
  // Predicated region
  $region2: #{unet_forward.6} parent=0 // pred_check
    _
  $region3: #{unet_forward.6} parent=0 // pred_check_branch
    %10 = sbr.rel (0) target = $region5
  $region4: #{unet_forward.6} parent=0 // pred_region
    _
  $region5: #{unet_forward.6} parent=0 // pred_fallthru
    _
  // Predicated region
  $region6: #{unet_forward.6} parent=0 // pred_check
    _
  $region7: #{unet_forward.6} parent=0 // pred_check_branch
    %12 = sbr.rel (0) target = $region9
  $region8: #{unet_forward.6} parent=0 // pred_region
    _
  $region9: #{unet_forward.6} parent=0 // pred_fallthru
    _
  // Predicated region
  $region10: #{unet_forward.6} parent=0 // pred_check
    _
  $region11: #{unet_forward.6} parent=0 // pred_check_branch
    %14 = sbr.rel (0) target = $region13
  $region12: #{unet_forward.6} parent=0 // pred_region
    _
  $region13: #{unet_forward.6} parent=0 // pred_fallthru
    _
  // Predicated region
  $region14: #{unet_forward.6} parent=0 // pred_check
    _
  $region15: #{unet_forward.6} parent=0 // pred_check_branch
    %16 = sbr.rel (0) target = $region17
  $region16: #{unet_forward.6} parent=0 // pred_region
    _
  $region17: #{unet_forward.6} parent=0 // pred_fallthru
    _
  %v18 = vld [vmem:[%s0] sm:$0xff]
  %v19 = vld [vmem:[%s0 + $0x8] sm:$0xff]
  %v20 = vld [vmem:[%s0 + $0x10] sm:$0xff]
  %v21 = vld [vmem:[%s0 + $0x18] sm:$0xff]
  %v22 = vld [vmem:[%s0 + $0x20] sm:$0xff]
  %v23 = vld [vmem:[%s0 + $0x28] sm:$0xff]
  %v24 = vld [vmem:[%s0 + $0x30] sm:$0xff]
  %v25 = vld [vmem:[%s0 + $0x38] sm:$0xff]
  %v26 = vadd.f32 %v18, %v19
  %27 = vadd.xlane.f32.xlu0 %v26
  %v28 = vpop.xlane.xlu0 %27
  %v29 = vadd.f32 %v20, %v21
  %30 = vadd.xlane.f32.xlu0 %v29
  %v31 = vpop.xlane.xlu0 %30
  %v32 = vadd.f32 %v22, %v23
  %33 = vadd.xlane.f32.xlu0 %v32
  %v34 = vpop.xlane.xlu0 %33
  %v35 = vadd.f32 %v24, %v25
  %36 = vadd.xlane.f32.xlu0 %v35
  %v37 = vpop.xlane.xlu0 %36
  %v38 = vrcp.pop 256.0
  %v39 = vmul.f32 %v28, %v38
  %v40 = vmul.f32 %v31, %v38
  %v41 = vmul.f32 %v34, %v38
  %v42 = vmul.f32 %v37, %v38
  %v43 = vmul.f32 %v18, %v18
  %v44 = vmul.f32 %v19, %v19
  %v45 = vmul.f32 %v20, %v20
  %v46 = vmul.f32 %v21, %v21
  %v47 = vmul.f32 %v22, %v22
  %v48 = vmul.f32 %v23, %v23
  %v49 = vmul.f32 %v24, %v24
  %v50 = vmul.f32 %v25, %v25
  %v51 = vadd.f32 %v43, %v44
  %52 = vadd.xlane.f32.xlu0 %v51
  %v53 = vpop.xlane.xlu0 %52
  %v54 = vadd.f32 %v45, %v46
  %55 = vadd.xlane.f32.xlu0 %v54
  %v56 = vpop.xlane.xlu0 %55
  %v57 = vadd.f32 %v47, %v48
  %58 = vadd.xlane.f32.xlu0 %v57
  %v59 = vpop.xlane.xlu0 %58
  %v60 = vadd.f32 %v49, %v50
  %61 = vadd.xlane.f32.xlu0 %v60
  %v62 = vpop.xlane.xlu0 %61
  %v63 = vmul.f32 %v53, %v38
  %v64 = vmul.f32 %v56, %v38
  %v65 = vmul.f32 %v59, %v38
  %v66 = vmul.f32 %v62, %v38
  %v67 = vmul.f32 %v39, %v39
  %v68 = vmul.f32 %v40, %v40
  %v69 = vmul.f32 %v41, %v41
  %v70 = vmul.f32 %v42, %v42
  %v71 = vsub.f32 %v63, %v67
  %v72 = vsub.f32 %v64, %v68
  %v73 = vsub.f32 %v65, %v69
  %v74 = vsub.f32 %v66, %v70
  %v75 = vsub.f32 %v18, %v39
  %v76 = vsub.f32 %v19, %v39
  %v77 = vsub.f32 %v20, %v40
  %v78 = vsub.f32 %v21, %v40
  %v79 = vsub.f32 %v22, %v41
  %v80 = vsub.f32 %v23, %v41
  %v81 = vsub.f32 %v24, %v42
  %v82 = vsub.f32 %v25, %v42
  %v83 = vadd.f32 %v71, 1e-05
  %v84 = vadd.f32 %v72, 1e-05
  %v85 = vadd.f32 %v73, 1e-05
  %v86 = vadd.f32 %v74, 1e-05
  %v87 = vrsqrt.pop %v83
  %v88 = vrsqrt.pop %v84
  %v89 = vrsqrt.pop %v85
  %v90 = vrsqrt.pop %v86
  %v91 = vmul.f32 %v75, %v87
  %v92 = vmul.f32 %v76, %v87
  %v93 = vmul.f32 %v77, %v88
  %v94 = vmul.f32 %v78, %v88
  %v95 = vmul.f32 %v79, %v89
  %v96 = vmul.f32 %v80, %v89
  %v97 = vmul.f32 %v81, %v90
  %v98 = vmul.f32 %v82, %v90
  %v99 = vld [vmem:[%s1] sm:$0x3]
  %v101 = vlaneseq
  %v102 = vshrl.u32 %v101, 7
  %v103 = vsub.s32 0, %v102
  %v104 = vrot.slane %v99, %v103
  %v105 = vlaneseq
  %v106 = vshrl.u32 %v105, 7
  %v107 = vsub.s32 1, %v106
  %v108 = vrot.slane %v99, %v107
  %v111 = vmul.f32 %v91, %v104
  %v112 = vmul.f32 %v92, %v108
  %v113 = vmul.f32 %v93, %v104
  %v114 = vmul.f32 %v94, %v108
  %v115 = vmul.f32 %v95, %v104
  %v116 = vmul.f32 %v96, %v108
  %v117 = vmul.f32 %v97, %v104
  %v118 = vmul.f32 %v98, %v108
  %v119 = vld [vmem:[%s2] sm:$0x3]
  %v121 = vlaneseq
  %v122 = vshrl.u32 %v121, 7
  %v123 = vsub.s32 0, %v122
  %v124 = vrot.slane %v119, %v123
  %v125 = vlaneseq
  %v126 = vshrl.u32 %v125, 7
  %v127 = vsub.s32 1, %v126
  %v128 = vrot.slane %v119, %v127
  %v131 = vadd.f32 %v111, %v124
  %v132 = vadd.f32 %v112, %v128
  %v133 = vadd.f32 %v113, %v124
  %v134 = vadd.f32 %v114, %v128
  %v135 = vadd.f32 %v115, %v124
  %v136 = vadd.f32 %v116, %v128
  %v137 = vadd.f32 %v117, %v124
  %v138 = vadd.f32 %v118, %v128
  %v139 = vpack.c.bf16 %v133, %v131
  %v140 = vpack.c.bf16 %v134, %v132
  %v141 = vpack.c.bf16 %v137, %v135
  %v142 = vpack.c.bf16 %v138, %v136
  %v143 = vld [vmem:[%s3] sm:$0xf]
  %v144 = vld [vmem:[%s3 + $0x4] sm:$0xf]
  %v145 = vld [vmem:[%s3 + $0x8] sm:$0xf]
  %v146 = vld [vmem:[%s3 + $0xc] sm:$0xf]
  %v147 = vld [vmem:[%s3 + $0x10] sm:$0xf]
  %v148 = vld [vmem:[%s3 + $0x14] sm:$0xf]
  %v149 = vld [vmem:[%s3 + $0x18] sm:$0xf]
  %v150 = vld [vmem:[%s3 + $0x1c] sm:$0xf]
  %v151 = vld [vmem:[%s3 + $0x20] sm:$0xf]
  %v152 = vld [vmem:[%s3 + $0x24] sm:$0xf]
  %v153 = vld [vmem:[%s3 + $0x28] sm:$0xf]
  %v154 = vld [vmem:[%s3 + $0x2c] sm:$0xf]
  %v155 = vld [vmem:[%s3 + $0x30] sm:$0xf]
  %v156 = vld [vmem:[%s3 + $0x34] sm:$0xf]
  %v157 = vld [vmem:[%s3 + $0x38] sm:$0xf]
  %v158 = vld [vmem:[%s3 + $0x3c] sm:$0xf]
  %v159 = vld [vmem:[%s3 + $0x40] sm:$0xf]
  %v160 = vld [vmem:[%s3 + $0x44] sm:$0xf]
  %v161 = vld [vmem:[%s3 + $0x48] sm:$0xf]
  %v162 = vld [vmem:[%s3 + $0x4c] sm:$0xf]
  %v163 = vld [vmem:[%s3 + $0x50] sm:$0xf]
  %v164 = vld [vmem:[%s3 + $0x54] sm:$0xf]
  %v165 = vld [vmem:[%s3 + $0x58] sm:$0xf]
  %v166 = vld [vmem:[%s3 + $0x5c] sm:$0xf]
  %v167 = vld [vmem:[%s3 + $0x60] sm:$0xf]
  %v168 = vld [vmem:[%s3 + $0x64] sm:$0xf]
  %v169 = vld [vmem:[%s3 + $0x68] sm:$0xf]
  %v170 = vld [vmem:[%s3 + $0x6c] sm:$0xf]
  %v171 = vld [vmem:[%s3 + $0x70] sm:$0xf]
  %v172 = vld [vmem:[%s3 + $0x74] sm:$0xf]
  %v173 = vld [vmem:[%s3 + $0x78] sm:$0xf]
  %v174 = vld [vmem:[%s3 + $0x7c] sm:$0xf]
  %v207 = vunpack.c.l.b16 %v143
  %v208 = vunpack.c.l.b16 %v144
  %v209 = vunpack.c.l.b16 %v145
  %v210 = vunpack.c.l.b16 %v146
  %v211 = vunpack.c.l.b16 %v147
  %v212 = vunpack.c.l.b16 %v148
  %v213 = vunpack.c.l.b16 %v149
  %v214 = vunpack.c.l.b16 %v150
  %v215 = vunpack.c.l.b16 %v151
  %v216 = vunpack.c.l.b16 %v152
  %v217 = vunpack.c.l.b16 %v153
  %v218 = vunpack.c.l.b16 %v154
  %v219 = vunpack.c.l.b16 %v155
  %v220 = vunpack.c.l.b16 %v156
  %v221 = vunpack.c.l.b16 %v157
  %v222 = vunpack.c.l.b16 %v158
  %v223 = vunpack.c.l.b16 %v159
  %v224 = vunpack.c.l.b16 %v160
  %v225 = vunpack.c.l.b16 %v161
  %v226 = vunpack.c.l.b16 %v162
  %v227 = vunpack.c.l.b16 %v163
  %v228 = vunpack.c.l.b16 %v164
  %v229 = vunpack.c.l.b16 %v165
  %v230 = vunpack.c.l.b16 %v166
  %v231 = vunpack.c.l.b16 %v167
  %v232 = vunpack.c.l.b16 %v168
  %v233 = vunpack.c.l.b16 %v169
  %v234 = vunpack.c.l.b16 %v170
  %v235 = vunpack.c.l.b16 %v171
  %v236 = vunpack.c.l.b16 %v172
  %v237 = vunpack.c.l.b16 %v173
  %v238 = vunpack.c.l.b16 %v174
  %v239 = vpack.c.b16 %v208, %v207
  %v240 = vpack.c.b16 %v210, %v209
  %v241 = vpack.c.b16 %v212, %v211
  %v242 = vpack.c.b16 %v214, %v213
  %v243 = vpack.c.b16 %v216, %v215
  %v244 = vpack.c.b16 %v218, %v217
  %v245 = vpack.c.b16 %v220, %v219
  %v246 = vpack.c.b16 %v222, %v221
  %v247 = vpack.c.b16 %v224, %v223
  %v248 = vpack.c.b16 %v226, %v225
  %v249 = vpack.c.b16 %v228, %v227
  %v250 = vpack.c.b16 %v230, %v229
  %v251 = vpack.c.b16 %v232, %v231
  %v252 = vpack.c.b16 %v234, %v233
  %v253 = vpack.c.b16 %v236, %v235
  %v254 = vpack.c.b16 %v238, %v237
  %271 = vmatprep.subr.bf16.mxu0 0
  %272 = vmatpush1.bf16.msra.mxu0 %v246
  %273 = vmatprep.subr.bf16.mxu0 0
  %274 = vmatpush1.bf16.msra.mxu0 %v245
  %275 = vmatprep.subr.bf16.mxu0 0
  %276 = vmatpush1.bf16.msra.mxu0 %v244
  %277 = vmatprep.subr.bf16.mxu0 0
  %278 = vmatpush1.bf16.msra.mxu0 %v243
  %279 = vmatprep.subr.bf16.mxu0 0
  %280 = vmatpush1.bf16.msra.mxu0 %v242
  %281 = vmatprep.subr.bf16.mxu0 0
  %282 = vmatpush1.bf16.msra.mxu0 %v241
  %283 = vmatprep.subr.bf16.mxu0 0
  %284 = vmatpush1.bf16.msra.mxu0 %v240
  %285 = vmatprep.subr.bf16.mxu0 0
  %286 = vmatpush1.bf16.msra.mxu0 %v239
  %287 = vmatprep.subr.bf16.mxu0 0
  %288 = vmatpush2.bf16.msra.mxu0 %v254
  %289 = vmatprep.subr.bf16.mxu0 0
  %290 = vmatpush2.bf16.msra.mxu0 %v253
  %291 = vmatprep.subr.bf16.mxu0 0
  %292 = vmatpush2.bf16.msra.mxu0 %v252
  %293 = vmatprep.subr.bf16.mxu0 0
  %294 = vmatpush2.bf16.msra.mxu0 %v251
  %295 = vmatprep.subr.bf16.mxu0 0
  %296 = vmatpush2.bf16.msra.mxu0 %v250
  %297 = vmatprep.subr.bf16.mxu0 0
  %298 = vmatpush2.bf16.msra.mxu0 %v249
  %299 = vmatprep.subr.bf16.mxu0 0
  %300 = vmatpush2.bf16.msra.mxu0 %v248
  %301 = vmatprep.subr.bf16.mxu0 0
  %302 = vmatpush2.bf16.msra.mxu0 %v247
  %303 = vmatprep.mubr.bf16.mxu0 %v140
  %304 = vmatmul.mubr.bf16.gmra.mxu0 %v139
  %v305 = vpop.f32.mrf.mxu0
  %v306 = vadd.f32 0.0, %v305
  %v307 = vpop.f32.mrf.mxu0
  %v308 = vpop.f32.mrf.mxu0
  %v309 = vadd.f32 0.0, %v308
  %v310 = vpop.f32.mrf.mxu0
  %311 = vmatprep.mubr.bf16.mxu0 %v142
  %312 = vmatmul.mubr.bf16.gmra.mxu0 %v141
  %v313 = vpop.f32.mrf.mxu0
  %v314 = vadd.f32 0.0, %v313
  %v315 = vpop.f32.mrf.mxu0
  %v316 = vpop.f32.mrf.mxu0
  %v317 = vadd.f32 0.0, %v316
  %v318 = vpop.f32.mrf.mxu0
  %319 = vdwg.mxu0
  %320 = vst [vmem:[%s4] sm:$0xff] %v306
  %321 = vst [vmem:[%s4 + $0x8] sm:$0xff] %v309
  %322 = vst [vmem:[%s4 + $0x10] sm:$0xff] %v314
  %323 = vst [vmem:[%s4 + $0x18] sm:$0xff] %v317
  // Predicated region
  $region18: #{unet_forward.6} parent=0 // pred_check
    _
  $region19: #{unet_forward.6} parent=0 // pred_check_branch
    %325 = sbr.rel (0) target = $region21
  $region20: #{unet_forward.6} parent=0 // pred_region
    _
  $region21: #{unet_forward.6} parent=0 // pred_fallthru
    _
  // Predicated region
  $region22: #{unet_forward.6} parent=0 // pred_check
    _
  $region23: #{unet_forward.6} parent=0 // pred_check_branch
    %327 = sbr.rel (0) target = $region25
  $region24: #{unet_forward.6} parent=0 // pred_region
    _
  $region25: #{unet_forward.6} parent=0 // pred_fallthru
    _

// kernel: unet_forward.7
$region0: #{unet_forward.7}
  #allocation0 [shape = 'u32[]', space=smem, size = 0x4, offset = 0x4, fixed_abs, tag = 'smem constant byte address 0x4 - core index']
  #allocation1 [shape = 'u32[144,128]{1,0:T(1,128)}', space=vmem, size = 0x12000, scoped, tag = 'internal scratch']
  %s0 = inlined_call_operand.vmem [shape: f32[8,512], index: 0, kind: input, shape index: {}]
  %s1 = inlined_call_operand.vmem [shape: f32[1,512], index: 1, kind: input, shape index: {}]
  %s2 = inlined_call_operand.vmem [shape: f32[1,512], index: 2, kind: input, shape index: {}]
  %s3 = inlined_call_operand.vmem [shape: bf16[512,256], index: 3, kind: input, shape index: {}]
  %s4 = inlined_call_operand.vmem [shape: f32[8,256], index: 4, kind: output, shape index: {}]
  %s5 = sld [smem:[#allocation0]]
  $region26: #{unet_forward.7} parent=0
    _
  %s7 = ssub.s32 1, %s5
  %s8 = scalar_select 0, %s7, %s5
  // Predicated region
  $region2: #{unet_forward.7} parent=0 // pred_check
    _
  $region3: #{unet_forward.7} parent=0 // pred_check_branch
    %10 = sbr.rel (0) target = $region5
  $region4: #{unet_forward.7} parent=0 // pred_region
    _
  $region5: #{unet_forward.7} parent=0 // pred_fallthru
    _
  // Predicated region
  $region6: #{unet_forward.7} parent=0 // pred_check
    _
  $region7: #{unet_forward.7} parent=0 // pred_check_branch
    %12 = sbr.rel (0) target = $region9
  $region8: #{unet_forward.7} parent=0 // pred_region
    _
  $region9: #{unet_forward.7} parent=0 // pred_fallthru
    _
  // Predicated region
  $region10: #{unet_forward.7} parent=0 // pred_check
    _
  $region11: #{unet_forward.7} parent=0 // pred_check_branch
    %14 = sbr.rel (0) target = $region13
  $region12: #{unet_forward.7} parent=0 // pred_region
    _
  $region13: #{unet_forward.7} parent=0 // pred_fallthru
    _
  // Predicated region
  $region14: #{unet_forward.7} parent=0 // pred_check
    _
  $region15: #{unet_forward.7} parent=0 // pred_check_branch
    %16 = sbr.rel (0) target = $region17
  $region16: #{unet_forward.7} parent=0 // pred_region
    _
  $region17: #{unet_forward.7} parent=0 // pred_fallthru
    _
  %v17 = vld [vmem:[%s0] sm:$0xff]
  %v18 = vld [vmem:[%s0 + $0x8] sm:$0xff]
  %v19 = vld [vmem:[%s0 + $0x10] sm:$0xff]
  %v20 = vld [vmem:[%s0 + $0x18] sm:$0xff]
  %v21 = vadd.f32 %v17, %v18
  %v22 = vadd.f32 %v21, %v19
  %v23 = vadd.f32 %v22, %v20
  %24 = vadd.xlane.f32.xlu0 %v23
  %v25 = vpop.xlane.xlu0 %24
  %v26 = vrcp.pop 512.0
  %v27 = vmul.f32 %v25, %v26
  %v28 = vmul.f32 %v17, %v17
  %v29 = vmul.f32 %v18, %v18
  %v30 = vmul.f32 %v19, %v19
  %v31 = vmul.f32 %v20, %v20
  %v32 = vadd.f32 %v28, %v29
  %v33 = vadd.f32 %v32, %v30
  %v34 = vadd.f32 %v33, %v31
  %35 = vadd.xlane.f32.xlu0 %v34
  %v36 = vpop.xlane.xlu0 %35
  %v37 = vmul.f32 %v36, %v26
  %v38 = vmul.f32 %v27, %v27
  %v39 = vsub.f32 %v37, %v38
  %v40 = vsub.f32 %v17, %v27
  %v41 = vsub.f32 %v18, %v27
  %v42 = vsub.f32 %v19, %v27
  %v43 = vsub.f32 %v20, %v27
  %v44 = vadd.f32 %v39, 1e-05
  %v45 = vrsqrt.pop %v44
  %v46 = vmul.f32 %v40, %v45
  %v47 = vmul.f32 %v41, %v45
  %v48 = vmul.f32 %v42, %v45
  %v49 = vmul.f32 %v43, %v45
  %v50 = vld [vmem:[%s1] sm:$0xf]
  %v52 = vlaneseq
  %v53 = vshrl.u32 %v52, 7
  %v54 = vsub.s32 0, %v53
  %v55 = vrot.slane %v50, %v54
  %v56 = vlaneseq
  %v57 = vshrl.u32 %v56, 7
  %v58 = vsub.s32 1, %v57
  %v59 = vrot.slane %v50, %v58
  %v60 = vlaneseq
  %v61 = vshrl.u32 %v60, 7
  %v62 = vsub.s32 2, %v61
  %v63 = vrot.slane %v50, %v62
  %v64 = vlaneseq
  %v65 = vshrl.u32 %v64, 7
  %v66 = vsub.s32 3, %v65
  %v67 = vrot.slane %v50, %v66
  %v72 = vmul.f32 %v46, %v55
  %v73 = vmul.f32 %v47, %v59
  %v74 = vmul.f32 %v48, %v63
  %v75 = vmul.f32 %v49, %v67
  %v76 = vld [vmem:[%s2] sm:$0xf]
  %v78 = vlaneseq
  %v79 = vshrl.u32 %v78, 7
  %v80 = vsub.s32 0, %v79
  %v81 = vrot.slane %v76, %v80
  %v82 = vlaneseq
  %v83 = vshrl.u32 %v82, 7
  %v84 = vsub.s32 1, %v83
  %v85 = vrot.slane %v76, %v84
  %v86 = vlaneseq
  %v87 = vshrl.u32 %v86, 7
  %v88 = vsub.s32 2, %v87
  %v89 = vrot.slane %v76, %v88
  %v90 = vlaneseq
  %v91 = vshrl.u32 %v90, 7
  %v92 = vsub.s32 3, %v91
  %v93 = vrot.slane %v76, %v92
  %v98 = vadd.f32 %v72, %v81
  %v99 = vadd.f32 %v73, %v85
  %v100 = vadd.f32 %v74, %v89
  %v101 = vadd.f32 %v75, %v93
  %v102 = vpack.c.bf16 %v98, %v98
  %v103 = vpack.c.bf16 %v99, %v99
  %v104 = vpack.c.bf16 %v100, %v100
  %v105 = vpack.c.bf16 %v101, %v101
  %v106 = vld [vmem:[%s3] sm:$0xff]
  %v107 = vld [vmem:[%s3 + $0x8] sm:$0xff]
  %v108 = vld [vmem:[%s3 + $0x10] sm:$0xff]
  %v109 = vld [vmem:[%s3 + $0x18] sm:$0xff]
  %v110 = vld [vmem:[%s3 + $0x20] sm:$0xff]
  %v111 = vld [vmem:[%s3 + $0x28] sm:$0xff]
  %v112 = vld [vmem:[%s3 + $0x30] sm:$0xff]
  %v113 = vld [vmem:[%s3 + $0x38] sm:$0xff]
  %v114 = vld [vmem:[%s3 + $0x40] sm:$0xff]
  %v115 = vld [vmem:[%s3 + $0x48] sm:$0xff]
  %v116 = vld [vmem:[%s3 + $0x50] sm:$0xff]
  %v117 = vld [vmem:[%s3 + $0x58] sm:$0xff]
  %v118 = vld [vmem:[%s3 + $0x60] sm:$0xff]
  %v119 = vld [vmem:[%s3 + $0x68] sm:$0xff]
  %v120 = vld [vmem:[%s3 + $0x70] sm:$0xff]
  %v121 = vld [vmem:[%s3 + $0x78] sm:$0xff]
  %v122 = vld [vmem:[%s3 + $0x80] sm:$0xff]
  %v123 = vld [vmem:[%s3 + $0x88] sm:$0xff]
  %v124 = vld [vmem:[%s3 + $0x90] sm:$0xff]
  %v125 = vld [vmem:[%s3 + $0x98] sm:$0xff]
  %v126 = vld [vmem:[%s3 + $0xa0] sm:$0xff]
  %v127 = vld [vmem:[%s3 + $0xa8] sm:$0xff]
  %v128 = vld [vmem:[%s3 + $0xb0] sm:$0xff]
  %v129 = vld [vmem:[%s3 + $0xb8] sm:$0xff]
  %v130 = vld [vmem:[%s3 + $0xc0] sm:$0xff]
  %v131 = vld [vmem:[%s3 + $0xc8] sm:$0xff]
  %v132 = vld [vmem:[%s3 + $0xd0] sm:$0xff]
  %v133 = vld [vmem:[%s3 + $0xd8] sm:$0xff]
  %v134 = vld [vmem:[%s3 + $0xe0] sm:$0xff]
  %v135 = vld [vmem:[%s3 + $0xe8] sm:$0xff]
  %v136 = vld [vmem:[%s3 + $0xf0] sm:$0xff]
  %v137 = vld [vmem:[%s3 + $0xf8] sm:$0xff]
  %v138 = vld [vmem:[%s3 + $0x100] sm:$0xff]
  %v139 = vld [vmem:[%s3 + $0x108] sm:$0xff]
  %v140 = vld [vmem:[%s3 + $0x110] sm:$0xff]
  %v141 = vld [vmem:[%s3 + $0x118] sm:$0xff]
  %v142 = vld [vmem:[%s3 + $0x120] sm:$0xff]
  %v143 = vld [vmem:[%s3 + $0x128] sm:$0xff]
  %v144 = vld [vmem:[%s3 + $0x130] sm:$0xff]
  %v145 = vld [vmem:[%s3 + $0x138] sm:$0xff]
  %v146 = vld [vmem:[%s3 + $0x140] sm:$0xff]
  %v147 = vld [vmem:[%s3 + $0x148] sm:$0xff]
  %v148 = vld [vmem:[%s3 + $0x150] sm:$0xff]
  %v149 = vld [vmem:[%s3 + $0x158] sm:$0xff]
  %v150 = vld [vmem:[%s3 + $0x160] sm:$0xff]
  %v151 = vld [vmem:[%s3 + $0x168] sm:$0xff]
  %v152 = vld [vmem:[%s3 + $0x170] sm:$0xff]
  %v153 = vld [vmem:[%s3 + $0x178] sm:$0xff]
  %v154 = vld [vmem:[%s3 + $0x180] sm:$0xff]
  %v155 = vld [vmem:[%s3 + $0x188] sm:$0xff]
  %v156 = vld [vmem:[%s3 + $0x190] sm:$0xff]
  %v157 = vld [vmem:[%s3 + $0x198] sm:$0xff]
  %v158 = vld [vmem:[%s3 + $0x1a0] sm:$0xff]
  %v159 = vld [vmem:[%s3 + $0x1a8] sm:$0xff]
  %v160 = vld [vmem:[%s3 + $0x1b0] sm:$0xff]
  %v161 = vld [vmem:[%s3 + $0x1b8] sm:$0xff]
  %v162 = vld [vmem:[%s3 + $0x1c0] sm:$0xff]
  %v163 = vld [vmem:[%s3 + $0x1c8] sm:$0xff]
  %v164 = vld [vmem:[%s3 + $0x1d0] sm:$0xff]
  %v165 = vld [vmem:[%s3 + $0x1d8] sm:$0xff]
  %v166 = vld [vmem:[%s3 + $0x1e0] sm:$0xff]
  %v167 = vld [vmem:[%s3 + $0x1e8] sm:$0xff]
  %v168 = vld [vmem:[%s3 + $0x1f0] sm:$0xff]
  %v169 = vld [vmem:[%s3 + $0x1f8] sm:$0xff]
  %v234 = vunpack.c.l.b16 %v106
  %v235 = vunpack.c.h.b16 %v106
  %v236 = vunpack.c.l.b16 %v107
  %v237 = vunpack.c.h.b16 %v107
  %v238 = vunpack.c.l.b16 %v108
  %v239 = vunpack.c.h.b16 %v108
  %v240 = vunpack.c.l.b16 %v109
  %v241 = vunpack.c.h.b16 %v109
  %v242 = vunpack.c.l.b16 %v110
  %v243 = vunpack.c.h.b16 %v110
  %v244 = vunpack.c.l.b16 %v111
  %v245 = vunpack.c.h.b16 %v111
  %v246 = vunpack.c.l.b16 %v112
  %v247 = vunpack.c.h.b16 %v112
  %v248 = vunpack.c.l.b16 %v113
  %v249 = vunpack.c.h.b16 %v113
  %v250 = vunpack.c.l.b16 %v114
  %v251 = vunpack.c.h.b16 %v114
  %v252 = vunpack.c.l.b16 %v115
  %v253 = vunpack.c.h.b16 %v115
  %v254 = vunpack.c.l.b16 %v116
  %v255 = vunpack.c.h.b16 %v116
  %v256 = vunpack.c.l.b16 %v117
  %v257 = vunpack.c.h.b16 %v117
  %v258 = vunpack.c.l.b16 %v118
  %v259 = vunpack.c.h.b16 %v118
  %v260 = vunpack.c.l.b16 %v119
  %v261 = vunpack.c.h.b16 %v119
  %v262 = vunpack.c.l.b16 %v120
  %v263 = vunpack.c.h.b16 %v120
  %v264 = vunpack.c.l.b16 %v121
  %v265 = vunpack.c.h.b16 %v121
  %v266 = vunpack.c.l.b16 %v122
  %v267 = vunpack.c.h.b16 %v122
  %v268 = vunpack.c.l.b16 %v123
  %v269 = vunpack.c.h.b16 %v123
  %v270 = vunpack.c.l.b16 %v124
  %v271 = vunpack.c.h.b16 %v124
  %v272 = vunpack.c.l.b16 %v125
  %v273 = vunpack.c.h.b16 %v125
  %v274 = vunpack.c.l.b16 %v126
  %v275 = vunpack.c.h.b16 %v126
  %v276 = vunpack.c.l.b16 %v127
  %v277 = vunpack.c.h.b16 %v127
  %v278 = vunpack.c.l.b16 %v128
  %v279 = vunpack.c.h.b16 %v128
  %v280 = vunpack.c.l.b16 %v129
  %v281 = vunpack.c.h.b16 %v129
  %v282 = vunpack.c.l.b16 %v130
  %v283 = vunpack.c.h.b16 %v130
  %v284 = vunpack.c.l.b16 %v131
  %v285 = vunpack.c.h.b16 %v131
  %v286 = vunpack.c.l.b16 %v132
  %v287 = vunpack.c.h.b16 %v132
  %v288 = vunpack.c.l.b16 %v133
  %v289 = vunpack.c.h.b16 %v133
  %v290 = vunpack.c.l.b16 %v134
  %v291 = vunpack.c.h.b16 %v134
  %v292 = vunpack.c.l.b16 %v135
  %v293 = vunpack.c.h.b16 %v135
  %v294 = vunpack.c.l.b16 %v136
  %v295 = vunpack.c.h.b16 %v136
  %v296 = vunpack.c.l.b16 %v137
  %v297 = vunpack.c.h.b16 %v137
  %v298 = vunpack.c.l.b16 %v138
  %v299 = vunpack.c.h.b16 %v138
  %v300 = vunpack.c.l.b16 %v139
  %v301 = vunpack.c.h.b16 %v139
  %v302 = vunpack.c.l.b16 %v140
  %v303 = vunpack.c.h.b16 %v140
  %v304 = vunpack.c.l.b16 %v141
  %v305 = vunpack.c.h.b16 %v141
  %v306 = vunpack.c.l.b16 %v142
  %v307 = vunpack.c.h.b16 %v142
  %v308 = vunpack.c.l.b16 %v143
  %v309 = vunpack.c.h.b16 %v143
  %v310 = vunpack.c.l.b16 %v144
  %v311 = vunpack.c.h.b16 %v144
  %v312 = vunpack.c.l.b16 %v145
  %v313 = vunpack.c.h.b16 %v145
  %v314 = vunpack.c.l.b16 %v146
  %v315 = vunpack.c.h.b16 %v146
  %v316 = vunpack.c.l.b16 %v147
  %v317 = vunpack.c.h.b16 %v147
  %v318 = vunpack.c.l.b16 %v148
  %v319 = vunpack.c.h.b16 %v148
  %v320 = vunpack.c.l.b16 %v149
  %v321 = vunpack.c.h.b16 %v149
  %v322 = vunpack.c.l.b16 %v150
  %v323 = vunpack.c.h.b16 %v150
  %v324 = vunpack.c.l.b16 %v151
  %v325 = vunpack.c.h.b16 %v151
  %v326 = vunpack.c.l.b16 %v152
  %v327 = vunpack.c.h.b16 %v152
  %v328 = vunpack.c.l.b16 %v153
  %v329 = vunpack.c.h.b16 %v153
  %v330 = vunpack.c.l.b16 %v154
  %v331 = vunpack.c.h.b16 %v154
  %v332 = vunpack.c.l.b16 %v155
  %v333 = vunpack.c.h.b16 %v155
  %v334 = vunpack.c.l.b16 %v156
  %v335 = vunpack.c.h.b16 %v156
  %v336 = vunpack.c.l.b16 %v157
  %v337 = vunpack.c.h.b16 %v157
  %v338 = vunpack.c.l.b16 %v158
  %v339 = vunpack.c.h.b16 %v158
  %v340 = vunpack.c.l.b16 %v159
  %v341 = vunpack.c.h.b16 %v159
  %v342 = vunpack.c.l.b16 %v160
  %v343 = vunpack.c.h.b16 %v160
  %v344 = vunpack.c.l.b16 %v161
  %v345 = vunpack.c.h.b16 %v161
  %v346 = vunpack.c.l.b16 %v162
  %v347 = vunpack.c.h.b16 %v162
  %v348 = vunpack.c.l.b16 %v163
  %v349 = vunpack.c.h.b16 %v163
  %v350 = vunpack.c.l.b16 %v164
  %v351 = vunpack.c.h.b16 %v164
  %v352 = vunpack.c.l.b16 %v165
  %v353 = vunpack.c.h.b16 %v165
  %v354 = vunpack.c.l.b16 %v166
  %v355 = vunpack.c.h.b16 %v166
  %v356 = vunpack.c.l.b16 %v167
  %v357 = vunpack.c.h.b16 %v167
  %v358 = vunpack.c.l.b16 %v168
  %v359 = vunpack.c.h.b16 %v168
  %v360 = vunpack.c.l.b16 %v169
  %v361 = vunpack.c.h.b16 %v169
  %v362 = vpack.c.b16 %v236, %v234
  %v363 = vpack.c.b16 %v237, %v235
  %v364 = vpack.c.b16 %v240, %v238
  %v365 = vpack.c.b16 %v241, %v239
  %v366 = vpack.c.b16 %v244, %v242
  %v367 = vpack.c.b16 %v245, %v243
  %v368 = vpack.c.b16 %v248, %v246
  %v369 = vpack.c.b16 %v249, %v247
  %v370 = vpack.c.b16 %v252, %v250
  %v371 = vpack.c.b16 %v253, %v251
  %v372 = vpack.c.b16 %v256, %v254
  %v373 = vpack.c.b16 %v257, %v255
  %v374 = vpack.c.b16 %v260, %v258
  %v375 = vpack.c.b16 %v261, %v259
  %v376 = vpack.c.b16 %v264, %v262
  %v377 = vpack.c.b16 %v265, %v263
  %v378 = vpack.c.b16 %v268, %v266
  %v379 = vpack.c.b16 %v269, %v267
  %v380 = vpack.c.b16 %v272, %v270
  %v381 = vpack.c.b16 %v273, %v271
  %v382 = vpack.c.b16 %v276, %v274
  %v383 = vpack.c.b16 %v277, %v275
  %v384 = vpack.c.b16 %v280, %v278
  %v385 = vpack.c.b16 %v281, %v279
  %v386 = vpack.c.b16 %v284, %v282
  %v387 = vpack.c.b16 %v285, %v283
  %v388 = vpack.c.b16 %v288, %v286
  %v389 = vpack.c.b16 %v289, %v287
  %v390 = vpack.c.b16 %v292, %v290
  %v391 = vpack.c.b16 %v293, %v291
  %v392 = vpack.c.b16 %v296, %v294
  %v393 = vpack.c.b16 %v297, %v295
  %v394 = vpack.c.b16 %v300, %v298
  %v395 = vpack.c.b16 %v301, %v299
  %v396 = vpack.c.b16 %v304, %v302
  %v397 = vpack.c.b16 %v305, %v303
  %v398 = vpack.c.b16 %v308, %v306
  %v399 = vpack.c.b16 %v309, %v307
  %v400 = vpack.c.b16 %v312, %v310
  %v401 = vpack.c.b16 %v313, %v311
  %v402 = vpack.c.b16 %v316, %v314
  %v403 = vpack.c.b16 %v317, %v315
  %v404 = vpack.c.b16 %v320, %v318
  %v405 = vpack.c.b16 %v321, %v319
  %v406 = vpack.c.b16 %v324, %v322
  %v407 = vpack.c.b16 %v325, %v323
  %v408 = vpack.c.b16 %v328, %v326
  %v409 = vpack.c.b16 %v329, %v327
  %v410 = vpack.c.b16 %v332, %v330
  %v411 = vpack.c.b16 %v333, %v331
  %v412 = vpack.c.b16 %v336, %v334
  %v413 = vpack.c.b16 %v337, %v335
  %v414 = vpack.c.b16 %v340, %v338
  %v415 = vpack.c.b16 %v341, %v339
  %v416 = vpack.c.b16 %v344, %v342
  %v417 = vpack.c.b16 %v345, %v343
  %v418 = vpack.c.b16 %v348, %v346
  %v419 = vpack.c.b16 %v349, %v347
  %v420 = vpack.c.b16 %v352, %v350
  %v421 = vpack.c.b16 %v353, %v351
  %v422 = vpack.c.b16 %v356, %v354
  %v423 = vpack.c.b16 %v357, %v355
  %v424 = vpack.c.b16 %v360, %v358
  %v425 = vpack.c.b16 %v361, %v359
  %490 = vmatprep.subr.bf16.mxu0 %v377
  %491 = vmatpush1.bf16.msra.mxu0 %v376
  %492 = vmatprep.subr.bf16.mxu0 %v375
  %493 = vmatpush1.bf16.msra.mxu0 %v374
  %494 = vmatprep.subr.bf16.mxu0 %v373
  %495 = vmatpush1.bf16.msra.mxu0 %v372
  %496 = vmatprep.subr.bf16.mxu0 %v371
  %497 = vmatpush1.bf16.msra.mxu0 %v370
  %498 = vmatprep.subr.bf16.mxu0 %v369
  %499 = vmatpush1.bf16.msra.mxu0 %v368
  %500 = vmatprep.subr.bf16.mxu0 %v367
  %501 = vmatpush1.bf16.msra.mxu0 %v366
  %502 = vmatprep.subr.bf16.mxu0 %v365
  %503 = vmatpush1.bf16.msra.mxu0 %v364
  %504 = vmatprep.subr.bf16.mxu0 %v363
  %505 = vmatpush1.bf16.msra.mxu0 %v362
  %506 = vmatprep.subr.bf16.mxu0 %v393
  %507 = vmatpush2.bf16.msra.mxu0 %v392
  %508 = vmatprep.subr.bf16.mxu0 %v391
  %509 = vmatpush2.bf16.msra.mxu0 %v390
  %510 = vmatprep.subr.bf16.mxu0 %v389
  %511 = vmatpush2.bf16.msra.mxu0 %v388
  %512 = vmatprep.subr.bf16.mxu0 %v387
  %513 = vmatpush2.bf16.msra.mxu0 %v386
  %514 = vmatprep.subr.bf16.mxu0 %v385
  %515 = vmatpush2.bf16.msra.mxu0 %v384
  %516 = vmatprep.subr.bf16.mxu0 %v383
  %517 = vmatpush2.bf16.msra.mxu0 %v382
  %518 = vmatprep.subr.bf16.mxu0 %v381
  %519 = vmatpush2.bf16.msra.mxu0 %v380
  %520 = vmatprep.subr.bf16.mxu0 %v379
  %521 = vmatpush2.bf16.msra.mxu0 %v378
  %522 = vmatprep.mubr.bf16.mxu0 %v103
  %523 = vmatmul.mubr.bf16.gmra.mxu0 %v102
  %v524 = vpop.f32.mrf.mxu0
  %v525 = vadd.f32 0.0, %v524
  %v526 = vpop.f32.mrf.mxu0
  %v527 = vadd.f32 0.0, %v526
  %v528 = vpop.f32.mrf.mxu0
  %v529 = vpop.f32.mrf.mxu0
  %530 = vdwg.mxu0
  %531 = vmatprep.subr.bf16.mxu0 %v409
  %532 = vmatpush1.bf16.msra.mxu0 %v408
  %533 = vmatprep.subr.bf16.mxu0 %v407
  %534 = vmatpush1.bf16.msra.mxu0 %v406
  %535 = vmatprep.subr.bf16.mxu0 %v405
  %536 = vmatpush1.bf16.msra.mxu0 %v404
  %537 = vmatprep.subr.bf16.mxu0 %v403
  %538 = vmatpush1.bf16.msra.mxu0 %v402
  %539 = vmatprep.subr.bf16.mxu0 %v401
  %540 = vmatpush1.bf16.msra.mxu0 %v400
  %541 = vmatprep.subr.bf16.mxu0 %v399
  %542 = vmatpush1.bf16.msra.mxu0 %v398
  %543 = vmatprep.subr.bf16.mxu0 %v397
  %544 = vmatpush1.bf16.msra.mxu0 %v396
  %545 = vmatprep.subr.bf16.mxu0 %v395
  %546 = vmatpush1.bf16.msra.mxu0 %v394
  %547 = vmatprep.subr.bf16.mxu0 %v425
  %548 = vmatpush2.bf16.msra.mxu0 %v424
  %549 = vmatprep.subr.bf16.mxu0 %v423
  %550 = vmatpush2.bf16.msra.mxu0 %v422
  %551 = vmatprep.subr.bf16.mxu0 %v421
  %552 = vmatpush2.bf16.msra.mxu0 %v420
  %553 = vmatprep.subr.bf16.mxu0 %v419
  %554 = vmatpush2.bf16.msra.mxu0 %v418
  %555 = vmatprep.subr.bf16.mxu0 %v417
  %556 = vmatpush2.bf16.msra.mxu0 %v416
  %557 = vmatprep.subr.bf16.mxu0 %v415
  %558 = vmatpush2.bf16.msra.mxu0 %v414
  %559 = vmatprep.subr.bf16.mxu0 %v413
  %560 = vmatpush2.bf16.msra.mxu0 %v412
  %561 = vmatprep.subr.bf16.mxu0 %v411
  %562 = vmatpush2.bf16.msra.mxu0 %v410
  %563 = vmatprep.mubr.bf16.mxu0 %v105
  %564 = vmatmul.mubr.bf16.gmra.mxu0 %v104
  %v565 = vpop.f32.mrf.mxu0
  %v566 = vadd.f32 %v525, %v565
  %v567 = vpop.f32.mrf.mxu0
  %v568 = vadd.f32 %v527, %v567
  %v569 = vpop.f32.mrf.mxu0
  %v570 = vpop.f32.mrf.mxu0
  %571 = vdwg.mxu0
  %572 = vst [vmem:[%s4] sm:$0xff] %v566
  %573 = vst [vmem:[%s4 + $0x8] sm:$0xff] %v568
  // Predicated region
  $region18: #{unet_forward.7} parent=0 // pred_check
    _
  $region19: #{unet_forward.7} parent=0 // pred_check_branch
    %575 = sbr.rel (0) target = $region21
  $region20: #{unet_forward.7} parent=0 // pred_region
    _
  $region21: #{unet_forward.7} parent=0 // pred_fallthru
    _
  // Predicated region
  $region22: #{unet_forward.7} parent=0 // pred_check
    _
  $region23: #{unet_forward.7} parent=0 // pred_check_branch
    %577 = sbr.rel (0) target = $region25
  $region24: #{unet_forward.7} parent=0 // pred_region
    _
  $region25: #{unet_forward.7} parent=0 // pred_fallthru
    _

// kernel: unet_forward.8
$region0: #{unet_forward.8}
  #allocation0 [shape = 'u32[]', space=smem, size = 0x4, offset = 0x4, fixed_abs, tag = 'smem constant byte address 0x4 - core index']
  #allocation1 [shape = 'u32[144,128]{1,0:T(1,128)}', space=vmem, size = 0x12000, scoped, tag = 'internal scratch']
  %s0 = inlined_call_operand.vmem [shape: f32[8,256], index: 0, kind: input, shape index: {}]
  %s1 = inlined_call_operand.vmem [shape: bf16[256,1024], index: 1, kind: input, shape index: {}]
  %s2 = inlined_call_operand.vmem [shape: f32[1,256], index: 2, kind: input, shape index: {}]
  %s3 = inlined_call_operand.vmem [shape: f32[1,256], index: 3, kind: input, shape index: {}]
  %s4 = inlined_call_operand.vmem [shape: f32[8,1024], index: 4, kind: output, shape index: {}]
  %s5 = sld [smem:[#allocation0]]
  $region26: #{unet_forward.8} parent=0
    _
  %s7 = ssub.s32 1, %s5
  %s8 = scalar_select 0, %s7, %s5
  // Predicated region
  $region2: #{unet_forward.8} parent=0 // pred_check
    _
  $region3: #{unet_forward.8} parent=0 // pred_check_branch
    %10 = sbr.rel (0) target = $region5
  $region4: #{unet_forward.8} parent=0 // pred_region
    _
  $region5: #{unet_forward.8} parent=0 // pred_fallthru
    _
  // Predicated region
  $region6: #{unet_forward.8} parent=0 // pred_check
    _
  $region7: #{unet_forward.8} parent=0 // pred_check_branch
    %12 = sbr.rel (0) target = $region9
  $region8: #{unet_forward.8} parent=0 // pred_region
    _
  $region9: #{unet_forward.8} parent=0 // pred_fallthru
    _
  // Predicated region
  $region10: #{unet_forward.8} parent=0 // pred_check
    _
  $region11: #{unet_forward.8} parent=0 // pred_check_branch
    %14 = sbr.rel (0) target = $region13
  $region12: #{unet_forward.8} parent=0 // pred_region
    _
  $region13: #{unet_forward.8} parent=0 // pred_fallthru
    _
  // Predicated region
  $region14: #{unet_forward.8} parent=0 // pred_check
    _
  $region15: #{unet_forward.8} parent=0 // pred_check_branch
    %16 = sbr.rel (0) target = $region17
  $region16: #{unet_forward.8} parent=0 // pred_region
    _
  $region17: #{unet_forward.8} parent=0 // pred_fallthru
    _
  %v17 = vld [vmem:[%s0] sm:$0xff]
  %v18 = vld [vmem:[%s0 + $0x8] sm:$0xff]
  %v19 = vpack.c.bf16 %v17, %v17
  %v20 = vpack.c.bf16 %v18, %v18
  %v21 = vld [vmem:[%s1] sm:$0xff]
  %v22 = vld [vmem:[%s1 + $0x8] sm:$0xff]
  %v23 = vld [vmem:[%s1 + $0x10] sm:$0xff]
  %v24 = vld [vmem:[%s1 + $0x18] sm:$0xff]
  %v25 = vld [vmem:[%s1 + $0x20] sm:$0xff]
  %v26 = vld [vmem:[%s1 + $0x28] sm:$0xff]
  %v27 = vld [vmem:[%s1 + $0x30] sm:$0xff]
  %v28 = vld [vmem:[%s1 + $0x38] sm:$0xff]
  %v29 = vld [vmem:[%s1 + $0x40] sm:$0xff]
  %v30 = vld [vmem:[%s1 + $0x48] sm:$0xff]
  %v31 = vld [vmem:[%s1 + $0x50] sm:$0xff]
  %v32 = vld [vmem:[%s1 + $0x58] sm:$0xff]
  %v33 = vld [vmem:[%s1 + $0x60] sm:$0xff]
  %v34 = vld [vmem:[%s1 + $0x68] sm:$0xff]
  %v35 = vld [vmem:[%s1 + $0x70] sm:$0xff]
  %v36 = vld [vmem:[%s1 + $0x78] sm:$0xff]
  %v37 = vld [vmem:[%s1 + $0x80] sm:$0xff]
  %v38 = vld [vmem:[%s1 + $0x88] sm:$0xff]
  %v39 = vld [vmem:[%s1 + $0x90] sm:$0xff]
  %v40 = vld [vmem:[%s1 + $0x98] sm:$0xff]
  %v41 = vld [vmem:[%s1 + $0xa0] sm:$0xff]
  %v42 = vld [vmem:[%s1 + $0xa8] sm:$0xff]
  %v43 = vld [vmem:[%s1 + $0xb0] sm:$0xff]
  %v44 = vld [vmem:[%s1 + $0xb8] sm:$0xff]
  %v45 = vld [vmem:[%s1 + $0xc0] sm:$0xff]
  %v46 = vld [vmem:[%s1 + $0xc8] sm:$0xff]
  %v47 = vld [vmem:[%s1 + $0xd0] sm:$0xff]
  %v48 = vld [vmem:[%s1 + $0xd8] sm:$0xff]
  %v49 = vld [vmem:[%s1 + $0xe0] sm:$0xff]
  %v50 = vld [vmem:[%s1 + $0xe8] sm:$0xff]
  %v51 = vld [vmem:[%s1 + $0xf0] sm:$0xff]
  %v52 = vld [vmem:[%s1 + $0xf8] sm:$0xff]
  %v53 = vld [vmem:[%s1 + $0x100] sm:$0xff]
  %v54 = vld [vmem:[%s1 + $0x108] sm:$0xff]
  %v55 = vld [vmem:[%s1 + $0x110] sm:$0xff]
  %v56 = vld [vmem:[%s1 + $0x118] sm:$0xff]
  %v57 = vld [vmem:[%s1 + $0x120] sm:$0xff]
  %v58 = vld [vmem:[%s1 + $0x128] sm:$0xff]
  %v59 = vld [vmem:[%s1 + $0x130] sm:$0xff]
  %v60 = vld [vmem:[%s1 + $0x138] sm:$0xff]
  %v61 = vld [vmem:[%s1 + $0x140] sm:$0xff]
  %v62 = vld [vmem:[%s1 + $0x148] sm:$0xff]
  %v63 = vld [vmem:[%s1 + $0x150] sm:$0xff]
  %v64 = vld [vmem:[%s1 + $0x158] sm:$0xff]
  %v65 = vld [vmem:[%s1 + $0x160] sm:$0xff]
  %v66 = vld [vmem:[%s1 + $0x168] sm:$0xff]
  %v67 = vld [vmem:[%s1 + $0x170] sm:$0xff]
  %v68 = vld [vmem:[%s1 + $0x178] sm:$0xff]
  %v69 = vld [vmem:[%s1 + $0x180] sm:$0xff]
  %v70 = vld [vmem:[%s1 + $0x188] sm:$0xff]
  %v71 = vld [vmem:[%s1 + $0x190] sm:$0xff]
  %v72 = vld [vmem:[%s1 + $0x198] sm:$0xff]
  %v73 = vld [vmem:[%s1 + $0x1a0] sm:$0xff]
  %v74 = vld [vmem:[%s1 + $0x1a8] sm:$0xff]
  %v75 = vld [vmem:[%s1 + $0x1b0] sm:$0xff]
  %v76 = vld [vmem:[%s1 + $0x1b8] sm:$0xff]
  %v77 = vld [vmem:[%s1 + $0x1c0] sm:$0xff]
  %v78 = vld [vmem:[%s1 + $0x1c8] sm:$0xff]
  %v79 = vld [vmem:[%s1 + $0x1d0] sm:$0xff]
  %v80 = vld [vmem:[%s1 + $0x1d8] sm:$0xff]
  %v81 = vld [vmem:[%s1 + $0x1e0] sm:$0xff]
  %v82 = vld [vmem:[%s1 + $0x1e8] sm:$0xff]
  %v83 = vld [vmem:[%s1 + $0x1f0] sm:$0xff]
  %v84 = vld [vmem:[%s1 + $0x1f8] sm:$0xff]
  %v85 = vld [vmem:[%s1 + $0x200] sm:$0xff]
  %v86 = vld [vmem:[%s1 + $0x208] sm:$0xff]
  %v87 = vld [vmem:[%s1 + $0x210] sm:$0xff]
  %v88 = vld [vmem:[%s1 + $0x218] sm:$0xff]
  %v89 = vld [vmem:[%s1 + $0x220] sm:$0xff]
  %v90 = vld [vmem:[%s1 + $0x228] sm:$0xff]
  %v91 = vld [vmem:[%s1 + $0x230] sm:$0xff]
  %v92 = vld [vmem:[%s1 + $0x238] sm:$0xff]
  %v93 = vld [vmem:[%s1 + $0x240] sm:$0xff]
  %v94 = vld [vmem:[%s1 + $0x248] sm:$0xff]
  %v95 = vld [vmem:[%s1 + $0x250] sm:$0xff]
  %v96 = vld [vmem:[%s1 + $0x258] sm:$0xff]
  %v97 = vld [vmem:[%s1 + $0x260] sm:$0xff]
  %v98 = vld [vmem:[%s1 + $0x268] sm:$0xff]
  %v99 = vld [vmem:[%s1 + $0x270] sm:$0xff]
  %v100 = vld [vmem:[%s1 + $0x278] sm:$0xff]
  %v101 = vld [vmem:[%s1 + $0x280] sm:$0xff]
  %v102 = vld [vmem:[%s1 + $0x288] sm:$0xff]
  %v103 = vld [vmem:[%s1 + $0x290] sm:$0xff]
  %v104 = vld [vmem:[%s1 + $0x298] sm:$0xff]
  %v105 = vld [vmem:[%s1 + $0x2a0] sm:$0xff]
  %v106 = vld [vmem:[%s1 + $0x2a8] sm:$0xff]
  %v107 = vld [vmem:[%s1 + $0x2b0] sm:$0xff]
  %v108 = vld [vmem:[%s1 + $0x2b8] sm:$0xff]
  %v109 = vld [vmem:[%s1 + $0x2c0] sm:$0xff]
  %v110 = vld [vmem:[%s1 + $0x2c8] sm:$0xff]
  %v111 = vld [vmem:[%s1 + $0x2d0] sm:$0xff]
  %v112 = vld [vmem:[%s1 + $0x2d8] sm:$0xff]
  %v113 = vld [vmem:[%s1 + $0x2e0] sm:$0xff]
  %v114 = vld [vmem:[%s1 + $0x2e8] sm:$0xff]
  %v115 = vld [vmem:[%s1 + $0x2f0] sm:$0xff]
  %v116 = vld [vmem:[%s1 + $0x2f8] sm:$0xff]
  %v117 = vld [vmem:[%s1 + $0x300] sm:$0xff]
  %v118 = vld [vmem:[%s1 + $0x308] sm:$0xff]
  %v119 = vld [vmem:[%s1 + $0x310] sm:$0xff]
  %v120 = vld [vmem:[%s1 + $0x318] sm:$0xff]
  %v121 = vld [vmem:[%s1 + $0x320] sm:$0xff]
  %v122 = vld [vmem:[%s1 + $0x328] sm:$0xff]
  %v123 = vld [vmem:[%s1 + $0x330] sm:$0xff]
  %v124 = vld [vmem:[%s1 + $0x338] sm:$0xff]
  %v125 = vld [vmem:[%s1 + $0x340] sm:$0xff]
  %v126 = vld [vmem:[%s1 + $0x348] sm:$0xff]
  %v127 = vld [vmem:[%s1 + $0x350] sm:$0xff]
  %v128 = vld [vmem:[%s1 + $0x358] sm:$0xff]
  %v129 = vld [vmem:[%s1 + $0x360] sm:$0xff]
  %v130 = vld [vmem:[%s1 + $0x368] sm:$0xff]
  %v131 = vld [vmem:[%s1 + $0x370] sm:$0xff]
  %v132 = vld [vmem:[%s1 + $0x378] sm:$0xff]
  %v133 = vld [vmem:[%s1 + $0x380] sm:$0xff]
  %v134 = vld [vmem:[%s1 + $0x388] sm:$0xff]
  %v135 = vld [vmem:[%s1 + $0x390] sm:$0xff]
  %v136 = vld [vmem:[%s1 + $0x398] sm:$0xff]
  %v137 = vld [vmem:[%s1 + $0x3a0] sm:$0xff]
  %v138 = vld [vmem:[%s1 + $0x3a8] sm:$0xff]
  %v139 = vld [vmem:[%s1 + $0x3b0] sm:$0xff]
  %v140 = vld [vmem:[%s1 + $0x3b8] sm:$0xff]
  %v141 = vld [vmem:[%s1 + $0x3c0] sm:$0xff]
  %v142 = vld [vmem:[%s1 + $0x3c8] sm:$0xff]
  %v143 = vld [vmem:[%s1 + $0x3d0] sm:$0xff]
  %v144 = vld [vmem:[%s1 + $0x3d8] sm:$0xff]
  %v145 = vld [vmem:[%s1 + $0x3e0] sm:$0xff]
  %v146 = vld [vmem:[%s1 + $0x3e8] sm:$0xff]
  %v147 = vld [vmem:[%s1 + $0x3f0] sm:$0xff]
  %v148 = vld [vmem:[%s1 + $0x3f8] sm:$0xff]
  %v277 = vunpack.c.l.b16 %v21
  %v278 = vunpack.c.h.b16 %v21
  %v279 = vunpack.c.l.b16 %v22
  %v280 = vunpack.c.h.b16 %v22
  %v281 = vunpack.c.l.b16 %v23
  %v282 = vunpack.c.h.b16 %v23
  %v283 = vunpack.c.l.b16 %v24
  %v284 = vunpack.c.h.b16 %v24
  %v285 = vunpack.c.l.b16 %v25
  %v286 = vunpack.c.h.b16 %v25
  %v287 = vunpack.c.l.b16 %v26
  %v288 = vunpack.c.h.b16 %v26
  %v289 = vunpack.c.l.b16 %v27
  %v290 = vunpack.c.h.b16 %v27
  %v291 = vunpack.c.l.b16 %v28
  %v292 = vunpack.c.h.b16 %v28
  %v293 = vunpack.c.l.b16 %v29
  %v294 = vunpack.c.h.b16 %v29
  %v295 = vunpack.c.l.b16 %v30
  %v296 = vunpack.c.h.b16 %v30
  %v297 = vunpack.c.l.b16 %v31
  %v298 = vunpack.c.h.b16 %v31
  %v299 = vunpack.c.l.b16 %v32
  %v300 = vunpack.c.h.b16 %v32
  %v301 = vunpack.c.l.b16 %v33
  %v302 = vunpack.c.h.b16 %v33
  %v303 = vunpack.c.l.b16 %v34
  %v304 = vunpack.c.h.b16 %v34
  %v305 = vunpack.c.l.b16 %v35
  %v306 = vunpack.c.h.b16 %v35
  %v307 = vunpack.c.l.b16 %v36
  %v308 = vunpack.c.h.b16 %v36
  %v309 = vunpack.c.l.b16 %v37
  %v310 = vunpack.c.h.b16 %v37
  %v311 = vunpack.c.l.b16 %v38
  %v312 = vunpack.c.h.b16 %v38
  %v313 = vunpack.c.l.b16 %v39
  %v314 = vunpack.c.h.b16 %v39
  %v315 = vunpack.c.l.b16 %v40
  %v316 = vunpack.c.h.b16 %v40
  %v317 = vunpack.c.l.b16 %v41
  %v318 = vunpack.c.h.b16 %v41
  %v319 = vunpack.c.l.b16 %v42
  %v320 = vunpack.c.h.b16 %v42
  %v321 = vunpack.c.l.b16 %v43
  %v322 = vunpack.c.h.b16 %v43
  %v323 = vunpack.c.l.b16 %v44
  %v324 = vunpack.c.h.b16 %v44
  %v325 = vunpack.c.l.b16 %v45
  %v326 = vunpack.c.h.b16 %v45
  %v327 = vunpack.c.l.b16 %v46
  %v328 = vunpack.c.h.b16 %v46
  %v329 = vunpack.c.l.b16 %v47
  %v330 = vunpack.c.h.b16 %v47
  %v331 = vunpack.c.l.b16 %v48
  %v332 = vunpack.c.h.b16 %v48
  %v333 = vunpack.c.l.b16 %v49
  %v334 = vunpack.c.h.b16 %v49
  %v335 = vunpack.c.l.b16 %v50
  %v336 = vunpack.c.h.b16 %v50
  %v337 = vunpack.c.l.b16 %v51
  %v338 = vunpack.c.h.b16 %v51
  %v339 = vunpack.c.l.b16 %v52
  %v340 = vunpack.c.h.b16 %v52
  %v341 = vunpack.c.l.b16 %v53
  %v342 = vunpack.c.h.b16 %v53
  %v343 = vunpack.c.l.b16 %v54
  %v344 = vunpack.c.h.b16 %v54
  %v345 = vunpack.c.l.b16 %v55
  %v346 = vunpack.c.h.b16 %v55
  %v347 = vunpack.c.l.b16 %v56
  %v348 = vunpack.c.h.b16 %v56
  %v349 = vunpack.c.l.b16 %v57
  %v350 = vunpack.c.h.b16 %v57
  %v351 = vunpack.c.l.b16 %v58
  %v352 = vunpack.c.h.b16 %v58
  %v353 = vunpack.c.l.b16 %v59
  %v354 = vunpack.c.h.b16 %v59
  %v355 = vunpack.c.l.b16 %v60
  %v356 = vunpack.c.h.b16 %v60
  %v357 = vunpack.c.l.b16 %v61
  %v358 = vunpack.c.h.b16 %v61
  %v359 = vunpack.c.l.b16 %v62
  %v360 = vunpack.c.h.b16 %v62
  %v361 = vunpack.c.l.b16 %v63
  %v362 = vunpack.c.h.b16 %v63
  %v363 = vunpack.c.l.b16 %v64
  %v364 = vunpack.c.h.b16 %v64
  %v365 = vunpack.c.l.b16 %v65
  %v366 = vunpack.c.h.b16 %v65
  %v367 = vunpack.c.l.b16 %v66
  %v368 = vunpack.c.h.b16 %v66
  %v369 = vunpack.c.l.b16 %v67
  %v370 = vunpack.c.h.b16 %v67
  %v371 = vunpack.c.l.b16 %v68
  %v372 = vunpack.c.h.b16 %v68
  %v373 = vunpack.c.l.b16 %v69
  %v374 = vunpack.c.h.b16 %v69
  %v375 = vunpack.c.l.b16 %v70
  %v376 = vunpack.c.h.b16 %v70
  %v377 = vunpack.c.l.b16 %v71
  %v378 = vunpack.c.h.b16 %v71
  %v379 = vunpack.c.l.b16 %v72
  %v380 = vunpack.c.h.b16 %v72
  %v381 = vunpack.c.l.b16 %v73
  %v382 = vunpack.c.h.b16 %v73
  %v383 = vunpack.c.l.b16 %v74
  %v384 = vunpack.c.h.b16 %v74
  %v385 = vunpack.c.l.b16 %v75
  %v386 = vunpack.c.h.b16 %v75
  %v387 = vunpack.c.l.b16 %v76
  %v388 = vunpack.c.h.b16 %v76
  %v389 = vunpack.c.l.b16 %v77
  %v390 = vunpack.c.h.b16 %v77
  %v391 = vunpack.c.l.b16 %v78
  %v392 = vunpack.c.h.b16 %v78
  %v393 = vunpack.c.l.b16 %v79
  %v394 = vunpack.c.h.b16 %v79
  %v395 = vunpack.c.l.b16 %v80
  %v396 = vunpack.c.h.b16 %v80
  %v397 = vunpack.c.l.b16 %v81
  %v398 = vunpack.c.h.b16 %v81
  %v399 = vunpack.c.l.b16 %v82
  %v400 = vunpack.c.h.b16 %v82
  %v401 = vunpack.c.l.b16 %v83
  %v402 = vunpack.c.h.b16 %v83
  %v403 = vunpack.c.l.b16 %v84
  %v404 = vunpack.c.h.b16 %v84
  %v405 = vunpack.c.l.b16 %v85
  %v406 = vunpack.c.h.b16 %v85
  %v407 = vunpack.c.l.b16 %v86
  %v408 = vunpack.c.h.b16 %v86
  %v409 = vunpack.c.l.b16 %v87
  %v410 = vunpack.c.h.b16 %v87
  %v411 = vunpack.c.l.b16 %v88
  %v412 = vunpack.c.h.b16 %v88
  %v413 = vunpack.c.l.b16 %v89
  %v414 = vunpack.c.h.b16 %v89
  %v415 = vunpack.c.l.b16 %v90
  %v416 = vunpack.c.h.b16 %v90
  %v417 = vunpack.c.l.b16 %v91
  %v418 = vunpack.c.h.b16 %v91
  %v419 = vunpack.c.l.b16 %v92
  %v420 = vunpack.c.h.b16 %v92
  %v421 = vunpack.c.l.b16 %v93
  %v422 = vunpack.c.h.b16 %v93
  %v423 = vunpack.c.l.b16 %v94
  %v424 = vunpack.c.h.b16 %v94
  %v425 = vunpack.c.l.b16 %v95
  %v426 = vunpack.c.h.b16 %v95
  %v427 = vunpack.c.l.b16 %v96
  %v428 = vunpack.c.h.b16 %v96
  %v429 = vunpack.c.l.b16 %v97
  %v430 = vunpack.c.h.b16 %v97
  %v431 = vunpack.c.l.b16 %v98
  %v432 = vunpack.c.h.b16 %v98
  %v433 = vunpack.c.l.b16 %v99
  %v434 = vunpack.c.h.b16 %v99
  %v435 = vunpack.c.l.b16 %v100
  %v436 = vunpack.c.h.b16 %v100
  %v437 = vunpack.c.l.b16 %v101
  %v438 = vunpack.c.h.b16 %v101
  %v439 = vunpack.c.l.b16 %v102
  %v440 = vunpack.c.h.b16 %v102
  %v441 = vunpack.c.l.b16 %v103
  %v442 = vunpack.c.h.b16 %v103
  %v443 = vunpack.c.l.b16 %v104
  %v444 = vunpack.c.h.b16 %v104
  %v445 = vunpack.c.l.b16 %v105
  %v446 = vunpack.c.h.b16 %v105
  %v447 = vunpack.c.l.b16 %v106
  %v448 = vunpack.c.h.b16 %v106
  %v449 = vunpack.c.l.b16 %v107
  %v450 = vunpack.c.h.b16 %v107
  %v451 = vunpack.c.l.b16 %v108
  %v452 = vunpack.c.h.b16 %v108
  %v453 = vunpack.c.l.b16 %v109
  %v454 = vunpack.c.h.b16 %v109
  %v455 = vunpack.c.l.b16 %v110
  %v456 = vunpack.c.h.b16 %v110
  %v457 = vunpack.c.l.b16 %v111
  %v458 = vunpack.c.h.b16 %v111
  %v459 = vunpack.c.l.b16 %v112
  %v460 = vunpack.c.h.b16 %v112
  %v461 = vunpack.c.l.b16 %v113
  %v462 = vunpack.c.h.b16 %v113
  %v463 = vunpack.c.l.b16 %v114
  %v464 = vunpack.c.h.b16 %v114
  %v465 = vunpack.c.l.b16 %v115
  %v466 = vunpack.c.h.b16 %v115
  %v467 = vunpack.c.l.b16 %v116
  %v468 = vunpack.c.h.b16 %v116
  %v469 = vunpack.c.l.b16 %v117
  %v470 = vunpack.c.h.b16 %v117
  %v471 = vunpack.c.l.b16 %v118
  %v472 = vunpack.c.h.b16 %v118
  %v473 = vunpack.c.l.b16 %v119
  %v474 = vunpack.c.h.b16 %v119
  %v475 = vunpack.c.l.b16 %v120
  %v476 = vunpack.c.h.b16 %v120
  %v477 = vunpack.c.l.b16 %v121
  %v478 = vunpack.c.h.b16 %v121
  %v479 = vunpack.c.l.b16 %v122
  %v480 = vunpack.c.h.b16 %v122
  %v481 = vunpack.c.l.b16 %v123
  %v482 = vunpack.c.h.b16 %v123
  %v483 = vunpack.c.l.b16 %v124
  %v484 = vunpack.c.h.b16 %v124
  %v485 = vunpack.c.l.b16 %v125
  %v486 = vunpack.c.h.b16 %v125
  %v487 = vunpack.c.l.b16 %v126
  %v488 = vunpack.c.h.b16 %v126
  %v489 = vunpack.c.l.b16 %v127
  %v490 = vunpack.c.h.b16 %v127
  %v491 = vunpack.c.l.b16 %v128
  %v492 = vunpack.c.h.b16 %v128
  %v493 = vunpack.c.l.b16 %v129
  %v494 = vunpack.c.h.b16 %v129
  %v495 = vunpack.c.l.b16 %v130
  %v496 = vunpack.c.h.b16 %v130
  %v497 = vunpack.c.l.b16 %v131
  %v498 = vunpack.c.h.b16 %v131
  %v499 = vunpack.c.l.b16 %v132
  %v500 = vunpack.c.h.b16 %v132
  %v501 = vunpack.c.l.b16 %v133
  %v502 = vunpack.c.h.b16 %v133
  %v503 = vunpack.c.l.b16 %v134
  %v504 = vunpack.c.h.b16 %v134
  %v505 = vunpack.c.l.b16 %v135
  %v506 = vunpack.c.h.b16 %v135
  %v507 = vunpack.c.l.b16 %v136
  %v508 = vunpack.c.h.b16 %v136
  %v509 = vunpack.c.l.b16 %v137
  %v510 = vunpack.c.h.b16 %v137
  %v511 = vunpack.c.l.b16 %v138
  %v512 = vunpack.c.h.b16 %v138
  %v513 = vunpack.c.l.b16 %v139
  %v514 = vunpack.c.h.b16 %v139
  %v515 = vunpack.c.l.b16 %v140
  %v516 = vunpack.c.h.b16 %v140
  %v517 = vunpack.c.l.b16 %v141
  %v518 = vunpack.c.h.b16 %v141
  %v519 = vunpack.c.l.b16 %v142
  %v520 = vunpack.c.h.b16 %v142
  %v521 = vunpack.c.l.b16 %v143
  %v522 = vunpack.c.h.b16 %v143
  %v523 = vunpack.c.l.b16 %v144
  %v524 = vunpack.c.h.b16 %v144
  %v525 = vunpack.c.l.b16 %v145
  %v526 = vunpack.c.h.b16 %v145
  %v527 = vunpack.c.l.b16 %v146
  %v528 = vunpack.c.h.b16 %v146
  %v529 = vunpack.c.l.b16 %v147
  %v530 = vunpack.c.h.b16 %v147
  %v531 = vunpack.c.l.b16 %v148
  %v532 = vunpack.c.h.b16 %v148
  %v533 = vpack.c.b16 %v285, %v277
  %v534 = vpack.c.b16 %v286, %v278
  %v535 = vpack.c.b16 %v287, %v279
  %v536 = vpack.c.b16 %v288, %v280
  %v537 = vpack.c.b16 %v289, %v281
  %v538 = vpack.c.b16 %v290, %v282
  %v539 = vpack.c.b16 %v291, %v283
  %v540 = vpack.c.b16 %v292, %v284
  %v541 = vpack.c.b16 %v301, %v293
  %v542 = vpack.c.b16 %v302, %v294
  %v543 = vpack.c.b16 %v303, %v295
  %v544 = vpack.c.b16 %v304, %v296
  %v545 = vpack.c.b16 %v305, %v297
  %v546 = vpack.c.b16 %v306, %v298
  %v547 = vpack.c.b16 %v307, %v299
  %v548 = vpack.c.b16 %v308, %v300
  %v549 = vpack.c.b16 %v317, %v309
  %v550 = vpack.c.b16 %v318, %v310
  %v551 = vpack.c.b16 %v319, %v311
  %v552 = vpack.c.b16 %v320, %v312
  %v553 = vpack.c.b16 %v321, %v313
  %v554 = vpack.c.b16 %v322, %v314
  %v555 = vpack.c.b16 %v323, %v315
  %v556 = vpack.c.b16 %v324, %v316
  %v557 = vpack.c.b16 %v333, %v325
  %v558 = vpack.c.b16 %v334, %v326
  %v559 = vpack.c.b16 %v335, %v327
  %v560 = vpack.c.b16 %v336, %v328
  %v561 = vpack.c.b16 %v337, %v329
  %v562 = vpack.c.b16 %v338, %v330
  %v563 = vpack.c.b16 %v339, %v331
  %v564 = vpack.c.b16 %v340, %v332
  %v565 = vpack.c.b16 %v349, %v341
  %v566 = vpack.c.b16 %v350, %v342
  %v567 = vpack.c.b16 %v351, %v343
  %v568 = vpack.c.b16 %v352, %v344
  %v569 = vpack.c.b16 %v353, %v345
  %v570 = vpack.c.b16 %v354, %v346
  %v571 = vpack.c.b16 %v355, %v347
  %v572 = vpack.c.b16 %v356, %v348
  %v573 = vpack.c.b16 %v365, %v357
  %v574 = vpack.c.b16 %v366, %v358
  %v575 = vpack.c.b16 %v367, %v359
  %v576 = vpack.c.b16 %v368, %v360
  %v577 = vpack.c.b16 %v369, %v361
  %v578 = vpack.c.b16 %v370, %v362
  %v579 = vpack.c.b16 %v371, %v363
  %v580 = vpack.c.b16 %v372, %v364
  %v581 = vpack.c.b16 %v381, %v373
  %v582 = vpack.c.b16 %v382, %v374
  %v583 = vpack.c.b16 %v383, %v375
  %v584 = vpack.c.b16 %v384, %v376
  %v585 = vpack.c.b16 %v385, %v377
  %v586 = vpack.c.b16 %v386, %v378
  %v587 = vpack.c.b16 %v387, %v379
  %v588 = vpack.c.b16 %v388, %v380
  %v589 = vpack.c.b16 %v397, %v389
  %v590 = vpack.c.b16 %v398, %v390
  %v591 = vpack.c.b16 %v399, %v391
  %v592 = vpack.c.b16 %v400, %v392
  %v593 = vpack.c.b16 %v401, %v393
  %v594 = vpack.c.b16 %v402, %v394
  %v595 = vpack.c.b16 %v403, %v395
  %v596 = vpack.c.b16 %v404, %v396
  %v597 = vpack.c.b16 %v413, %v405
  %v598 = vpack.c.b16 %v414, %v406
  %v599 = vpack.c.b16 %v415, %v407
  %v600 = vpack.c.b16 %v416, %v408
  %v601 = vpack.c.b16 %v417, %v409
  %v602 = vpack.c.b16 %v418, %v410
  %v603 = vpack.c.b16 %v419, %v411
  %v604 = vpack.c.b16 %v420, %v412
  %v605 = vpack.c.b16 %v429, %v421
  %v606 = vpack.c.b16 %v430, %v422
  %v607 = vpack.c.b16 %v431, %v423
  %v608 = vpack.c.b16 %v432, %v424
  %v609 = vpack.c.b16 %v433, %v425
  %v610 = vpack.c.b16 %v434, %v426
  %v611 = vpack.c.b16 %v435, %v427
  %v612 = vpack.c.b16 %v436, %v428
  %v613 = vpack.c.b16 %v445, %v437
  %v614 = vpack.c.b16 %v446, %v438
  %v615 = vpack.c.b16 %v447, %v439
  %v616 = vpack.c.b16 %v448, %v440
  %v617 = vpack.c.b16 %v449, %v441
  %v618 = vpack.c.b16 %v450, %v442
  %v619 = vpack.c.b16 %v451, %v443
  %v620 = vpack.c.b16 %v452, %v444
  %v621 = vpack.c.b16 %v461, %v453
  %v622 = vpack.c.b16 %v462, %v454
  %v623 = vpack.c.b16 %v463, %v455
  %v624 = vpack.c.b16 %v464, %v456
  %v625 = vpack.c.b16 %v465, %v457
  %v626 = vpack.c.b16 %v466, %v458
  %v627 = vpack.c.b16 %v467, %v459
  %v628 = vpack.c.b16 %v468, %v460
  %v629 = vpack.c.b16 %v477, %v469
  %v630 = vpack.c.b16 %v478, %v470
  %v631 = vpack.c.b16 %v479, %v471
  %v632 = vpack.c.b16 %v480, %v472
  %v633 = vpack.c.b16 %v481, %v473
  %v634 = vpack.c.b16 %v482, %v474
  %v635 = vpack.c.b16 %v483, %v475
  %v636 = vpack.c.b16 %v484, %v476
  %v637 = vpack.c.b16 %v493, %v485
  %v638 = vpack.c.b16 %v494, %v486
  %v639 = vpack.c.b16 %v495, %v487
  %v640 = vpack.c.b16 %v496, %v488
  %v641 = vpack.c.b16 %v497, %v489
  %v642 = vpack.c.b16 %v498, %v490
  %v643 = vpack.c.b16 %v499, %v491
  %v644 = vpack.c.b16 %v500, %v492
  %v645 = vpack.c.b16 %v509, %v501
  %v646 = vpack.c.b16 %v510, %v502
  %v647 = vpack.c.b16 %v511, %v503
  %v648 = vpack.c.b16 %v512, %v504
  %v649 = vpack.c.b16 %v513, %v505
  %v650 = vpack.c.b16 %v514, %v506
  %v651 = vpack.c.b16 %v515, %v507
  %v652 = vpack.c.b16 %v516, %v508
  %v653 = vpack.c.b16 %v525, %v517
  %v654 = vpack.c.b16 %v526, %v518
  %v655 = vpack.c.b16 %v527, %v519
  %v656 = vpack.c.b16 %v528, %v520
  %v657 = vpack.c.b16 %v529, %v521
  %v658 = vpack.c.b16 %v530, %v522
  %v659 = vpack.c.b16 %v531, %v523
  %v660 = vpack.c.b16 %v532, %v524
  %789 = vmatprep.subr.bf16.mxu0 %v590
  %790 = vmatpush1.bf16.msra.mxu0 %v589
  %791 = vmatprep.subr.bf16.mxu0 %v582
  %792 = vmatpush1.bf16.msra.mxu0 %v581
  %793 = vmatprep.subr.bf16.mxu0 %v574
  %794 = vmatpush1.bf16.msra.mxu0 %v573
  %795 = vmatprep.subr.bf16.mxu0 %v566
  %796 = vmatpush1.bf16.msra.mxu0 %v565
  %797 = vmatprep.subr.bf16.mxu0 %v558
  %798 = vmatpush1.bf16.msra.mxu0 %v557
  %799 = vmatprep.subr.bf16.mxu0 %v550
  %800 = vmatpush1.bf16.msra.mxu0 %v549
  %801 = vmatprep.subr.bf16.mxu0 %v542
  %802 = vmatpush1.bf16.msra.mxu0 %v541
  %803 = vmatprep.subr.bf16.mxu0 %v534
  %804 = vmatpush1.bf16.msra.mxu0 %v533
  %805 = vmatprep.subr.bf16.mxu0 %v654
  %806 = vmatpush2.bf16.msra.mxu0 %v653
  %807 = vmatprep.subr.bf16.mxu0 %v646
  %808 = vmatpush2.bf16.msra.mxu0 %v645
  %809 = vmatprep.subr.bf16.mxu0 %v638
  %810 = vmatpush2.bf16.msra.mxu0 %v637
  %811 = vmatprep.subr.bf16.mxu0 %v630
  %812 = vmatpush2.bf16.msra.mxu0 %v629
  %813 = vmatprep.subr.bf16.mxu0 %v622
  %814 = vmatpush2.bf16.msra.mxu0 %v621
  %815 = vmatprep.subr.bf16.mxu0 %v614
  %816 = vmatpush2.bf16.msra.mxu0 %v613
  %817 = vmatprep.subr.bf16.mxu0 %v606
  %818 = vmatpush2.bf16.msra.mxu0 %v605
  %819 = vmatprep.subr.bf16.mxu0 %v598
  %820 = vmatpush2.bf16.msra.mxu0 %v597
  %821 = vmatprep.mubr.bf16.mxu0 %v20
  %822 = vmatmul.mubr.bf16.gmra.mxu0 %v19
  %v823 = vpop.f32.mrf.mxu0
  %v824 = vadd.f32 0.0, %v823
  %v825 = vpop.f32.mrf.mxu0
  %v826 = vadd.f32 0.0, %v825
  %v827 = vpop.f32.mrf.mxu0
  %v828 = vpop.f32.mrf.mxu0
  %829 = vdwg.mxu0
  %830 = vmatprep.subr.bf16.mxu0 %v592
  %831 = vmatpush1.bf16.msra.mxu0 %v591
  %832 = vmatprep.subr.bf16.mxu0 %v584
  %833 = vmatpush1.bf16.msra.mxu0 %v583
  %834 = vmatprep.subr.bf16.mxu0 %v576
  %835 = vmatpush1.bf16.msra.mxu0 %v575
  %836 = vmatprep.subr.bf16.mxu0 %v568
  %837 = vmatpush1.bf16.msra.mxu0 %v567
  %838 = vmatprep.subr.bf16.mxu0 %v560
  %839 = vmatpush1.bf16.msra.mxu0 %v559
  %840 = vmatprep.subr.bf16.mxu0 %v552
  %841 = vmatpush1.bf16.msra.mxu0 %v551
  %842 = vmatprep.subr.bf16.mxu0 %v544
  %843 = vmatpush1.bf16.msra.mxu0 %v543
  %844 = vmatprep.subr.bf16.mxu0 %v536
  %845 = vmatpush1.bf16.msra.mxu0 %v535
  %846 = vmatprep.subr.bf16.mxu0 %v656
  %847 = vmatpush2.bf16.msra.mxu0 %v655
  %848 = vmatprep.subr.bf16.mxu0 %v648
  %849 = vmatpush2.bf16.msra.mxu0 %v647
  %850 = vmatprep.subr.bf16.mxu0 %v640
  %851 = vmatpush2.bf16.msra.mxu0 %v639
  %852 = vmatprep.subr.bf16.mxu0 %v632
  %853 = vmatpush2.bf16.msra.mxu0 %v631
  %854 = vmatprep.subr.bf16.mxu0 %v624
  %855 = vmatpush2.bf16.msra.mxu0 %v623
  %856 = vmatprep.subr.bf16.mxu0 %v616
  %857 = vmatpush2.bf16.msra.mxu0 %v615
  %858 = vmatprep.subr.bf16.mxu0 %v608
  %859 = vmatpush2.bf16.msra.mxu0 %v607
  %860 = vmatprep.subr.bf16.mxu0 %v600
  %861 = vmatpush2.bf16.msra.mxu0 %v599
  %862 = vmatprep.mubr.bf16.mxu0 %v20
  %863 = vmatmul.mubr.bf16.gmra.mxu0 %v19
  %v864 = vpop.f32.mrf.mxu0
  %v865 = vadd.f32 0.0, %v864
  %v866 = vpop.f32.mrf.mxu0
  %v867 = vadd.f32 0.0, %v866
  %v868 = vpop.f32.mrf.mxu0
  %v869 = vpop.f32.mrf.mxu0
  %870 = vdwg.mxu0
  %871 = vmatprep.subr.bf16.mxu0 %v594
  %872 = vmatpush1.bf16.msra.mxu0 %v593
  %873 = vmatprep.subr.bf16.mxu0 %v586
  %874 = vmatpush1.bf16.msra.mxu0 %v585
  %875 = vmatprep.subr.bf16.mxu0 %v578
  %876 = vmatpush1.bf16.msra.mxu0 %v577
  %877 = vmatprep.subr.bf16.mxu0 %v570
  %878 = vmatpush1.bf16.msra.mxu0 %v569
  %879 = vmatprep.subr.bf16.mxu0 %v562
  %880 = vmatpush1.bf16.msra.mxu0 %v561
  %881 = vmatprep.subr.bf16.mxu0 %v554
  %882 = vmatpush1.bf16.msra.mxu0 %v553
  %883 = vmatprep.subr.bf16.mxu0 %v546
  %884 = vmatpush1.bf16.msra.mxu0 %v545
  %885 = vmatprep.subr.bf16.mxu0 %v538
  %886 = vmatpush1.bf16.msra.mxu0 %v537
  %887 = vmatprep.subr.bf16.mxu0 %v658
  %888 = vmatpush2.bf16.msra.mxu0 %v657
  %889 = vmatprep.subr.bf16.mxu0 %v650
  %890 = vmatpush2.bf16.msra.mxu0 %v649
  %891 = vmatprep.subr.bf16.mxu0 %v642
  %892 = vmatpush2.bf16.msra.mxu0 %v641
  %893 = vmatprep.subr.bf16.mxu0 %v634
  %894 = vmatpush2.bf16.msra.mxu0 %v633
  %895 = vmatprep.subr.bf16.mxu0 %v626
  %896 = vmatpush2.bf16.msra.mxu0 %v625
  %897 = vmatprep.subr.bf16.mxu0 %v618
  %898 = vmatpush2.bf16.msra.mxu0 %v617
  %899 = vmatprep.subr.bf16.mxu0 %v610
  %900 = vmatpush2.bf16.msra.mxu0 %v609
  %901 = vmatprep.subr.bf16.mxu0 %v602
  %902 = vmatpush2.bf16.msra.mxu0 %v601
  %903 = vmatprep.mubr.bf16.mxu0 %v20
  %904 = vmatmul.mubr.bf16.gmra.mxu0 %v19
  %v905 = vpop.f32.mrf.mxu0
  %v906 = vadd.f32 0.0, %v905
  %v907 = vpop.f32.mrf.mxu0
  %v908 = vadd.f32 0.0, %v907
  %v909 = vpop.f32.mrf.mxu0
  %v910 = vpop.f32.mrf.mxu0
  %911 = vdwg.mxu0
  %912 = vmatprep.subr.bf16.mxu0 %v596
  %913 = vmatpush1.bf16.msra.mxu0 %v595
  %914 = vmatprep.subr.bf16.mxu0 %v588
  %915 = vmatpush1.bf16.msra.mxu0 %v587
  %916 = vmatprep.subr.bf16.mxu0 %v580
  %917 = vmatpush1.bf16.msra.mxu0 %v579
  %918 = vmatprep.subr.bf16.mxu0 %v572
  %919 = vmatpush1.bf16.msra.mxu0 %v571
  %920 = vmatprep.subr.bf16.mxu0 %v564
  %921 = vmatpush1.bf16.msra.mxu0 %v563
  %922 = vmatprep.subr.bf16.mxu0 %v556
  %923 = vmatpush1.bf16.msra.mxu0 %v555
  %924 = vmatprep.subr.bf16.mxu0 %v548
  %925 = vmatpush1.bf16.msra.mxu0 %v547
  %926 = vmatprep.subr.bf16.mxu0 %v540
  %927 = vmatpush1.bf16.msra.mxu0 %v539
  %928 = vmatprep.subr.bf16.mxu0 %v660
  %929 = vmatpush2.bf16.msra.mxu0 %v659
  %930 = vmatprep.subr.bf16.mxu0 %v652
  %931 = vmatpush2.bf16.msra.mxu0 %v651
  %932 = vmatprep.subr.bf16.mxu0 %v644
  %933 = vmatpush2.bf16.msra.mxu0 %v643
  %934 = vmatprep.subr.bf16.mxu0 %v636
  %935 = vmatpush2.bf16.msra.mxu0 %v635
  %936 = vmatprep.subr.bf16.mxu0 %v628
  %937 = vmatpush2.bf16.msra.mxu0 %v627
  %938 = vmatprep.subr.bf16.mxu0 %v620
  %939 = vmatpush2.bf16.msra.mxu0 %v619
  %940 = vmatprep.subr.bf16.mxu0 %v612
  %941 = vmatpush2.bf16.msra.mxu0 %v611
  %942 = vmatprep.subr.bf16.mxu0 %v604
  %943 = vmatpush2.bf16.msra.mxu0 %v603
  %944 = vmatprep.mubr.bf16.mxu0 %v20
  %945 = vmatmul.mubr.bf16.gmra.mxu0 %v19
  %v946 = vpop.f32.mrf.mxu0
  %v947 = vadd.f32 0.0, %v946
  %v948 = vpop.f32.mrf.mxu0
  %v949 = vadd.f32 0.0, %v948
  %v950 = vpop.f32.mrf.mxu0
  %v951 = vpop.f32.mrf.mxu0
  %952 = vdwg.mxu0
  %v953 = vld [vmem:[%s2] sm:$0x3]
  %v954 = vld [vmem:[%s3] sm:$0x3]
  %v955 = vadd.f32 %v824, %v826
  %956 = vadd.xlane.f32.xlu0 %v955
  %v957 = vpop.xlane.xlu0 %956
  %v958 = vrcp.pop 256.0
  %v959 = vmul.f32 %v957, %v958
  %v960 = vmul.f32 %v824, %v824
  %v961 = vmul.f32 %v826, %v826
  %v962 = vadd.f32 %v960, %v961
  %963 = vadd.xlane.f32.xlu0 %v962
  %v964 = vpop.xlane.xlu0 %963
  %v965 = vmul.f32 %v964, %v958
  %v966 = vmul.f32 %v959, %v959
  %v967 = vsub.f32 %v965, %v966
  %v968 = vsub.f32 %v824, %v959
  %v969 = vsub.f32 %v826, %v959
  %v970 = vadd.f32 %v967, 1e-05
  %v971 = vrsqrt.pop %v970
  %v972 = vmul.f32 %v968, %v971
  %v973 = vmul.f32 %v969, %v971
  %v975 = vlaneseq
  %v976 = vshrl.u32 %v975, 7
  %v977 = vsub.s32 0, %v976
  %v978 = vrot.slane %v953, %v977
  %v979 = vlaneseq
  %v980 = vshrl.u32 %v979, 7
  %v981 = vsub.s32 1, %v980
  %v982 = vrot.slane %v953, %v981
  %v985 = vmul.f32 %v972, %v978
  %v986 = vmul.f32 %v973, %v982
  %v988 = vlaneseq
  %v989 = vshrl.u32 %v988, 7
  %v990 = vsub.s32 0, %v989
  %v991 = vrot.slane %v954, %v990
  %v992 = vlaneseq
  %v993 = vshrl.u32 %v992, 7
  %v994 = vsub.s32 1, %v993
  %v995 = vrot.slane %v954, %v994
  %v998 = vadd.f32 %v985, %v991
  %v999 = vadd.f32 %v986, %v995
  %1000 = vst [vmem:[%s4] sm:$0xff] %v998
  %1001 = vst [vmem:[%s4 + $0x8] sm:$0xff] %v999
  %v1002 = vadd.f32 %v865, %v867
  %1003 = vadd.xlane.f32.xlu0 %v1002
  %v1004 = vpop.xlane.xlu0 %1003
  %v1005 = vmul.f32 %v1004, %v958
  %v1006 = vmul.f32 %v865, %v865
  %v1007 = vmul.f32 %v867, %v867
  %v1008 = vadd.f32 %v1006, %v1007
  %1009 = vadd.xlane.f32.xlu0 %v1008
  %v1010 = vpop.xlane.xlu0 %1009
  %v1011 = vmul.f32 %v1010, %v958
  %v1012 = vmul.f32 %v1005, %v1005
  %v1013 = vsub.f32 %v1011, %v1012
  %v1014 = vsub.f32 %v865, %v1005
  %v1015 = vsub.f32 %v867, %v1005
  %v1016 = vadd.f32 %v1013, 1e-05
  %v1017 = vrsqrt.pop %v1016
  %v1018 = vmul.f32 %v1014, %v1017
  %v1019 = vmul.f32 %v1015, %v1017
  %v1020 = vmul.f32 %v1018, %v978
  %v1021 = vmul.f32 %v1019, %v982
  %v1022 = vadd.f32 %v1020, %v991
  %v1023 = vadd.f32 %v1021, %v995
  %1024 = vst [vmem:[%s4 + $0x10] sm:$0xff] %v1022
  %1025 = vst [vmem:[%s4 + $0x18] sm:$0xff] %v1023
  %v1026 = vadd.f32 %v906, %v908
  %1027 = vadd.xlane.f32.xlu0 %v1026
  %v1028 = vpop.xlane.xlu0 %1027
  %v1029 = vmul.f32 %v1028, %v958
  %v1030 = vmul.f32 %v906, %v906
  %v1031 = vmul.f32 %v908, %v908
  %v1032 = vadd.f32 %v1030, %v1031
  %1033 = vadd.xlane.f32.xlu0 %v1032
  %v1034 = vpop.xlane.xlu0 %1033
  %v1035 = vmul.f32 %v1034, %v958
  %v1036 = vmul.f32 %v1029, %v1029
  %v1037 = vsub.f32 %v1035, %v1036
  %v1038 = vsub.f32 %v906, %v1029
  %v1039 = vsub.f32 %v908, %v1029
  %v1040 = vadd.f32 %v1037, 1e-05
  %v1041 = vrsqrt.pop %v1040
  %v1042 = vmul.f32 %v1038, %v1041
  %v1043 = vmul.f32 %v1039, %v1041
  %v1044 = vmul.f32 %v1042, %v978
  %v1045 = vmul.f32 %v1043, %v982
  %v1046 = vadd.f32 %v1044, %v991
  %v1047 = vadd.f32 %v1045, %v995
  %1048 = vst [vmem:[%s4 + $0x20] sm:$0xff] %v1046
  %1049 = vst [vmem:[%s4 + $0x28] sm:$0xff] %v1047
  %v1050 = vadd.f32 %v947, %v949
  %1051 = vadd.xlane.f32.xlu0 %v1050
  %v1052 = vpop.xlane.xlu0 %1051
  %v1053 = vmul.f32 %v1052, %v958
  %v1054 = vmul.f32 %v947, %v947
  %v1055 = vmul.f32 %v949, %v949
  %v1056 = vadd.f32 %v1054, %v1055
  %1057 = vadd.xlane.f32.xlu0 %v1056
  %v1058 = vpop.xlane.xlu0 %1057
  %v1059 = vmul.f32 %v1058, %v958
  %v1060 = vmul.f32 %v1053, %v1053
  %v1061 = vsub.f32 %v1059, %v1060
  %v1062 = vsub.f32 %v947, %v1053
  %v1063 = vsub.f32 %v949, %v1053
  %v1064 = vadd.f32 %v1061, 1e-05
  %v1065 = vrsqrt.pop %v1064
  %v1066 = vmul.f32 %v1062, %v1065
  %v1067 = vmul.f32 %v1063, %v1065
  %v1068 = vmul.f32 %v1066, %v978
  %v1069 = vmul.f32 %v1067, %v982
  %v1070 = vadd.f32 %v1068, %v991
  %v1071 = vadd.f32 %v1069, %v995
  %1072 = vst [vmem:[%s4 + $0x30] sm:$0xff] %v1070
  %1073 = vst [vmem:[%s4 + $0x38] sm:$0xff] %v1071
  // Predicated region
  $region18: #{unet_forward.8} parent=0 // pred_check
    _
  $region19: #{unet_forward.8} parent=0 // pred_check_branch
    %1075 = sbr.rel (0) target = $region21
  $region20: #{unet_forward.8} parent=0 // pred_region
    _
  $region21: #{unet_forward.8} parent=0 // pred_fallthru
    _
  // Predicated region
  $region22: #{unet_forward.8} parent=0 // pred_check
    _
  $region23: #{unet_forward.8} parent=0 // pred_check_branch
    %1077 = sbr.rel (0) target = $region25
  $region24: #{unet_forward.8} parent=0 // pred_region
    _
  $region25: #{unet_forward.8} parent=0 // pred_fallthru
    _

// kernel: unet_forward.9
$region0: #{unet_forward.9}
  #allocation0 [shape = 'u32[]', space=smem, size = 0x4, offset = 0x4, fixed_abs, tag = 'smem constant byte address 0x4 - core index']
  #allocation1 [shape = 'u32[144,128]{1,0:T(1,128)}', space=vmem, size = 0x12000, scoped, tag = 'internal scratch']
  %s0 = inlined_call_operand.vmem [shape: f32[32,256], index: 0, kind: input, shape index: {}]
  %s1 = inlined_call_operand.vmem [shape: bf16[256,1024], index: 1, kind: input, shape index: {}]
  %s2 = inlined_call_operand.vmem [shape: f32[1,256], index: 2, kind: input, shape index: {}]
  %s3 = inlined_call_operand.vmem [shape: f32[1,256], index: 3, kind: input, shape index: {}]
  %s4 = inlined_call_operand.vmem [shape: f32[32,1024], index: 4, kind: output, shape index: {}]
  %s5 = sld [smem:[#allocation0]]
  $region26: #{unet_forward.9} parent=0
    _
  %s7 = ssub.s32 1, %s5
  %s8 = scalar_select 0, %s7, %s5
  // Predicated region
  $region2: #{unet_forward.9} parent=0 // pred_check
    _
  $region3: #{unet_forward.9} parent=0 // pred_check_branch
    %10 = sbr.rel (0) target = $region5
  $region4: #{unet_forward.9} parent=0 // pred_region
    _
  $region5: #{unet_forward.9} parent=0 // pred_fallthru
    _
  // Predicated region
  $region6: #{unet_forward.9} parent=0 // pred_check
    _
  $region7: #{unet_forward.9} parent=0 // pred_check_branch
    %12 = sbr.rel (0) target = $region9
  $region8: #{unet_forward.9} parent=0 // pred_region
    _
  $region9: #{unet_forward.9} parent=0 // pred_fallthru
    _
  // Predicated region
  $region10: #{unet_forward.9} parent=0 // pred_check
    _
  $region11: #{unet_forward.9} parent=0 // pred_check_branch
    %14 = sbr.rel (0) target = $region13
  $region12: #{unet_forward.9} parent=0 // pred_region
    _
  $region13: #{unet_forward.9} parent=0 // pred_fallthru
    _
  // Predicated region
  $region14: #{unet_forward.9} parent=0 // pred_check
    _
  $region15: #{unet_forward.9} parent=0 // pred_check_branch
    %16 = sbr.rel (0) target = $region17
  $region16: #{unet_forward.9} parent=0 // pred_region
    _
  $region17: #{unet_forward.9} parent=0 // pred_fallthru
    _
  %v17 = vld [vmem:[%s0] sm:$0xff]
  %v18 = vld [vmem:[%s0 + $0x8] sm:$0xff]
  %v19 = vld [vmem:[%s0 + $0x10] sm:$0xff]
  %v20 = vld [vmem:[%s0 + $0x18] sm:$0xff]
  %v21 = vld [vmem:[%s0 + $0x20] sm:$0xff]
  %v22 = vld [vmem:[%s0 + $0x28] sm:$0xff]
  %v23 = vld [vmem:[%s0 + $0x30] sm:$0xff]
  %v24 = vld [vmem:[%s0 + $0x38] sm:$0xff]
  %v25 = vpack.c.bf16 %v19, %v17
  %v26 = vpack.c.bf16 %v20, %v18
  %v27 = vpack.c.bf16 %v23, %v21
  %v28 = vpack.c.bf16 %v24, %v22
  %v29 = vld [vmem:[%s1] sm:$0xff]
  %v30 = vld [vmem:[%s1 + $0x8] sm:$0xff]
  %v31 = vld [vmem:[%s1 + $0x10] sm:$0xff]
  %v32 = vld [vmem:[%s1 + $0x18] sm:$0xff]
  %v33 = vld [vmem:[%s1 + $0x20] sm:$0xff]
  %v34 = vld [vmem:[%s1 + $0x28] sm:$0xff]
  %v35 = vld [vmem:[%s1 + $0x30] sm:$0xff]
  %v36 = vld [vmem:[%s1 + $0x38] sm:$0xff]
  %v37 = vld [vmem:[%s1 + $0x40] sm:$0xff]
  %v38 = vld [vmem:[%s1 + $0x48] sm:$0xff]
  %v39 = vld [vmem:[%s1 + $0x50] sm:$0xff]
  %v40 = vld [vmem:[%s1 + $0x58] sm:$0xff]
  %v41 = vld [vmem:[%s1 + $0x60] sm:$0xff]
  %v42 = vld [vmem:[%s1 + $0x68] sm:$0xff]
  %v43 = vld [vmem:[%s1 + $0x70] sm:$0xff]
  %v44 = vld [vmem:[%s1 + $0x78] sm:$0xff]
  %v45 = vld [vmem:[%s1 + $0x80] sm:$0xff]
  %v46 = vld [vmem:[%s1 + $0x88] sm:$0xff]
  %v47 = vld [vmem:[%s1 + $0x90] sm:$0xff]
  %v48 = vld [vmem:[%s1 + $0x98] sm:$0xff]
  %v49 = vld [vmem:[%s1 + $0xa0] sm:$0xff]
  %v50 = vld [vmem:[%s1 + $0xa8] sm:$0xff]
  %v51 = vld [vmem:[%s1 + $0xb0] sm:$0xff]
  %v52 = vld [vmem:[%s1 + $0xb8] sm:$0xff]
  %v53 = vld [vmem:[%s1 + $0xc0] sm:$0xff]
  %v54 = vld [vmem:[%s1 + $0xc8] sm:$0xff]
  %v55 = vld [vmem:[%s1 + $0xd0] sm:$0xff]
  %v56 = vld [vmem:[%s1 + $0xd8] sm:$0xff]
  %v57 = vld [vmem:[%s1 + $0xe0] sm:$0xff]
  %v58 = vld [vmem:[%s1 + $0xe8] sm:$0xff]
  %v59 = vld [vmem:[%s1 + $0xf0] sm:$0xff]
  %v60 = vld [vmem:[%s1 + $0xf8] sm:$0xff]
  %v61 = vld [vmem:[%s1 + $0x100] sm:$0xff]
  %v62 = vld [vmem:[%s1 + $0x108] sm:$0xff]
  %v63 = vld [vmem:[%s1 + $0x110] sm:$0xff]
  %v64 = vld [vmem:[%s1 + $0x118] sm:$0xff]
  %v65 = vld [vmem:[%s1 + $0x120] sm:$0xff]
  %v66 = vld [vmem:[%s1 + $0x128] sm:$0xff]
  %v67 = vld [vmem:[%s1 + $0x130] sm:$0xff]
  %v68 = vld [vmem:[%s1 + $0x138] sm:$0xff]
  %v69 = vld [vmem:[%s1 + $0x140] sm:$0xff]
  %v70 = vld [vmem:[%s1 + $0x148] sm:$0xff]
  %v71 = vld [vmem:[%s1 + $0x150] sm:$0xff]
  %v72 = vld [vmem:[%s1 + $0x158] sm:$0xff]
  %v73 = vld [vmem:[%s1 + $0x160] sm:$0xff]
  %v74 = vld [vmem:[%s1 + $0x168] sm:$0xff]
  %v75 = vld [vmem:[%s1 + $0x170] sm:$0xff]
  %v76 = vld [vmem:[%s1 + $0x178] sm:$0xff]
  %v77 = vld [vmem:[%s1 + $0x180] sm:$0xff]
  %v78 = vld [vmem:[%s1 + $0x188] sm:$0xff]
  %v79 = vld [vmem:[%s1 + $0x190] sm:$0xff]
  %v80 = vld [vmem:[%s1 + $0x198] sm:$0xff]
  %v81 = vld [vmem:[%s1 + $0x1a0] sm:$0xff]
  %v82 = vld [vmem:[%s1 + $0x1a8] sm:$0xff]
  %v83 = vld [vmem:[%s1 + $0x1b0] sm:$0xff]
  %v84 = vld [vmem:[%s1 + $0x1b8] sm:$0xff]
  %v85 = vld [vmem:[%s1 + $0x1c0] sm:$0xff]
  %v86 = vld [vmem:[%s1 + $0x1c8] sm:$0xff]
  %v87 = vld [vmem:[%s1 + $0x1d0] sm:$0xff]
  %v88 = vld [vmem:[%s1 + $0x1d8] sm:$0xff]
  %v89 = vld [vmem:[%s1 + $0x1e0] sm:$0xff]
  %v90 = vld [vmem:[%s1 + $0x1e8] sm:$0xff]
  %v91 = vld [vmem:[%s1 + $0x1f0] sm:$0xff]
  %v92 = vld [vmem:[%s1 + $0x1f8] sm:$0xff]
  %v93 = vld [vmem:[%s1 + $0x200] sm:$0xff]
  %v94 = vld [vmem:[%s1 + $0x208] sm:$0xff]
  %v95 = vld [vmem:[%s1 + $0x210] sm:$0xff]
  %v96 = vld [vmem:[%s1 + $0x218] sm:$0xff]
  %v97 = vld [vmem:[%s1 + $0x220] sm:$0xff]
  %v98 = vld [vmem:[%s1 + $0x228] sm:$0xff]
  %v99 = vld [vmem:[%s1 + $0x230] sm:$0xff]
  %v100 = vld [vmem:[%s1 + $0x238] sm:$0xff]
  %v101 = vld [vmem:[%s1 + $0x240] sm:$0xff]
  %v102 = vld [vmem:[%s1 + $0x248] sm:$0xff]
  %v103 = vld [vmem:[%s1 + $0x250] sm:$0xff]
  %v104 = vld [vmem:[%s1 + $0x258] sm:$0xff]
  %v105 = vld [vmem:[%s1 + $0x260] sm:$0xff]
  %v106 = vld [vmem:[%s1 + $0x268] sm:$0xff]
  %v107 = vld [vmem:[%s1 + $0x270] sm:$0xff]
  %v108 = vld [vmem:[%s1 + $0x278] sm:$0xff]
  %v109 = vld [vmem:[%s1 + $0x280] sm:$0xff]
  %v110 = vld [vmem:[%s1 + $0x288] sm:$0xff]
  %v111 = vld [vmem:[%s1 + $0x290] sm:$0xff]
  %v112 = vld [vmem:[%s1 + $0x298] sm:$0xff]
  %v113 = vld [vmem:[%s1 + $0x2a0] sm:$0xff]
  %v114 = vld [vmem:[%s1 + $0x2a8] sm:$0xff]
  %v115 = vld [vmem:[%s1 + $0x2b0] sm:$0xff]
  %v116 = vld [vmem:[%s1 + $0x2b8] sm:$0xff]
  %v117 = vld [vmem:[%s1 + $0x2c0] sm:$0xff]
  %v118 = vld [vmem:[%s1 + $0x2c8] sm:$0xff]
  %v119 = vld [vmem:[%s1 + $0x2d0] sm:$0xff]
  %v120 = vld [vmem:[%s1 + $0x2d8] sm:$0xff]
  %v121 = vld [vmem:[%s1 + $0x2e0] sm:$0xff]
  %v122 = vld [vmem:[%s1 + $0x2e8] sm:$0xff]
  %v123 = vld [vmem:[%s1 + $0x2f0] sm:$0xff]
  %v124 = vld [vmem:[%s1 + $0x2f8] sm:$0xff]
  %v125 = vld [vmem:[%s1 + $0x300] sm:$0xff]
  %v126 = vld [vmem:[%s1 + $0x308] sm:$0xff]
  %v127 = vld [vmem:[%s1 + $0x310] sm:$0xff]
  %v128 = vld [vmem:[%s1 + $0x318] sm:$0xff]
  %v129 = vld [vmem:[%s1 + $0x320] sm:$0xff]
  %v130 = vld [vmem:[%s1 + $0x328] sm:$0xff]
  %v131 = vld [vmem:[%s1 + $0x330] sm:$0xff]
  %v132 = vld [vmem:[%s1 + $0x338] sm:$0xff]
  %v133 = vld [vmem:[%s1 + $0x340] sm:$0xff]
  %v134 = vld [vmem:[%s1 + $0x348] sm:$0xff]
  %v135 = vld [vmem:[%s1 + $0x350] sm:$0xff]
  %v136 = vld [vmem:[%s1 + $0x358] sm:$0xff]
  %v137 = vld [vmem:[%s1 + $0x360] sm:$0xff]
  %v138 = vld [vmem:[%s1 + $0x368] sm:$0xff]
  %v139 = vld [vmem:[%s1 + $0x370] sm:$0xff]
  %v140 = vld [vmem:[%s1 + $0x378] sm:$0xff]
  %v141 = vld [vmem:[%s1 + $0x380] sm:$0xff]
  %v142 = vld [vmem:[%s1 + $0x388] sm:$0xff]
  %v143 = vld [vmem:[%s1 + $0x390] sm:$0xff]
  %v144 = vld [vmem:[%s1 + $0x398] sm:$0xff]
  %v145 = vld [vmem:[%s1 + $0x3a0] sm:$0xff]
  %v146 = vld [vmem:[%s1 + $0x3a8] sm:$0xff]
  %v147 = vld [vmem:[%s1 + $0x3b0] sm:$0xff]
  %v148 = vld [vmem:[%s1 + $0x3b8] sm:$0xff]
  %v149 = vld [vmem:[%s1 + $0x3c0] sm:$0xff]
  %v150 = vld [vmem:[%s1 + $0x3c8] sm:$0xff]
  %v151 = vld [vmem:[%s1 + $0x3d0] sm:$0xff]
  %v152 = vld [vmem:[%s1 + $0x3d8] sm:$0xff]
  %v153 = vld [vmem:[%s1 + $0x3e0] sm:$0xff]
  %v154 = vld [vmem:[%s1 + $0x3e8] sm:$0xff]
  %v155 = vld [vmem:[%s1 + $0x3f0] sm:$0xff]
  %v156 = vld [vmem:[%s1 + $0x3f8] sm:$0xff]
  %v285 = vunpack.c.l.b16 %v29
  %v286 = vunpack.c.h.b16 %v29
  %v287 = vunpack.c.l.b16 %v30
  %v288 = vunpack.c.h.b16 %v30
  %v289 = vunpack.c.l.b16 %v31
  %v290 = vunpack.c.h.b16 %v31
  %v291 = vunpack.c.l.b16 %v32
  %v292 = vunpack.c.h.b16 %v32
  %v293 = vunpack.c.l.b16 %v33
  %v294 = vunpack.c.h.b16 %v33
  %v295 = vunpack.c.l.b16 %v34
  %v296 = vunpack.c.h.b16 %v34
  %v297 = vunpack.c.l.b16 %v35
  %v298 = vunpack.c.h.b16 %v35
  %v299 = vunpack.c.l.b16 %v36
  %v300 = vunpack.c.h.b16 %v36
  %v301 = vunpack.c.l.b16 %v37
  %v302 = vunpack.c.h.b16 %v37
  %v303 = vunpack.c.l.b16 %v38
  %v304 = vunpack.c.h.b16 %v38
  %v305 = vunpack.c.l.b16 %v39
  %v306 = vunpack.c.h.b16 %v39
  %v307 = vunpack.c.l.b16 %v40
  %v308 = vunpack.c.h.b16 %v40
  %v309 = vunpack.c.l.b16 %v41
  %v310 = vunpack.c.h.b16 %v41
  %v311 = vunpack.c.l.b16 %v42
  %v312 = vunpack.c.h.b16 %v42
  %v313 = vunpack.c.l.b16 %v43
  %v314 = vunpack.c.h.b16 %v43
  %v315 = vunpack.c.l.b16 %v44
  %v316 = vunpack.c.h.b16 %v44
  %v317 = vunpack.c.l.b16 %v45
  %v318 = vunpack.c.h.b16 %v45
  %v319 = vunpack.c.l.b16 %v46
  %v320 = vunpack.c.h.b16 %v46
  %v321 = vunpack.c.l.b16 %v47
  %v322 = vunpack.c.h.b16 %v47
  %v323 = vunpack.c.l.b16 %v48
  %v324 = vunpack.c.h.b16 %v48
  %v325 = vunpack.c.l.b16 %v49
  %v326 = vunpack.c.h.b16 %v49
  %v327 = vunpack.c.l.b16 %v50
  %v328 = vunpack.c.h.b16 %v50
  %v329 = vunpack.c.l.b16 %v51
  %v330 = vunpack.c.h.b16 %v51
  %v331 = vunpack.c.l.b16 %v52
  %v332 = vunpack.c.h.b16 %v52
  %v333 = vunpack.c.l.b16 %v53
  %v334 = vunpack.c.h.b16 %v53
  %v335 = vunpack.c.l.b16 %v54
  %v336 = vunpack.c.h.b16 %v54
  %v337 = vunpack.c.l.b16 %v55
  %v338 = vunpack.c.h.b16 %v55
  %v339 = vunpack.c.l.b16 %v56
  %v340 = vunpack.c.h.b16 %v56
  %v341 = vunpack.c.l.b16 %v57
  %v342 = vunpack.c.h.b16 %v57
  %v343 = vunpack.c.l.b16 %v58
  %v344 = vunpack.c.h.b16 %v58
  %v345 = vunpack.c.l.b16 %v59
  %v346 = vunpack.c.h.b16 %v59
  %v347 = vunpack.c.l.b16 %v60
  %v348 = vunpack.c.h.b16 %v60
  %v349 = vunpack.c.l.b16 %v61
  %v350 = vunpack.c.h.b16 %v61
  %v351 = vunpack.c.l.b16 %v62
  %v352 = vunpack.c.h.b16 %v62
  %v353 = vunpack.c.l.b16 %v63
  %v354 = vunpack.c.h.b16 %v63
  %v355 = vunpack.c.l.b16 %v64
  %v356 = vunpack.c.h.b16 %v64
  %v357 = vunpack.c.l.b16 %v65
  %v358 = vunpack.c.h.b16 %v65
  %v359 = vunpack.c.l.b16 %v66
  %v360 = vunpack.c.h.b16 %v66
  %v361 = vunpack.c.l.b16 %v67
  %v362 = vunpack.c.h.b16 %v67
  %v363 = vunpack.c.l.b16 %v68
  %v364 = vunpack.c.h.b16 %v68
  %v365 = vunpack.c.l.b16 %v69
  %v366 = vunpack.c.h.b16 %v69
  %v367 = vunpack.c.l.b16 %v70
  %v368 = vunpack.c.h.b16 %v70
  %v369 = vunpack.c.l.b16 %v71
  %v370 = vunpack.c.h.b16 %v71
  %v371 = vunpack.c.l.b16 %v72
  %v372 = vunpack.c.h.b16 %v72
  %v373 = vunpack.c.l.b16 %v73
  %v374 = vunpack.c.h.b16 %v73
  %v375 = vunpack.c.l.b16 %v74
  %v376 = vunpack.c.h.b16 %v74
  %v377 = vunpack.c.l.b16 %v75
  %v378 = vunpack.c.h.b16 %v75
  %v379 = vunpack.c.l.b16 %v76
  %v380 = vunpack.c.h.b16 %v76
  %v381 = vunpack.c.l.b16 %v77
  %v382 = vunpack.c.h.b16 %v77
  %v383 = vunpack.c.l.b16 %v78
  %v384 = vunpack.c.h.b16 %v78
  %v385 = vunpack.c.l.b16 %v79
  %v386 = vunpack.c.h.b16 %v79
  %v387 = vunpack.c.l.b16 %v80
  %v388 = vunpack.c.h.b16 %v80
  %v389 = vunpack.c.l.b16 %v81
  %v390 = vunpack.c.h.b16 %v81
  %v391 = vunpack.c.l.b16 %v82
  %v392 = vunpack.c.h.b16 %v82
  %v393 = vunpack.c.l.b16 %v83
  %v394 = vunpack.c.h.b16 %v83
  %v395 = vunpack.c.l.b16 %v84
  %v396 = vunpack.c.h.b16 %v84
  %v397 = vunpack.c.l.b16 %v85
  %v398 = vunpack.c.h.b16 %v85
  %v399 = vunpack.c.l.b16 %v86
  %v400 = vunpack.c.h.b16 %v86
  %v401 = vunpack.c.l.b16 %v87
  %v402 = vunpack.c.h.b16 %v87
  %v403 = vunpack.c.l.b16 %v88
  %v404 = vunpack.c.h.b16 %v88
  %v405 = vunpack.c.l.b16 %v89
  %v406 = vunpack.c.h.b16 %v89
  %v407 = vunpack.c.l.b16 %v90
  %v408 = vunpack.c.h.b16 %v90
  %v409 = vunpack.c.l.b16 %v91
  %v410 = vunpack.c.h.b16 %v91
  %v411 = vunpack.c.l.b16 %v92
  %v412 = vunpack.c.h.b16 %v92
  %v413 = vunpack.c.l.b16 %v93
  %v414 = vunpack.c.h.b16 %v93
  %v415 = vunpack.c.l.b16 %v94
  %v416 = vunpack.c.h.b16 %v94
  %v417 = vunpack.c.l.b16 %v95
  %v418 = vunpack.c.h.b16 %v95
  %v419 = vunpack.c.l.b16 %v96
  %v420 = vunpack.c.h.b16 %v96
  %v421 = vunpack.c.l.b16 %v97
  %v422 = vunpack.c.h.b16 %v97
  %v423 = vunpack.c.l.b16 %v98
  %v424 = vunpack.c.h.b16 %v98
  %v425 = vunpack.c.l.b16 %v99
  %v426 = vunpack.c.h.b16 %v99
  %v427 = vunpack.c.l.b16 %v100
  %v428 = vunpack.c.h.b16 %v100
  %v429 = vunpack.c.l.b16 %v101
  %v430 = vunpack.c.h.b16 %v101
  %v431 = vunpack.c.l.b16 %v102
  %v432 = vunpack.c.h.b16 %v102
  %v433 = vunpack.c.l.b16 %v103
  %v434 = vunpack.c.h.b16 %v103
  %v435 = vunpack.c.l.b16 %v104
  %v436 = vunpack.c.h.b16 %v104
  %v437 = vunpack.c.l.b16 %v105
  %v438 = vunpack.c.h.b16 %v105
  %v439 = vunpack.c.l.b16 %v106
  %v440 = vunpack.c.h.b16 %v106
  %v441 = vunpack.c.l.b16 %v107
  %v442 = vunpack.c.h.b16 %v107
  %v443 = vunpack.c.l.b16 %v108
  %v444 = vunpack.c.h.b16 %v108
  %v445 = vunpack.c.l.b16 %v109
  %v446 = vunpack.c.h.b16 %v109
  %v447 = vunpack.c.l.b16 %v110
  %v448 = vunpack.c.h.b16 %v110
  %v449 = vunpack.c.l.b16 %v111
  %v450 = vunpack.c.h.b16 %v111
  %v451 = vunpack.c.l.b16 %v112
  %v452 = vunpack.c.h.b16 %v112
  %v453 = vunpack.c.l.b16 %v113
  %v454 = vunpack.c.h.b16 %v113
  %v455 = vunpack.c.l.b16 %v114
  %v456 = vunpack.c.h.b16 %v114
  %v457 = vunpack.c.l.b16 %v115
  %v458 = vunpack.c.h.b16 %v115
  %v459 = vunpack.c.l.b16 %v116
  %v460 = vunpack.c.h.b16 %v116
  %v461 = vunpack.c.l.b16 %v117
  %v462 = vunpack.c.h.b16 %v117
  %v463 = vunpack.c.l.b16 %v118
  %v464 = vunpack.c.h.b16 %v118
  %v465 = vunpack.c.l.b16 %v119
  %v466 = vunpack.c.h.b16 %v119
  %v467 = vunpack.c.l.b16 %v120
  %v468 = vunpack.c.h.b16 %v120
  %v469 = vunpack.c.l.b16 %v121
  %v470 = vunpack.c.h.b16 %v121
  %v471 = vunpack.c.l.b16 %v122
  %v472 = vunpack.c.h.b16 %v122
  %v473 = vunpack.c.l.b16 %v123
  %v474 = vunpack.c.h.b16 %v123
  %v475 = vunpack.c.l.b16 %v124
  %v476 = vunpack.c.h.b16 %v124
  %v477 = vunpack.c.l.b16 %v125
  %v478 = vunpack.c.h.b16 %v125
  %v479 = vunpack.c.l.b16 %v126
  %v480 = vunpack.c.h.b16 %v126
  %v481 = vunpack.c.l.b16 %v127
  %v482 = vunpack.c.h.b16 %v127
  %v483 = vunpack.c.l.b16 %v128
  %v484 = vunpack.c.h.b16 %v128
  %v485 = vunpack.c.l.b16 %v129
  %v486 = vunpack.c.h.b16 %v129
  %v487 = vunpack.c.l.b16 %v130
  %v488 = vunpack.c.h.b16 %v130
  %v489 = vunpack.c.l.b16 %v131
  %v490 = vunpack.c.h.b16 %v131
  %v491 = vunpack.c.l.b16 %v132
  %v492 = vunpack.c.h.b16 %v132
  %v493 = vunpack.c.l.b16 %v133
  %v494 = vunpack.c.h.b16 %v133
  %v495 = vunpack.c.l.b16 %v134
  %v496 = vunpack.c.h.b16 %v134
  %v497 = vunpack.c.l.b16 %v135
  %v498 = vunpack.c.h.b16 %v135
  %v499 = vunpack.c.l.b16 %v136
  %v500 = vunpack.c.h.b16 %v136
  %v501 = vunpack.c.l.b16 %v137
  %v502 = vunpack.c.h.b16 %v137
  %v503 = vunpack.c.l.b16 %v138
  %v504 = vunpack.c.h.b16 %v138
  %v505 = vunpack.c.l.b16 %v139
  %v506 = vunpack.c.h.b16 %v139
  %v507 = vunpack.c.l.b16 %v140
  %v508 = vunpack.c.h.b16 %v140
  %v509 = vunpack.c.l.b16 %v141
  %v510 = vunpack.c.h.b16 %v141
  %v511 = vunpack.c.l.b16 %v142
  %v512 = vunpack.c.h.b16 %v142
  %v513 = vunpack.c.l.b16 %v143
  %v514 = vunpack.c.h.b16 %v143
  %v515 = vunpack.c.l.b16 %v144
  %v516 = vunpack.c.h.b16 %v144
  %v517 = vunpack.c.l.b16 %v145
  %v518 = vunpack.c.h.b16 %v145
  %v519 = vunpack.c.l.b16 %v146
  %v520 = vunpack.c.h.b16 %v146
  %v521 = vunpack.c.l.b16 %v147
  %v522 = vunpack.c.h.b16 %v147
  %v523 = vunpack.c.l.b16 %v148
  %v524 = vunpack.c.h.b16 %v148
  %v525 = vunpack.c.l.b16 %v149
  %v526 = vunpack.c.h.b16 %v149
  %v527 = vunpack.c.l.b16 %v150
  %v528 = vunpack.c.h.b16 %v150
  %v529 = vunpack.c.l.b16 %v151
  %v530 = vunpack.c.h.b16 %v151
  %v531 = vunpack.c.l.b16 %v152
  %v532 = vunpack.c.h.b16 %v152
  %v533 = vunpack.c.l.b16 %v153
  %v534 = vunpack.c.h.b16 %v153
  %v535 = vunpack.c.l.b16 %v154
  %v536 = vunpack.c.h.b16 %v154
  %v537 = vunpack.c.l.b16 %v155
  %v538 = vunpack.c.h.b16 %v155
  %v539 = vunpack.c.l.b16 %v156
  %v540 = vunpack.c.h.b16 %v156
  %v541 = vpack.c.b16 %v293, %v285
  %v542 = vpack.c.b16 %v294, %v286
  %v543 = vpack.c.b16 %v295, %v287
  %v544 = vpack.c.b16 %v296, %v288
  %v545 = vpack.c.b16 %v297, %v289
  %v546 = vpack.c.b16 %v298, %v290
  %v547 = vpack.c.b16 %v299, %v291
  %v548 = vpack.c.b16 %v300, %v292
  %v549 = vpack.c.b16 %v309, %v301
  %v550 = vpack.c.b16 %v310, %v302
  %v551 = vpack.c.b16 %v311, %v303
  %v552 = vpack.c.b16 %v312, %v304
  %v553 = vpack.c.b16 %v313, %v305
  %v554 = vpack.c.b16 %v314, %v306
  %v555 = vpack.c.b16 %v315, %v307
  %v556 = vpack.c.b16 %v316, %v308
  %v557 = vpack.c.b16 %v325, %v317
  %v558 = vpack.c.b16 %v326, %v318
  %v559 = vpack.c.b16 %v327, %v319
  %v560 = vpack.c.b16 %v328, %v320
  %v561 = vpack.c.b16 %v329, %v321
  %v562 = vpack.c.b16 %v330, %v322
  %v563 = vpack.c.b16 %v331, %v323
  %v564 = vpack.c.b16 %v332, %v324
  %v565 = vpack.c.b16 %v341, %v333
  %v566 = vpack.c.b16 %v342, %v334
  %v567 = vpack.c.b16 %v343, %v335
  %v568 = vpack.c.b16 %v344, %v336
  %v569 = vpack.c.b16 %v345, %v337
  %v570 = vpack.c.b16 %v346, %v338
  %v571 = vpack.c.b16 %v347, %v339
  %v572 = vpack.c.b16 %v348, %v340
  %v573 = vpack.c.b16 %v357, %v349
  %v574 = vpack.c.b16 %v358, %v350
  %v575 = vpack.c.b16 %v359, %v351
  %v576 = vpack.c.b16 %v360, %v352
  %v577 = vpack.c.b16 %v361, %v353
  %v578 = vpack.c.b16 %v362, %v354
  %v579 = vpack.c.b16 %v363, %v355
  %v580 = vpack.c.b16 %v364, %v356
  %v581 = vpack.c.b16 %v373, %v365
  %v582 = vpack.c.b16 %v374, %v366
  %v583 = vpack.c.b16 %v375, %v367
  %v584 = vpack.c.b16 %v376, %v368
  %v585 = vpack.c.b16 %v377, %v369
  %v586 = vpack.c.b16 %v378, %v370
  %v587 = vpack.c.b16 %v379, %v371
  %v588 = vpack.c.b16 %v380, %v372
  %v589 = vpack.c.b16 %v389, %v381
  %v590 = vpack.c.b16 %v390, %v382
  %v591 = vpack.c.b16 %v391, %v383
  %v592 = vpack.c.b16 %v392, %v384
  %v593 = vpack.c.b16 %v393, %v385
  %v594 = vpack.c.b16 %v394, %v386
  %v595 = vpack.c.b16 %v395, %v387
  %v596 = vpack.c.b16 %v396, %v388
  %v597 = vpack.c.b16 %v405, %v397
  %v598 = vpack.c.b16 %v406, %v398
  %v599 = vpack.c.b16 %v407, %v399
  %v600 = vpack.c.b16 %v408, %v400
  %v601 = vpack.c.b16 %v409, %v401
  %v602 = vpack.c.b16 %v410, %v402
  %v603 = vpack.c.b16 %v411, %v403
  %v604 = vpack.c.b16 %v412, %v404
  %v605 = vpack.c.b16 %v421, %v413
  %v606 = vpack.c.b16 %v422, %v414
  %v607 = vpack.c.b16 %v423, %v415
  %v608 = vpack.c.b16 %v424, %v416
  %v609 = vpack.c.b16 %v425, %v417
  %v610 = vpack.c.b16 %v426, %v418
  %v611 = vpack.c.b16 %v427, %v419
  %v612 = vpack.c.b16 %v428, %v420
  %v613 = vpack.c.b16 %v437, %v429
  %v614 = vpack.c.b16 %v438, %v430
  %v615 = vpack.c.b16 %v439, %v431
  %v616 = vpack.c.b16 %v440, %v432
  %v617 = vpack.c.b16 %v441, %v433
  %v618 = vpack.c.b16 %v442, %v434
  %v619 = vpack.c.b16 %v443, %v435
  %v620 = vpack.c.b16 %v444, %v436
  %v621 = vpack.c.b16 %v453, %v445
  %v622 = vpack.c.b16 %v454, %v446
  %v623 = vpack.c.b16 %v455, %v447
  %v624 = vpack.c.b16 %v456, %v448
  %v625 = vpack.c.b16 %v457, %v449
  %v626 = vpack.c.b16 %v458, %v450
  %v627 = vpack.c.b16 %v459, %v451
  %v628 = vpack.c.b16 %v460, %v452
  %v629 = vpack.c.b16 %v469, %v461
  %v630 = vpack.c.b16 %v470, %v462
  %v631 = vpack.c.b16 %v471, %v463
  %v632 = vpack.c.b16 %v472, %v464
  %v633 = vpack.c.b16 %v473, %v465
  %v634 = vpack.c.b16 %v474, %v466
  %v635 = vpack.c.b16 %v475, %v467
  %v636 = vpack.c.b16 %v476, %v468
  %v637 = vpack.c.b16 %v485, %v477
  %v638 = vpack.c.b16 %v486, %v478
  %v639 = vpack.c.b16 %v487, %v479
  %v640 = vpack.c.b16 %v488, %v480
  %v641 = vpack.c.b16 %v489, %v481
  %v642 = vpack.c.b16 %v490, %v482
  %v643 = vpack.c.b16 %v491, %v483
  %v644 = vpack.c.b16 %v492, %v484
  %v645 = vpack.c.b16 %v501, %v493
  %v646 = vpack.c.b16 %v502, %v494
  %v647 = vpack.c.b16 %v503, %v495
  %v648 = vpack.c.b16 %v504, %v496
  %v649 = vpack.c.b16 %v505, %v497
  %v650 = vpack.c.b16 %v506, %v498
  %v651 = vpack.c.b16 %v507, %v499
  %v652 = vpack.c.b16 %v508, %v500
  %v653 = vpack.c.b16 %v517, %v509
  %v654 = vpack.c.b16 %v518, %v510
  %v655 = vpack.c.b16 %v519, %v511
  %v656 = vpack.c.b16 %v520, %v512
  %v657 = vpack.c.b16 %v521, %v513
  %v658 = vpack.c.b16 %v522, %v514
  %v659 = vpack.c.b16 %v523, %v515
  %v660 = vpack.c.b16 %v524, %v516
  %v661 = vpack.c.b16 %v533, %v525
  %v662 = vpack.c.b16 %v534, %v526
  %v663 = vpack.c.b16 %v535, %v527
  %v664 = vpack.c.b16 %v536, %v528
  %v665 = vpack.c.b16 %v537, %v529
  %v666 = vpack.c.b16 %v538, %v530
  %v667 = vpack.c.b16 %v539, %v531
  %v668 = vpack.c.b16 %v540, %v532
  %797 = vmatprep.subr.bf16.mxu0 %v598
  %798 = vmatpush1.bf16.msra.mxu0 %v597
  %799 = vmatprep.subr.bf16.mxu0 %v590
  %800 = vmatpush1.bf16.msra.mxu0 %v589
  %801 = vmatprep.subr.bf16.mxu0 %v582
  %802 = vmatpush1.bf16.msra.mxu0 %v581
  %803 = vmatprep.subr.bf16.mxu0 %v574
  %804 = vmatpush1.bf16.msra.mxu0 %v573
  %805 = vmatprep.subr.bf16.mxu0 %v566
  %806 = vmatpush1.bf16.msra.mxu0 %v565
  %807 = vmatprep.subr.bf16.mxu0 %v558
  %808 = vmatpush1.bf16.msra.mxu0 %v557
  %809 = vmatprep.subr.bf16.mxu0 %v550
  %810 = vmatpush1.bf16.msra.mxu0 %v549
  %811 = vmatprep.subr.bf16.mxu0 %v542
  %812 = vmatpush1.bf16.msra.mxu0 %v541
  %813 = vmatprep.subr.bf16.mxu0 %v662
  %814 = vmatpush2.bf16.msra.mxu0 %v661
  %815 = vmatprep.subr.bf16.mxu0 %v654
  %816 = vmatpush2.bf16.msra.mxu0 %v653
  %817 = vmatprep.subr.bf16.mxu0 %v646
  %818 = vmatpush2.bf16.msra.mxu0 %v645
  %819 = vmatprep.subr.bf16.mxu0 %v638
  %820 = vmatpush2.bf16.msra.mxu0 %v637
  %821 = vmatprep.subr.bf16.mxu0 %v630
  %822 = vmatpush2.bf16.msra.mxu0 %v629
  %823 = vmatprep.subr.bf16.mxu0 %v622
  %824 = vmatpush2.bf16.msra.mxu0 %v621
  %825 = vmatprep.subr.bf16.mxu0 %v614
  %826 = vmatpush2.bf16.msra.mxu0 %v613
  %827 = vmatprep.subr.bf16.mxu0 %v606
  %828 = vmatpush2.bf16.msra.mxu0 %v605
  %829 = vmatprep.mubr.bf16.mxu0 %v26
  %830 = vmatmul.mubr.bf16.gmra.mxu0 %v25
  %v831 = vpop.f32.mrf.mxu0
  %v832 = vadd.f32 0.0, %v831
  %v833 = vpop.f32.mrf.mxu0
  %v834 = vadd.f32 0.0, %v833
  %v835 = vpop.f32.mrf.mxu0
  %v836 = vadd.f32 0.0, %v835
  %v837 = vpop.f32.mrf.mxu0
  %v838 = vadd.f32 0.0, %v837
  %839 = vmatprep.mubr.bf16.mxu0 %v28
  %840 = vmatmul.mubr.bf16.gmra.mxu0 %v27
  %v841 = vpop.f32.mrf.mxu0
  %v842 = vadd.f32 0.0, %v841
  %v843 = vpop.f32.mrf.mxu0
  %v844 = vadd.f32 0.0, %v843
  %v845 = vpop.f32.mrf.mxu0
  %v846 = vadd.f32 0.0, %v845
  %v847 = vpop.f32.mrf.mxu0
  %v848 = vadd.f32 0.0, %v847
  %849 = vdwg.mxu0
  %850 = vmatprep.subr.bf16.mxu0 %v600
  %851 = vmatpush1.bf16.msra.mxu0 %v599
  %852 = vmatprep.subr.bf16.mxu0 %v592
  %853 = vmatpush1.bf16.msra.mxu0 %v591
  %854 = vmatprep.subr.bf16.mxu0 %v584
  %855 = vmatpush1.bf16.msra.mxu0 %v583
  %856 = vmatprep.subr.bf16.mxu0 %v576
  %857 = vmatpush1.bf16.msra.mxu0 %v575
  %858 = vmatprep.subr.bf16.mxu0 %v568
  %859 = vmatpush1.bf16.msra.mxu0 %v567
  %860 = vmatprep.subr.bf16.mxu0 %v560
  %861 = vmatpush1.bf16.msra.mxu0 %v559
  %862 = vmatprep.subr.bf16.mxu0 %v552
  %863 = vmatpush1.bf16.msra.mxu0 %v551
  %864 = vmatprep.subr.bf16.mxu0 %v544
  %865 = vmatpush1.bf16.msra.mxu0 %v543
  %866 = vmatprep.subr.bf16.mxu0 %v664
  %867 = vmatpush2.bf16.msra.mxu0 %v663
  %868 = vmatprep.subr.bf16.mxu0 %v656
  %869 = vmatpush2.bf16.msra.mxu0 %v655
  %870 = vmatprep.subr.bf16.mxu0 %v648
  %871 = vmatpush2.bf16.msra.mxu0 %v647
  %872 = vmatprep.subr.bf16.mxu0 %v640
  %873 = vmatpush2.bf16.msra.mxu0 %v639
  %874 = vmatprep.subr.bf16.mxu0 %v632
  %875 = vmatpush2.bf16.msra.mxu0 %v631
  %876 = vmatprep.subr.bf16.mxu0 %v624
  %877 = vmatpush2.bf16.msra.mxu0 %v623
  %878 = vmatprep.subr.bf16.mxu0 %v616
  %879 = vmatpush2.bf16.msra.mxu0 %v615
  %880 = vmatprep.subr.bf16.mxu0 %v608
  %881 = vmatpush2.bf16.msra.mxu0 %v607
  %882 = vmatprep.mubr.bf16.mxu0 %v26
  %883 = vmatmul.mubr.bf16.gmra.mxu0 %v25
  %v884 = vpop.f32.mrf.mxu0
  %v885 = vadd.f32 0.0, %v884
  %v886 = vpop.f32.mrf.mxu0
  %v887 = vadd.f32 0.0, %v886
  %v888 = vpop.f32.mrf.mxu0
  %v889 = vadd.f32 0.0, %v888
  %v890 = vpop.f32.mrf.mxu0
  %v891 = vadd.f32 0.0, %v890
  %892 = vmatprep.mubr.bf16.mxu0 %v28
  %893 = vmatmul.mubr.bf16.gmra.mxu0 %v27
  %v894 = vpop.f32.mrf.mxu0
  %v895 = vadd.f32 0.0, %v894
  %v896 = vpop.f32.mrf.mxu0
  %v897 = vadd.f32 0.0, %v896
  %v898 = vpop.f32.mrf.mxu0
  %v899 = vadd.f32 0.0, %v898
  %v900 = vpop.f32.mrf.mxu0
  %v901 = vadd.f32 0.0, %v900
  %902 = vdwg.mxu0
  %903 = vmatprep.subr.bf16.mxu0 %v602
  %904 = vmatpush1.bf16.msra.mxu0 %v601
  %905 = vmatprep.subr.bf16.mxu0 %v594
  %906 = vmatpush1.bf16.msra.mxu0 %v593
  %907 = vmatprep.subr.bf16.mxu0 %v586
  %908 = vmatpush1.bf16.msra.mxu0 %v585
  %909 = vmatprep.subr.bf16.mxu0 %v578
  %910 = vmatpush1.bf16.msra.mxu0 %v577
  %911 = vmatprep.subr.bf16.mxu0 %v570
  %912 = vmatpush1.bf16.msra.mxu0 %v569
  %913 = vmatprep.subr.bf16.mxu0 %v562
  %914 = vmatpush1.bf16.msra.mxu0 %v561
  %915 = vmatprep.subr.bf16.mxu0 %v554
  %916 = vmatpush1.bf16.msra.mxu0 %v553
  %917 = vmatprep.subr.bf16.mxu0 %v546
  %918 = vmatpush1.bf16.msra.mxu0 %v545
  %919 = vmatprep.subr.bf16.mxu0 %v666
  %920 = vmatpush2.bf16.msra.mxu0 %v665
  %921 = vmatprep.subr.bf16.mxu0 %v658
  %922 = vmatpush2.bf16.msra.mxu0 %v657
  %923 = vmatprep.subr.bf16.mxu0 %v650
  %924 = vmatpush2.bf16.msra.mxu0 %v649
  %925 = vmatprep.subr.bf16.mxu0 %v642
  %926 = vmatpush2.bf16.msra.mxu0 %v641
  %927 = vmatprep.subr.bf16.mxu0 %v634
  %928 = vmatpush2.bf16.msra.mxu0 %v633
  %929 = vmatprep.subr.bf16.mxu0 %v626
  %930 = vmatpush2.bf16.msra.mxu0 %v625
  %931 = vmatprep.subr.bf16.mxu0 %v618
  %932 = vmatpush2.bf16.msra.mxu0 %v617
  %933 = vmatprep.subr.bf16.mxu0 %v610
  %934 = vmatpush2.bf16.msra.mxu0 %v609
  %935 = vmatprep.mubr.bf16.mxu0 %v26
  %936 = vmatmul.mubr.bf16.gmra.mxu0 %v25
  %v937 = vpop.f32.mrf.mxu0
  %v938 = vadd.f32 0.0, %v937
  %v939 = vpop.f32.mrf.mxu0
  %v940 = vadd.f32 0.0, %v939
  %v941 = vpop.f32.mrf.mxu0
  %v942 = vadd.f32 0.0, %v941
  %v943 = vpop.f32.mrf.mxu0
  %v944 = vadd.f32 0.0, %v943
  %945 = vmatprep.mubr.bf16.mxu0 %v28
  %946 = vmatmul.mubr.bf16.gmra.mxu0 %v27
  %v947 = vpop.f32.mrf.mxu0
  %v948 = vadd.f32 0.0, %v947
  %v949 = vpop.f32.mrf.mxu0
  %v950 = vadd.f32 0.0, %v949
  %v951 = vpop.f32.mrf.mxu0
  %v952 = vadd.f32 0.0, %v951
  %v953 = vpop.f32.mrf.mxu0
  %v954 = vadd.f32 0.0, %v953
  %955 = vdwg.mxu0
  %956 = vmatprep.subr.bf16.mxu0 %v604
  %957 = vmatpush1.bf16.msra.mxu0 %v603
  %958 = vmatprep.subr.bf16.mxu0 %v596
  %959 = vmatpush1.bf16.msra.mxu0 %v595
  %960 = vmatprep.subr.bf16.mxu0 %v588
  %961 = vmatpush1.bf16.msra.mxu0 %v587
  %962 = vmatprep.subr.bf16.mxu0 %v580
  %963 = vmatpush1.bf16.msra.mxu0 %v579
  %964 = vmatprep.subr.bf16.mxu0 %v572
  %965 = vmatpush1.bf16.msra.mxu0 %v571
  %966 = vmatprep.subr.bf16.mxu0 %v564
  %967 = vmatpush1.bf16.msra.mxu0 %v563
  %968 = vmatprep.subr.bf16.mxu0 %v556
  %969 = vmatpush1.bf16.msra.mxu0 %v555
  %970 = vmatprep.subr.bf16.mxu0 %v548
  %971 = vmatpush1.bf16.msra.mxu0 %v547
  %972 = vmatprep.subr.bf16.mxu0 %v668
  %973 = vmatpush2.bf16.msra.mxu0 %v667
  %974 = vmatprep.subr.bf16.mxu0 %v660
  %975 = vmatpush2.bf16.msra.mxu0 %v659
  %976 = vmatprep.subr.bf16.mxu0 %v652
  %977 = vmatpush2.bf16.msra.mxu0 %v651
  %978 = vmatprep.subr.bf16.mxu0 %v644
  %979 = vmatpush2.bf16.msra.mxu0 %v643
  %980 = vmatprep.subr.bf16.mxu0 %v636
  %981 = vmatpush2.bf16.msra.mxu0 %v635
  %982 = vmatprep.subr.bf16.mxu0 %v628
  %983 = vmatpush2.bf16.msra.mxu0 %v627
  %984 = vmatprep.subr.bf16.mxu0 %v620
  %985 = vmatpush2.bf16.msra.mxu0 %v619
  %986 = vmatprep.subr.bf16.mxu0 %v612
  %987 = vmatpush2.bf16.msra.mxu0 %v611
  %988 = vmatprep.mubr.bf16.mxu0 %v26
  %989 = vmatmul.mubr.bf16.gmra.mxu0 %v25
  %v990 = vpop.f32.mrf.mxu0
  %v991 = vadd.f32 0.0, %v990
  %v992 = vpop.f32.mrf.mxu0
  %v993 = vadd.f32 0.0, %v992
  %v994 = vpop.f32.mrf.mxu0
  %v995 = vadd.f32 0.0, %v994
  %v996 = vpop.f32.mrf.mxu0
  %v997 = vadd.f32 0.0, %v996
  %998 = vmatprep.mubr.bf16.mxu0 %v28
  %999 = vmatmul.mubr.bf16.gmra.mxu0 %v27
  %v1000 = vpop.f32.mrf.mxu0
  %v1001 = vadd.f32 0.0, %v1000
  %v1002 = vpop.f32.mrf.mxu0
  %v1003 = vadd.f32 0.0, %v1002
  %v1004 = vpop.f32.mrf.mxu0
  %v1005 = vadd.f32 0.0, %v1004
  %v1006 = vpop.f32.mrf.mxu0
  %v1007 = vadd.f32 0.0, %v1006
  %1008 = vdwg.mxu0
  %v1009 = vld [vmem:[%s2] sm:$0x3]
  %v1010 = vld [vmem:[%s3] sm:$0x3]
  %v1011 = vadd.f32 %v832, %v834
  %1012 = vadd.xlane.f32.xlu0 %v1011
  %v1013 = vpop.xlane.xlu0 %1012
  %v1014 = vadd.f32 %v836, %v838
  %1015 = vadd.xlane.f32.xlu0 %v1014
  %v1016 = vpop.xlane.xlu0 %1015
  %v1017 = vadd.f32 %v842, %v844
  %1018 = vadd.xlane.f32.xlu0 %v1017
  %v1019 = vpop.xlane.xlu0 %1018
  %v1020 = vadd.f32 %v846, %v848
  %1021 = vadd.xlane.f32.xlu0 %v1020
  %v1022 = vpop.xlane.xlu0 %1021
  %v1023 = vrcp.pop 256.0
  %v1024 = vmul.f32 %v1013, %v1023
  %v1025 = vmul.f32 %v1016, %v1023
  %v1026 = vmul.f32 %v1019, %v1023
  %v1027 = vmul.f32 %v1022, %v1023
  %v1028 = vmul.f32 %v832, %v832
  %v1029 = vmul.f32 %v834, %v834
  %v1030 = vmul.f32 %v836, %v836
  %v1031 = vmul.f32 %v838, %v838
  %v1032 = vmul.f32 %v842, %v842
  %v1033 = vmul.f32 %v844, %v844
  %v1034 = vmul.f32 %v846, %v846
  %v1035 = vmul.f32 %v848, %v848
  %v1036 = vadd.f32 %v1028, %v1029
  %1037 = vadd.xlane.f32.xlu0 %v1036
  %v1038 = vpop.xlane.xlu0 %1037
  %v1039 = vadd.f32 %v1030, %v1031
  %1040 = vadd.xlane.f32.xlu0 %v1039
  %v1041 = vpop.xlane.xlu0 %1040
  %v1042 = vadd.f32 %v1032, %v1033
  %1043 = vadd.xlane.f32.xlu0 %v1042
  %v1044 = vpop.xlane.xlu0 %1043
  %v1045 = vadd.f32 %v1034, %v1035
  %1046 = vadd.xlane.f32.xlu0 %v1045
  %v1047 = vpop.xlane.xlu0 %1046
  %v1048 = vmul.f32 %v1038, %v1023
  %v1049 = vmul.f32 %v1041, %v1023
  %v1050 = vmul.f32 %v1044, %v1023
  %v1051 = vmul.f32 %v1047, %v1023
  %v1052 = vmul.f32 %v1024, %v1024
  %v1053 = vmul.f32 %v1025, %v1025
  %v1054 = vmul.f32 %v1026, %v1026
  %v1055 = vmul.f32 %v1027, %v1027
  %v1056 = vsub.f32 %v1048, %v1052
  %v1057 = vsub.f32 %v1049, %v1053
  %v1058 = vsub.f32 %v1050, %v1054
  %v1059 = vsub.f32 %v1051, %v1055
  %v1060 = vsub.f32 %v832, %v1024
  %v1061 = vsub.f32 %v834, %v1024
  %v1062 = vsub.f32 %v836, %v1025
  %v1063 = vsub.f32 %v838, %v1025
  %v1064 = vsub.f32 %v842, %v1026
  %v1065 = vsub.f32 %v844, %v1026
  %v1066 = vsub.f32 %v846, %v1027
  %v1067 = vsub.f32 %v848, %v1027
  %v1068 = vadd.f32 %v1056, 1e-05
  %v1069 = vadd.f32 %v1057, 1e-05
  %v1070 = vadd.f32 %v1058, 1e-05
  %v1071 = vadd.f32 %v1059, 1e-05
  %v1072 = vrsqrt.pop %v1068
  %v1073 = vrsqrt.pop %v1069
  %v1074 = vrsqrt.pop %v1070
  %v1075 = vrsqrt.pop %v1071
  %v1076 = vmul.f32 %v1060, %v1072
  %v1077 = vmul.f32 %v1061, %v1072
  %v1078 = vmul.f32 %v1062, %v1073
  %v1079 = vmul.f32 %v1063, %v1073
  %v1080 = vmul.f32 %v1064, %v1074
  %v1081 = vmul.f32 %v1065, %v1074
  %v1082 = vmul.f32 %v1066, %v1075
  %v1083 = vmul.f32 %v1067, %v1075
  %v1085 = vlaneseq
  %v1086 = vshrl.u32 %v1085, 7
  %v1087 = vsub.s32 0, %v1086
  %v1088 = vrot.slane %v1009, %v1087
  %v1089 = vlaneseq
  %v1090 = vshrl.u32 %v1089, 7
  %v1091 = vsub.s32 1, %v1090
  %v1092 = vrot.slane %v1009, %v1091
  %v1095 = vmul.f32 %v1076, %v1088
  %v1096 = vmul.f32 %v1077, %v1092
  %v1097 = vmul.f32 %v1078, %v1088
  %v1098 = vmul.f32 %v1079, %v1092
  %v1099 = vmul.f32 %v1080, %v1088
  %v1100 = vmul.f32 %v1081, %v1092
  %v1101 = vmul.f32 %v1082, %v1088
  %v1102 = vmul.f32 %v1083, %v1092
  %v1104 = vlaneseq
  %v1105 = vshrl.u32 %v1104, 7
  %v1106 = vsub.s32 0, %v1105
  %v1107 = vrot.slane %v1010, %v1106
  %v1108 = vlaneseq
  %v1109 = vshrl.u32 %v1108, 7
  %v1110 = vsub.s32 1, %v1109
  %v1111 = vrot.slane %v1010, %v1110
  %v1114 = vadd.f32 %v1095, %v1107
  %v1115 = vadd.f32 %v1096, %v1111
  %v1116 = vadd.f32 %v1097, %v1107
  %v1117 = vadd.f32 %v1098, %v1111
  %v1118 = vadd.f32 %v1099, %v1107
  %v1119 = vadd.f32 %v1100, %v1111
  %v1120 = vadd.f32 %v1101, %v1107
  %v1121 = vadd.f32 %v1102, %v1111
  %1122 = vst [vmem:[%s4] sm:$0xff] %v1114
  %1123 = vst [vmem:[%s4 + $0x8] sm:$0xff] %v1115
  %1124 = vst [vmem:[%s4 + $0x40] sm:$0xff] %v1116
  %1125 = vst [vmem:[%s4 + $0x48] sm:$0xff] %v1117
  %1126 = vst [vmem:[%s4 + $0x80] sm:$0xff] %v1118
  %1127 = vst [vmem:[%s4 + $0x88] sm:$0xff] %v1119
  %1128 = vst [vmem:[%s4 + $0xc0] sm:$0xff] %v1120
  %1129 = vst [vmem:[%s4 + $0xc8] sm:$0xff] %v1121
  %v1130 = vadd.f32 %v885, %v887
  %1131 = vadd.xlane.f32.xlu0 %v1130
  %v1132 = vpop.xlane.xlu0 %1131
  %v1133 = vadd.f32 %v889, %v891
  %1134 = vadd.xlane.f32.xlu0 %v1133
  %v1135 = vpop.xlane.xlu0 %1134
  %v1136 = vadd.f32 %v895, %v897
  %1137 = vadd.xlane.f32.xlu0 %v1136
  %v1138 = vpop.xlane.xlu0 %1137
  %v1139 = vadd.f32 %v899, %v901
  %1140 = vadd.xlane.f32.xlu0 %v1139
  %v1141 = vpop.xlane.xlu0 %1140
  %v1142 = vmul.f32 %v1132, %v1023
  %v1143 = vmul.f32 %v1135, %v1023
  %v1144 = vmul.f32 %v1138, %v1023
  %v1145 = vmul.f32 %v1141, %v1023
  %v1146 = vmul.f32 %v885, %v885
  %v1147 = vmul.f32 %v887, %v887
  %v1148 = vmul.f32 %v889, %v889
  %v1149 = vmul.f32 %v891, %v891
  %v1150 = vmul.f32 %v895, %v895
  %v1151 = vmul.f32 %v897, %v897
  %v1152 = vmul.f32 %v899, %v899
  %v1153 = vmul.f32 %v901, %v901
  %v1154 = vadd.f32 %v1146, %v1147
  %1155 = vadd.xlane.f32.xlu0 %v1154
  %v1156 = vpop.xlane.xlu0 %1155
  %v1157 = vadd.f32 %v1148, %v1149
  %1158 = vadd.xlane.f32.xlu0 %v1157
  %v1159 = vpop.xlane.xlu0 %1158
  %v1160 = vadd.f32 %v1150, %v1151
  %1161 = vadd.xlane.f32.xlu0 %v1160
  %v1162 = vpop.xlane.xlu0 %1161
  %v1163 = vadd.f32 %v1152, %v1153
  %1164 = vadd.xlane.f32.xlu0 %v1163
  %v1165 = vpop.xlane.xlu0 %1164
  %v1166 = vmul.f32 %v1156, %v1023
  %v1167 = vmul.f32 %v1159, %v1023
  %v1168 = vmul.f32 %v1162, %v1023
  %v1169 = vmul.f32 %v1165, %v1023
  %v1170 = vmul.f32 %v1142, %v1142
  %v1171 = vmul.f32 %v1143, %v1143
  %v1172 = vmul.f32 %v1144, %v1144
  %v1173 = vmul.f32 %v1145, %v1145
  %v1174 = vsub.f32 %v1166, %v1170
  %v1175 = vsub.f32 %v1167, %v1171
  %v1176 = vsub.f32 %v1168, %v1172
  %v1177 = vsub.f32 %v1169, %v1173
  %v1178 = vsub.f32 %v885, %v1142
  %v1179 = vsub.f32 %v887, %v1142
  %v1180 = vsub.f32 %v889, %v1143
  %v1181 = vsub.f32 %v891, %v1143
  %v1182 = vsub.f32 %v895, %v1144
  %v1183 = vsub.f32 %v897, %v1144
  %v1184 = vsub.f32 %v899, %v1145
  %v1185 = vsub.f32 %v901, %v1145
  %v1186 = vadd.f32 %v1174, 1e-05
  %v1187 = vadd.f32 %v1175, 1e-05
  %v1188 = vadd.f32 %v1176, 1e-05
  %v1189 = vadd.f32 %v1177, 1e-05
  %v1190 = vrsqrt.pop %v1186
  %v1191 = vrsqrt.pop %v1187
  %v1192 = vrsqrt.pop %v1188
  %v1193 = vrsqrt.pop %v1189
  %v1194 = vmul.f32 %v1178, %v1190
  %v1195 = vmul.f32 %v1179, %v1190
  %v1196 = vmul.f32 %v1180, %v1191
  %v1197 = vmul.f32 %v1181, %v1191
  %v1198 = vmul.f32 %v1182, %v1192
  %v1199 = vmul.f32 %v1183, %v1192
  %v1200 = vmul.f32 %v1184, %v1193
  %v1201 = vmul.f32 %v1185, %v1193
  %v1202 = vmul.f32 %v1194, %v1088
  %v1203 = vmul.f32 %v1195, %v1092
  %v1204 = vmul.f32 %v1196, %v1088
  %v1205 = vmul.f32 %v1197, %v1092
  %v1206 = vmul.f32 %v1198, %v1088
  %v1207 = vmul.f32 %v1199, %v1092
  %v1208 = vmul.f32 %v1200, %v1088
  %v1209 = vmul.f32 %v1201, %v1092
  %v1210 = vadd.f32 %v1202, %v1107
  %v1211 = vadd.f32 %v1203, %v1111
  %v1212 = vadd.f32 %v1204, %v1107
  %v1213 = vadd.f32 %v1205, %v1111
  %v1214 = vadd.f32 %v1206, %v1107
  %v1215 = vadd.f32 %v1207, %v1111
  %v1216 = vadd.f32 %v1208, %v1107
  %v1217 = vadd.f32 %v1209, %v1111
  %1218 = vst [vmem:[%s4 + $0x10] sm:$0xff] %v1210
  %1219 = vst [vmem:[%s4 + $0x18] sm:$0xff] %v1211
  %1220 = vst [vmem:[%s4 + $0x50] sm:$0xff] %v1212
  %1221 = vst [vmem:[%s4 + $0x58] sm:$0xff] %v1213
  %1222 = vst [vmem:[%s4 + $0x90] sm:$0xff] %v1214
  %1223 = vst [vmem:[%s4 + $0x98] sm:$0xff] %v1215
  %1224 = vst [vmem:[%s4 + $0xd0] sm:$0xff] %v1216
  %1225 = vst [vmem:[%s4 + $0xd8] sm:$0xff] %v1217
  %v1226 = vadd.f32 %v938, %v940
  %1227 = vadd.xlane.f32.xlu0 %v1226
  %v1228 = vpop.xlane.xlu0 %1227
  %v1229 = vadd.f32 %v942, %v944
  %1230 = vadd.xlane.f32.xlu0 %v1229
  %v1231 = vpop.xlane.xlu0 %1230
  %v1232 = vadd.f32 %v948, %v950
  %1233 = vadd.xlane.f32.xlu0 %v1232
  %v1234 = vpop.xlane.xlu0 %1233
  %v1235 = vadd.f32 %v952, %v954
  %1236 = vadd.xlane.f32.xlu0 %v1235
  %v1237 = vpop.xlane.xlu0 %1236
  %v1238 = vmul.f32 %v1228, %v1023
  %v1239 = vmul.f32 %v1231, %v1023
  %v1240 = vmul.f32 %v1234, %v1023
  %v1241 = vmul.f32 %v1237, %v1023
  %v1242 = vmul.f32 %v938, %v938
  %v1243 = vmul.f32 %v940, %v940
  %v1244 = vmul.f32 %v942, %v942
  %v1245 = vmul.f32 %v944, %v944
  %v1246 = vmul.f32 %v948, %v948
  %v1247 = vmul.f32 %v950, %v950
  %v1248 = vmul.f32 %v952, %v952
  %v1249 = vmul.f32 %v954, %v954
  %v1250 = vadd.f32 %v1242, %v1243
  %1251 = vadd.xlane.f32.xlu0 %v1250
  %v1252 = vpop.xlane.xlu0 %1251
  %v1253 = vadd.f32 %v1244, %v1245
  %1254 = vadd.xlane.f32.xlu0 %v1253
  %v1255 = vpop.xlane.xlu0 %1254
  %v1256 = vadd.f32 %v1246, %v1247
  %1257 = vadd.xlane.f32.xlu0 %v1256
  %v1258 = vpop.xlane.xlu0 %1257
  %v1259 = vadd.f32 %v1248, %v1249
  %1260 = vadd.xlane.f32.xlu0 %v1259
  %v1261 = vpop.xlane.xlu0 %1260
  %v1262 = vmul.f32 %v1252, %v1023
  %v1263 = vmul.f32 %v1255, %v1023
  %v1264 = vmul.f32 %v1258, %v1023
  %v1265 = vmul.f32 %v1261, %v1023
  %v1266 = vmul.f32 %v1238, %v1238
  %v1267 = vmul.f32 %v1239, %v1239
  %v1268 = vmul.f32 %v1240, %v1240
  %v1269 = vmul.f32 %v1241, %v1241
  %v1270 = vsub.f32 %v1262, %v1266
  %v1271 = vsub.f32 %v1263, %v1267
  %v1272 = vsub.f32 %v1264, %v1268
  %v1273 = vsub.f32 %v1265, %v1269
  %v1274 = vsub.f32 %v938, %v1238
  %v1275 = vsub.f32 %v940, %v1238
  %v1276 = vsub.f32 %v942, %v1239
  %v1277 = vsub.f32 %v944, %v1239
  %v1278 = vsub.f32 %v948, %v1240
  %v1279 = vsub.f32 %v950, %v1240
  %v1280 = vsub.f32 %v952, %v1241
  %v1281 = vsub.f32 %v954, %v1241
  %v1282 = vadd.f32 %v1270, 1e-05
  %v1283 = vadd.f32 %v1271, 1e-05
  %v1284 = vadd.f32 %v1272, 1e-05
  %v1285 = vadd.f32 %v1273, 1e-05
  %v1286 = vrsqrt.pop %v1282
  %v1287 = vrsqrt.pop %v1283
  %v1288 = vrsqrt.pop %v1284
  %v1289 = vrsqrt.pop %v1285
  %v1290 = vmul.f32 %v1274, %v1286
  %v1291 = vmul.f32 %v1275, %v1286
  %v1292 = vmul.f32 %v1276, %v1287
  %v1293 = vmul.f32 %v1277, %v1287
  %v1294 = vmul.f32 %v1278, %v1288
  %v1295 = vmul.f32 %v1279, %v1288
  %v1296 = vmul.f32 %v1280, %v1289
  %v1297 = vmul.f32 %v1281, %v1289
  %v1298 = vmul.f32 %v1290, %v1088
  %v1299 = vmul.f32 %v1291, %v1092
  %v1300 = vmul.f32 %v1292, %v1088
  %v1301 = vmul.f32 %v1293, %v1092
  %v1302 = vmul.f32 %v1294, %v1088
  %v1303 = vmul.f32 %v1295, %v1092
  %v1304 = vmul.f32 %v1296, %v1088
  %v1305 = vmul.f32 %v1297, %v1092
  %v1306 = vadd.f32 %v1298, %v1107
  %v1307 = vadd.f32 %v1299, %v1111
  %v1308 = vadd.f32 %v1300, %v1107
  %v1309 = vadd.f32 %v1301, %v1111
  %v1310 = vadd.f32 %v1302, %v1107
  %v1311 = vadd.f32 %v1303, %v1111
  %v1312 = vadd.f32 %v1304, %v1107
  %v1313 = vadd.f32 %v1305, %v1111
  %1314 = vst [vmem:[%s4 + $0x20] sm:$0xff] %v1306
  %1315 = vst [vmem:[%s4 + $0x28] sm:$0xff] %v1307
  %1316 = vst [vmem:[%s4 + $0x60] sm:$0xff] %v1308
  %1317 = vst [vmem:[%s4 + $0x68] sm:$0xff] %v1309
  %1318 = vst [vmem:[%s4 + $0xa0] sm:$0xff] %v1310
  %1319 = vst [vmem:[%s4 + $0xa8] sm:$0xff] %v1311
  %1320 = vst [vmem:[%s4 + $0xe0] sm:$0xff] %v1312
  %1321 = vst [vmem:[%s4 + $0xe8] sm:$0xff] %v1313
  %v1322 = vadd.f32 %v991, %v993
  %1323 = vadd.xlane.f32.xlu0 %v1322
  %v1324 = vpop.xlane.xlu0 %1323
  %v1325 = vadd.f32 %v995, %v997
  %1326 = vadd.xlane.f32.xlu0 %v1325
  %v1327 = vpop.xlane.xlu0 %1326
  %v1328 = vadd.f32 %v1001, %v1003
  %1329 = vadd.xlane.f32.xlu0 %v1328
  %v1330 = vpop.xlane.xlu0 %1329
  %v1331 = vadd.f32 %v1005, %v1007
  %1332 = vadd.xlane.f32.xlu0 %v1331
  %v1333 = vpop.xlane.xlu0 %1332
  %v1334 = vmul.f32 %v1324, %v1023
  %v1335 = vmul.f32 %v1327, %v1023
  %v1336 = vmul.f32 %v1330, %v1023
  %v1337 = vmul.f32 %v1333, %v1023
  %v1338 = vmul.f32 %v991, %v991
  %v1339 = vmul.f32 %v993, %v993
  %v1340 = vmul.f32 %v995, %v995
  %v1341 = vmul.f32 %v997, %v997
  %v1342 = vmul.f32 %v1001, %v1001
  %v1343 = vmul.f32 %v1003, %v1003
  %v1344 = vmul.f32 %v1005, %v1005
  %v1345 = vmul.f32 %v1007, %v1007
  %v1346 = vadd.f32 %v1338, %v1339
  %1347 = vadd.xlane.f32.xlu0 %v1346
  %v1348 = vpop.xlane.xlu0 %1347
  %v1349 = vadd.f32 %v1340, %v1341
  %1350 = vadd.xlane.f32.xlu0 %v1349
  %v1351 = vpop.xlane.xlu0 %1350
  %v1352 = vadd.f32 %v1342, %v1343
  %1353 = vadd.xlane.f32.xlu0 %v1352
  %v1354 = vpop.xlane.xlu0 %1353
  %v1355 = vadd.f32 %v1344, %v1345
  %1356 = vadd.xlane.f32.xlu0 %v1355
  %v1357 = vpop.xlane.xlu0 %1356
  %v1358 = vmul.f32 %v1348, %v1023
  %v1359 = vmul.f32 %v1351, %v1023
  %v1360 = vmul.f32 %v1354, %v1023
  %v1361 = vmul.f32 %v1357, %v1023
  %v1362 = vmul.f32 %v1334, %v1334
  %v1363 = vmul.f32 %v1335, %v1335
  %v1364 = vmul.f32 %v1336, %v1336
  %v1365 = vmul.f32 %v1337, %v1337
  %v1366 = vsub.f32 %v1358, %v1362
  %v1367 = vsub.f32 %v1359, %v1363
  %v1368 = vsub.f32 %v1360, %v1364
  %v1369 = vsub.f32 %v1361, %v1365
  %v1370 = vsub.f32 %v991, %v1334
  %v1371 = vsub.f32 %v993, %v1334
  %v1372 = vsub.f32 %v995, %v1335
  %v1373 = vsub.f32 %v997, %v1335
  %v1374 = vsub.f32 %v1001, %v1336
  %v1375 = vsub.f32 %v1003, %v1336
  %v1376 = vsub.f32 %v1005, %v1337
  %v1377 = vsub.f32 %v1007, %v1337
  %v1378 = vadd.f32 %v1366, 1e-05
  %v1379 = vadd.f32 %v1367, 1e-05
  %v1380 = vadd.f32 %v1368, 1e-05
  %v1381 = vadd.f32 %v1369, 1e-05
  %v1382 = vrsqrt.pop %v1378
  %v1383 = vrsqrt.pop %v1379
  %v1384 = vrsqrt.pop %v1380
  %v1385 = vrsqrt.pop %v1381
  %v1386 = vmul.f32 %v1370, %v1382
  %v1387 = vmul.f32 %v1371, %v1382
  %v1388 = vmul.f32 %v1372, %v1383
  %v1389 = vmul.f32 %v1373, %v1383
  %v1390 = vmul.f32 %v1374, %v1384
  %v1391 = vmul.f32 %v1375, %v1384
  %v1392 = vmul.f32 %v1376, %v1385
  %v1393 = vmul.f32 %v1377, %v1385
  %v1394 = vmul.f32 %v1386, %v1088
  %v1395 = vmul.f32 %v1387, %v1092
  %v1396 = vmul.f32 %v1388, %v1088
  %v1397 = vmul.f32 %v1389, %v1092
  %v1398 = vmul.f32 %v1390, %v1088
  %v1399 = vmul.f32 %v1391, %v1092
  %v1400 = vmul.f32 %v1392, %v1088
  %v1401 = vmul.f32 %v1393, %v1092
  %v1402 = vadd.f32 %v1394, %v1107
  %v1403 = vadd.f32 %v1395, %v1111
  %v1404 = vadd.f32 %v1396, %v1107
  %v1405 = vadd.f32 %v1397, %v1111
  %v1406 = vadd.f32 %v1398, %v1107
  %v1407 = vadd.f32 %v1399, %v1111
  %v1408 = vadd.f32 %v1400, %v1107
  %v1409 = vadd.f32 %v1401, %v1111
  %1410 = vst [vmem:[%s4 + $0x30] sm:$0xff] %v1402
  %1411 = vst [vmem:[%s4 + $0x38] sm:$0xff] %v1403
  %1412 = vst [vmem:[%s4 + $0x70] sm:$0xff] %v1404
  %1413 = vst [vmem:[%s4 + $0x78] sm:$0xff] %v1405
  %1414 = vst [vmem:[%s4 + $0xb0] sm:$0xff] %v1406
  %1415 = vst [vmem:[%s4 + $0xb8] sm:$0xff] %v1407
  %1416 = vst [vmem:[%s4 + $0xf0] sm:$0xff] %v1408
  %1417 = vst [vmem:[%s4 + $0xf8] sm:$0xff] %v1409
  // Predicated region
  $region18: #{unet_forward.9} parent=0 // pred_check
    _
  $region19: #{unet_forward.9} parent=0 // pred_check_branch
    %1419 = sbr.rel (0) target = $region21
  $region20: #{unet_forward.9} parent=0 // pred_region
    _
  $region21: #{unet_forward.9} parent=0 // pred_fallthru
    _
  // Predicated region
  $region22: #{unet_forward.9} parent=0 // pred_check
    _
  $region23: #{unet_forward.9} parent=0 // pred_check_branch
    %1421 = sbr.rel (0) target = $region25
  $region24: #{unet_forward.9} parent=0 // pred_region
    _
  $region25: #{unet_forward.9} parent=0 // pred_fallthru
    _

</llo_original>
